<compile_context>
chip_gen: v6e
topology: v6e:2x2x1
jax: 0.10.0
libtpu: 0.0.40
codegen_flags: <defaults>
</compile_context>

<pallas_src>
import jax
import jax.numpy as jnp
from jax.experimental import pallas as pl
from jax.experimental.pallas import tpu as pltpu


# --------------------------- in-kernel helpers ---------------------------

def _im2col_conv3x3(x, w2d):
    """Valid 3x3 conv as one im2col matmul.

    x   : (H, W, Cin)    activation
    w2d : (9*Cin, Cout)  HWIO weight reshaped in the wrapper (kh,kw,cin order)
    out : (Ho*Wo, Cout)  with Ho = H-2, Wo = W-2
    """
    H, W, Cin = x.shape
    Ho, Wo = H - 2, W - 2
    taps = []
    for kh in range(3):
        for kw in range(3):
            taps.append(x[kh:kh + Ho, kw:kw + Wo, :].reshape(Ho * Wo, Cin))
    patches = jnp.concatenate(taps, axis=1)                # (Ho*Wo, 9*Cin)
    return jnp.dot(patches, w2d, preferred_element_type=jnp.float32)


def _bias_prelu(y, ba):
    """y: (M, C); ba: (2, C) with row 0 = bias, row 1 = PReLU alpha."""
    y = y + ba[0:1, :]
    return jnp.where(y >= 0.0, y, y * ba[1:2, :])


def _maxpool2_ceil(x):
    """MaxPool2d(kernel=2, stride=2, ceil_mode=True) on (H, W, C)."""
    H, W, C = x.shape
    Ho, Wo = -(-H // 2), -(-W // 2)
    ph, pw = Ho * 2 - H, Wo * 2 - W
    if ph or pw:  # ceil-mode pads at most one row/col; -inf keeps max valid
        x = jnp.pad(x, ((0, ph), (0, pw), (0, 0)), constant_values=-jnp.inf)
    xr = x.reshape(Ho, 2, Wo * 2, C)
    xh = jnp.maximum(xr[:, 0], xr[:, 1])                   # pool height pairs
    xr2 = xh.reshape(Ho * Wo, 2, C)
    xw = jnp.maximum(xr2[:, 0], xr2[:, 1])                 # pool width pairs
    return xw.reshape(Ho, Wo, C)


# ------------------------------ the kernel -------------------------------

def pnet_kernel(x_ref,
                w1_ref, ba1_ref,
                w2_ref, ba2_ref,
                w3_ref, ba3_ref,
                wh_ref, bh_ref,
                bbox_ref, prob_ref):
    x = x_ref[0]                                           # (H, W, 3) f32
    H, W = x.shape[0], x.shape[1]

    # conv1 -> PReLU -> maxpool(2,2,ceil)
    h = _bias_prelu(_im2col_conv3x3(x, w1_ref[...]), ba1_ref[...])
    H1, W1 = H - 2, W - 2
    h = _maxpool2_ceil(h.reshape(H1, W1, 10))              # (Hp, Wp, 10)

    # conv2 -> PReLU
    Hp, Wp = h.shape[0], h.shape[1]
    h = _bias_prelu(_im2col_conv3x3(h, w2_ref[...]), ba2_ref[...])
    H2, W2 = Hp - 2, Wp - 2

    # conv3 -> PReLU  (feature map kept flat: (H3*W3, 32))
    feat = _bias_prelu(_im2col_conv3x3(h.reshape(H2, W2, 16), w3_ref[...]),
                       ba3_ref[...])

    # fused heads: [conv4_1 | conv4_2] as a single (32, 6) matmul
    head = jnp.dot(feat, wh_ref[...],
                   preferred_element_type=jnp.float32) + bh_ref[...]
    head_t = head.T                                        # (6, H3*W3) lane-dense

    # 2-class softmax == logistic of the logit difference
    l0 = head_t[0:1, :]
    l1 = head_t[1:2, :]
    p1 = 1.0 / (1.0 + jnp.exp(l0 - l1))
    p0 = 1.0 - p1

    prob_ref[0] = jnp.concatenate([p0, p1], axis=0)        # (2, H3*W3)
    bbox_ref[0] = head_t[2:6, :]                           # (4, H3*W3)


# ------------------------------- wrapper ----------------------------------

def _replicated_spec(shape):
    rank = len(shape)
    return pl.BlockSpec(shape, lambda n, _r=rank: (0,) * _r)


def _pack_params(params):
    """Reshape / fuse PyTorch-layout params into kernel-friendly 2-D form."""
    (w1, b1, a1, w2, b2, a2, w3, b3, a3, w41, b41, w42, b42) = params
    packed = [
        w1.reshape(9 * 3, 10),                        # conv1 im2col weight
        jnp.concatenate([b1, a1], axis=0),            # (2, 10) bias | alpha
        w2.reshape(9 * 10, 16),                       # conv2 im2col weight
        jnp.concatenate([b2, a2], axis=0),            # (2, 16)
        w3.reshape(9 * 16, 32),                       # conv3 im2col weight
        jnp.concatenate([b3, a3], axis=0),            # (2, 32)
        jnp.concatenate([w41, w42], axis=1),          # (32, 6) fused head W
        jnp.concatenate([b41, b42], axis=1),          # (1, 6)  fused head b
    ]
    return [p.astype(jnp.float32) for p in packed]


def pnet_forward(x_nchw, params):
    N, C, H, W = x_nchw.shape
    assert C == 3
    x = jnp.transpose(x_nchw, (0, 2, 3, 1)).astype(jnp.float32)   # NHWC

    H1, W1 = H - 2, W - 2                         # conv1
    Hp, Wp = -(-H1 // 2), -(-W1 // 2)             # maxpool (ceil)
    H2, W2 = Hp - 2, Wp - 2                       # conv2
    H3, W3 = H2 - 2, W2 - 2                       # conv3
    S3 = H3 * W3

    kp = _pack_params(params)

    # TODO(synk): for production pyramid sizes add a haloed row-block grid
    # axis (and bf16 MXU inputs on v6e/v7x) so per-step VMEM stays well under
    # the 32-64 MiB limits; the full-image block here is sized for this test.
    kernel = pl.pallas_call(
        pnet_kernel,
        out_shape=(
            jax.ShapeDtypeStruct((N, 4, S3), jnp.float32),   # bbox (b)
            jax.ShapeDtypeStruct((N, 2, S3), jnp.float32),   # prob (a)
        ),
        grid=(N,),
        in_specs=[pl.BlockSpec((1, H, W, 3), lambda n: (n, 0, 0, 0))]
                 + [_replicated_spec(tuple(p.shape)) for p in kp],
        out_specs=(
            pl.BlockSpec((1, 4, S3), lambda n: (n, 0, 0)),
            pl.BlockSpec((1, 2, S3), lambda n: (n, 0, 0)),
        ),
        compiler_params=pltpu.CompilerParams(
            dimension_semantics=("parallel",)),
    )
    bbox, prob = kernel(x, *kp)
    # Outputs are already channel-first; only free metadata reshapes remain.
    return bbox.reshape(N, 4, H3, W3), prob.reshape(N, 2, H3, W3)


# --------------------------- pure-JAX reference ---------------------------

def pnet_reference(x_nchw, params):
    (w1, b1, a1, w2, b2, a2, w3, b3, a3, w41, b41, w42, b42) = params
    x = jnp.transpose(x_nchw, (0, 2, 3, 1)).astype(jnp.float32)

    def conv(x, w, b):
        y = jax.lax.conv_general_dilated(
            x, w, (1, 1), 'VALID',
            dimension_numbers=('NHWC', 'HWIO', 'NHWC'))
        return y + b.reshape(1, 1, 1, -1)

    def prelu(x, a):
        a = a.reshape(1, 1, 1, -1)
        return jnp.where(x >= 0, x, x * a)

    def pool_ceil(x):
        _, H, W, _ = x.shape
        Ho, Wo = -(-H // 2), -(-W // 2)
        ph, pw = Ho * 2 - H, Wo * 2 - W
        return jax.lax.reduce_window(
            x, -jnp.inf, jax.lax.max, (1, 2, 2, 1), (1, 2, 2, 1),
            [(0, 0), (0, ph), (0, pw), (0, 0)])

    h = prelu(conv(x, w1, b1), a1)
    h = pool_ceil(h)
    h = prelu(conv(h, w2, b2), a2)
    h = prelu(conv(h, w3, b3), a3)
    logits = jnp.einsum('nhwc,co->nhwo', h, w41) + b41.reshape(1, 1, 1, -1)
    a_out = jax.nn.softmax(logits, axis=-1)
    b_out = jnp.einsum('nhwc,co->nhwo', h, w42) + b42.reshape(1, 1, 1, -1)
    return (jnp.transpose(b_out, (0, 3, 1, 2)),
            jnp.transpose(a_out, (0, 3, 1, 2)))


# --------------------------------- main ------------------------------------

def make_params(key):
    ks = jax.random.split(key, 8)
    w1 = jax.random.normal(ks[0], (3, 3, 3, 10), jnp.float32) * 0.1
    b1 = jax.random.normal(ks[1], (1, 10), jnp.float32) * 0.01
    a1 = jnp.full((1, 10), 0.25, jnp.float32)          # PReLU default init
    w2 = jax.random.normal(ks[2], (3, 3, 10, 16), jnp.float32) * 0.1
    b2 = jax.random.normal(ks[3], (1, 16), jnp.float32) * 0.01
    a2 = jnp.full((1, 16), 0.25, jnp.float32)
    w3 = jax.random.normal(ks[4], (3, 3, 16, 32), jnp.float32) * 0.1
    b3 = jax.random.normal(ks[5], (1, 32), jnp.float32) * 0.01
    a3 = jnp.full((1, 32), 0.25, jnp.float32)
    w41 = jax.random.normal(ks[6], (32, 2), jnp.float32) * 0.1
    b41 = jnp.zeros((1, 2), jnp.float32)
    w42 = jax.random.normal(ks[7], (32, 4), jnp.float32) * 0.1
    b42 = jnp.zeros((1, 4), jnp.float32)
    return [w1, b1, a1, w2, b2, a2, w3, b3, a3, w41, b41, w42, b42]


if __name__ == "__main__":
    key = jax.random.PRNGKey(0)
    k_x, k_p = jax.random.split(key)

    # Input consistent with PNet: (N, 3, H, W) NCHW, minimum 12x12 spatial.
    x = jax.random.normal(k_x, (2, 3, 16, 16), jnp.float32)
    params = make_params(k_p)

    b, a = pnet_forward(x, params)
    jax.block_until_ready((b, a))

    b_ref, a_ref = pnet_reference(x, params)
    assert b.shape == (2, 4, 3, 3) and a.shape == (2, 2, 3, 3)
    assert jnp.allclose(b, b_ref, atol=1e-4, rtol=1e-4)
    assert jnp.allclose(a, a_ref, atol=1e-4, rtol=1e-4)

    print("KERNEL_OK")
</pallas_src>

<mosaic_0001>
module attributes {stable_mosaic.version = 11 : i64} {
  func.func @pnet_kernel(%arg0: i32, %arg1: memref<1x16x16x3xf32, #tpu.memory_space<vmem>>, %arg2: memref<27x10xf32, #tpu.memory_space<vmem>>, %arg3: memref<2x10xf32, #tpu.memory_space<vmem>>, %arg4: memref<90x16xf32, #tpu.memory_space<vmem>>, %arg5: memref<2x16xf32, #tpu.memory_space<vmem>>, %arg6: memref<144x32xf32, #tpu.memory_space<vmem>>, %arg7: memref<2x32xf32, #tpu.memory_space<vmem>>, %arg8: memref<32x6xf32, #tpu.memory_space<vmem>>, %arg9: memref<1x6xf32, #tpu.memory_space<vmem>>, %arg10: memref<1x4x9xf32, #tpu.memory_space<vmem>>, %arg11: memref<1x2x9xf32, #tpu.memory_space<vmem>>) attributes {dimension_semantics = [#tpu.dimension_semantics<parallel>], iteration_bounds = array<i64: 2>, scalar_prefetch = 0 : i64, scratch_operands = 0 : i64, tpu.core_type = #tpu.core_type<tc>, window_params = [{transform_indices = @transform_0, window_bounds = array<i64: 1, 16, 16, 3>}, {pipeline_mode = #tpu.pipeline_mode<synchronous>, transform_indices = @transform_1, window_bounds = array<i64: 27, 10>}, {pipeline_mode = #tpu.pipeline_mode<synchronous>, transform_indices = @transform_2, window_bounds = array<i64: 2, 10>}, {pipeline_mode = #tpu.pipeline_mode<synchronous>, transform_indices = @transform_3, window_bounds = array<i64: 90, 16>}, {pipeline_mode = #tpu.pipeline_mode<synchronous>, transform_indices = @transform_4, window_bounds = array<i64: 2, 16>}, {pipeline_mode = #tpu.pipeline_mode<synchronous>, transform_indices = @transform_5, window_bounds = array<i64: 144, 32>}, {pipeline_mode = #tpu.pipeline_mode<synchronous>, transform_indices = @transform_6, window_bounds = array<i64: 2, 32>}, {pipeline_mode = #tpu.pipeline_mode<synchronous>, transform_indices = @transform_7, window_bounds = array<i64: 32, 6>}, {pipeline_mode = #tpu.pipeline_mode<synchronous>, transform_indices = @transform_8, window_bounds = array<i64: 1, 6>}, {transform_indices = @transform_9, window_bounds = array<i64: 1, 4, 9>}, {transform_indices = @transform_10, window_bounds = array<i64: 1, 2, 9>}]} {
    %c0 = arith.constant 0 : index
    %c0_0 = arith.constant 0 : index
    %c0_1 = arith.constant 0 : index
    %c0_2 = arith.constant 0 : index
    %0 = vector.load %arg1[%c0, %c0_0, %c0_1, %c0_2] : memref<1x16x16x3xf32, #tpu.memory_space<vmem>>, vector<1x16x16x3xf32>
    %1 = vector.shape_cast %0 : vector<1x16x16x3xf32> to vector<16x16x3xf32>
    %c0_3 = arith.constant 0 : index
    %c0_4 = arith.constant 0 : index
    %2 = vector.load %arg2[%c0_3, %c0_4] : memref<27x10xf32, #tpu.memory_space<vmem>>, vector<27x10xf32>
    %3 = vector.extract_strided_slice %1 {offsets = [0, 0, 0], sizes = [14, 14, 3], strides = [1, 1, 1]} : vector<16x16x3xf32> to vector<14x14x3xf32>
    %4 = vector.shape_cast %3 : vector<14x14x3xf32> to vector<196x3xf32>
    %5 = vector.extract_strided_slice %1 {offsets = [0, 1, 0], sizes = [14, 14, 3], strides = [1, 1, 1]} : vector<16x16x3xf32> to vector<14x14x3xf32>
    %6 = vector.shape_cast %5 : vector<14x14x3xf32> to vector<196x3xf32>
    %7 = vector.extract_strided_slice %1 {offsets = [0, 2, 0], sizes = [14, 14, 3], strides = [1, 1, 1]} : vector<16x16x3xf32> to vector<14x14x3xf32>
    %8 = vector.shape_cast %7 : vector<14x14x3xf32> to vector<196x3xf32>
    %9 = vector.extract_strided_slice %1 {offsets = [1, 0, 0], sizes = [14, 14, 3], strides = [1, 1, 1]} : vector<16x16x3xf32> to vector<14x14x3xf32>
    %10 = vector.shape_cast %9 : vector<14x14x3xf32> to vector<196x3xf32>
    %11 = vector.extract_strided_slice %1 {offsets = [1, 1, 0], sizes = [14, 14, 3], strides = [1, 1, 1]} : vector<16x16x3xf32> to vector<14x14x3xf32>
    %12 = vector.shape_cast %11 : vector<14x14x3xf32> to vector<196x3xf32>
    %13 = vector.extract_strided_slice %1 {offsets = [1, 2, 0], sizes = [14, 14, 3], strides = [1, 1, 1]} : vector<16x16x3xf32> to vector<14x14x3xf32>
    %14 = vector.shape_cast %13 : vector<14x14x3xf32> to vector<196x3xf32>
    %15 = vector.extract_strided_slice %1 {offsets = [2, 0, 0], sizes = [14, 14, 3], strides = [1, 1, 1]} : vector<16x16x3xf32> to vector<14x14x3xf32>
    %16 = vector.shape_cast %15 : vector<14x14x3xf32> to vector<196x3xf32>
    %17 = vector.extract_strided_slice %1 {offsets = [2, 1, 0], sizes = [14, 14, 3], strides = [1, 1, 1]} : vector<16x16x3xf32> to vector<14x14x3xf32>
    %18 = vector.shape_cast %17 : vector<14x14x3xf32> to vector<196x3xf32>
    %19 = vector.extract_strided_slice %1 {offsets = [2, 2, 0], sizes = [14, 14, 3], strides = [1, 1, 1]} : vector<16x16x3xf32> to vector<14x14x3xf32>
    %20 = vector.shape_cast %19 : vector<14x14x3xf32> to vector<196x3xf32>
    %21 = tpu.concatenate %4, %6, %8, %10, %12, %14, %16, %18, %20 in 1 : vector<196x3xf32>, vector<196x3xf32>, vector<196x3xf32>, vector<196x3xf32>, vector<196x3xf32>, vector<196x3xf32>, vector<196x3xf32>, vector<196x3xf32>, vector<196x3xf32> -> vector<196x27xf32>
    %cst = arith.constant dense<0.000000e+00> : vector<196x10xf32>
    %22 = tpu.matmul %21, %2, %cst {dimension_numbers = #tpu.dot_dimension_numbers<[1], [0], [0], [1], [0, 0, 1, 1], [], []>} : vector<196x27xf32>, vector<27x10xf32>, vector<196x10xf32> -> vector<196x10xf32>
    %c0_5 = arith.constant 0 : index
    %c0_6 = arith.constant 0 : index
    %23 = vector.load %arg3[%c0_5, %c0_6] : memref<2x10xf32, #tpu.memory_space<vmem>>, vector<2x10xf32>
    %24 = vector.extract_strided_slice %23 {offsets = [0, 0], sizes = [1, 10], strides = [1, 1]} : vector<2x10xf32> to vector<1x10xf32>
    %25 = vector.broadcast %24 : vector<1x10xf32> to vector<196x10xf32>
    %26 = arith.addf %22, %25 : vector<196x10xf32>
    %cst_7 = arith.constant 0.000000e+00 : f32
    %27 = vector.broadcast %cst_7 : f32 to vector<196x10xf32>
    %28 = arith.cmpf oge, %26, %27 : vector<196x10xf32>
    %29 = vector.extract_strided_slice %23 {offsets = [1, 0], sizes = [1, 10], strides = [1, 1]} : vector<2x10xf32> to vector<1x10xf32>
    %30 = vector.broadcast %29 : vector<1x10xf32> to vector<196x10xf32>
    %31 = arith.mulf %26, %30 : vector<196x10xf32>
    %32 = arith.select %28, %26, %31 : vector<196x10xi1>, vector<196x10xf32>
    %33 = vector.shape_cast %32 : vector<196x10xf32> to vector<14x14x10xf32>
    %34 = vector.shape_cast %33 : vector<14x14x10xf32> to vector<7x2x14x10xf32>
    %35 = vector.extract_strided_slice %34 {offsets = [0, 0, 0, 0], sizes = [7, 1, 14, 10], strides = [1, 1, 1, 1]} : vector<7x2x14x10xf32> to vector<7x1x14x10xf32>
    %36 = vector.shape_cast %35 : vector<7x1x14x10xf32> to vector<7x14x10xf32>
    %37 = vector.extract_strided_slice %34 {offsets = [0, 1, 0, 0], sizes = [7, 1, 14, 10], strides = [1, 1, 1, 1]} : vector<7x2x14x10xf32> to vector<7x1x14x10xf32>
    %38 = vector.shape_cast %37 : vector<7x1x14x10xf32> to vector<7x14x10xf32>
    %39 = arith.maximumf %36, %38 : vector<7x14x10xf32>
    %40 = vector.shape_cast %39 : vector<7x14x10xf32> to vector<49x2x10xf32>
    %41 = vector.extract_strided_slice %40 {offsets = [0, 0, 0], sizes = [49, 1, 10], strides = [1, 1, 1]} : vector<49x2x10xf32> to vector<49x1x10xf32>
    %42 = vector.shape_cast %41 : vector<49x1x10xf32> to vector<49x10xf32>
    %43 = vector.extract_strided_slice %40 {offsets = [0, 1, 0], sizes = [49, 1, 10], strides = [1, 1, 1]} : vector<49x2x10xf32> to vector<49x1x10xf32>
    %44 = vector.shape_cast %43 : vector<49x1x10xf32> to vector<49x10xf32>
    %45 = arith.maximumf %42, %44 : vector<49x10xf32>
    %46 = vector.shape_cast %45 : vector<49x10xf32> to vector<7x7x10xf32>
    %c0_8 = arith.constant 0 : index
    %c0_9 = arith.constant 0 : index
    %47 = vector.load %arg4[%c0_8, %c0_9] : memref<90x16xf32, #tpu.memory_space<vmem>>, vector<90x16xf32>
    %48 = vector.extract_strided_slice %46 {offsets = [0, 0, 0], sizes = [5, 5, 10], strides = [1, 1, 1]} : vector<7x7x10xf32> to vector<5x5x10xf32>
    %49 = vector.shape_cast %48 : vector<5x5x10xf32> to vector<25x10xf32>
    %50 = vector.extract_strided_slice %46 {offsets = [0, 1, 0], sizes = [5, 5, 10], strides = [1, 1, 1]} : vector<7x7x10xf32> to vector<5x5x10xf32>
    %51 = vector.shape_cast %50 : vector<5x5x10xf32> to vector<25x10xf32>
    %52 = vector.extract_strided_slice %46 {offsets = [0, 2, 0], sizes = [5, 5, 10], strides = [1, 1, 1]} : vector<7x7x10xf32> to vector<5x5x10xf32>
    %53 = vector.shape_cast %52 : vector<5x5x10xf32> to vector<25x10xf32>
    %54 = vector.extract_strided_slice %46 {offsets = [1, 0, 0], sizes = [5, 5, 10], strides = [1, 1, 1]} : vector<7x7x10xf32> to vector<5x5x10xf32>
    %55 = vector.shape_cast %54 : vector<5x5x10xf32> to vector<25x10xf32>
    %56 = vector.extract_strided_slice %46 {offsets = [1, 1, 0], sizes = [5, 5, 10], strides = [1, 1, 1]} : vector<7x7x10xf32> to vector<5x5x10xf32>
    %57 = vector.shape_cast %56 : vector<5x5x10xf32> to vector<25x10xf32>
    %58 = vector.extract_strided_slice %46 {offsets = [1, 2, 0], sizes = [5, 5, 10], strides = [1, 1, 1]} : vector<7x7x10xf32> to vector<5x5x10xf32>
    %59 = vector.shape_cast %58 : vector<5x5x10xf32> to vector<25x10xf32>
    %60 = vector.extract_strided_slice %46 {offsets = [2, 0, 0], sizes = [5, 5, 10], strides = [1, 1, 1]} : vector<7x7x10xf32> to vector<5x5x10xf32>
    %61 = vector.shape_cast %60 : vector<5x5x10xf32> to vector<25x10xf32>
    %62 = vector.extract_strided_slice %46 {offsets = [2, 1, 0], sizes = [5, 5, 10], strides = [1, 1, 1]} : vector<7x7x10xf32> to vector<5x5x10xf32>
    %63 = vector.shape_cast %62 : vector<5x5x10xf32> to vector<25x10xf32>
    %64 = vector.extract_strided_slice %46 {offsets = [2, 2, 0], sizes = [5, 5, 10], strides = [1, 1, 1]} : vector<7x7x10xf32> to vector<5x5x10xf32>
    %65 = vector.shape_cast %64 : vector<5x5x10xf32> to vector<25x10xf32>
    %66 = tpu.concatenate %49, %51, %53, %55, %57, %59, %61, %63, %65 in 1 : vector<25x10xf32>, vector<25x10xf32>, vector<25x10xf32>, vector<25x10xf32>, vector<25x10xf32>, vector<25x10xf32>, vector<25x10xf32>, vector<25x10xf32>, vector<25x10xf32> -> vector<25x90xf32>
    %cst_10 = arith.constant dense<0.000000e+00> : vector<25x16xf32>
    %67 = tpu.matmul %66, %47, %cst_10 {dimension_numbers = #tpu.dot_dimension_numbers<[1], [0], [0], [1], [0, 0, 1, 1], [], []>} : vector<25x90xf32>, vector<90x16xf32>, vector<25x16xf32> -> vector<25x16xf32>
    %c0_11 = arith.constant 0 : index
    %c0_12 = arith.constant 0 : index
    %68 = vector.load %arg5[%c0_11, %c0_12] : memref<2x16xf32, #tpu.memory_space<vmem>>, vector<2x16xf32>
    %69 = vector.extract_strided_slice %68 {offsets = [0, 0], sizes = [1, 16], strides = [1, 1]} : vector<2x16xf32> to vector<1x16xf32>
    %70 = vector.broadcast %69 : vector<1x16xf32> to vector<25x16xf32>
    %71 = arith.addf %67, %70 : vector<25x16xf32>
    %cst_13 = arith.constant 0.000000e+00 : f32
    %72 = vector.broadcast %cst_13 : f32 to vector<25x16xf32>
    %73 = arith.cmpf oge, %71, %72 : vector<25x16xf32>
    %74 = vector.extract_strided_slice %68 {offsets = [1, 0], sizes = [1, 16], strides = [1, 1]} : vector<2x16xf32> to vector<1x16xf32>
    %75 = vector.broadcast %74 : vector<1x16xf32> to vector<25x16xf32>
    %76 = arith.mulf %71, %75 : vector<25x16xf32>
    %77 = arith.select %73, %71, %76 : vector<25x16xi1>, vector<25x16xf32>
    %78 = vector.shape_cast %77 : vector<25x16xf32> to vector<5x5x16xf32>
    %c0_14 = arith.constant 0 : index
    %c0_15 = arith.constant 0 : index
    %79 = vector.load %arg6[%c0_14, %c0_15] : memref<144x32xf32, #tpu.memory_space<vmem>>, vector<144x32xf32>
    %80 = vector.extract_strided_slice %78 {offsets = [0, 0, 0], sizes = [3, 3, 16], strides = [1, 1, 1]} : vector<5x5x16xf32> to vector<3x3x16xf32>
    %81 = vector.shape_cast %80 : vector<3x3x16xf32> to vector<9x16xf32>
    %82 = vector.extract_strided_slice %78 {offsets = [0, 1, 0], sizes = [3, 3, 16], strides = [1, 1, 1]} : vector<5x5x16xf32> to vector<3x3x16xf32>
    %83 = vector.shape_cast %82 : vector<3x3x16xf32> to vector<9x16xf32>
    %84 = vector.extract_strided_slice %78 {offsets = [0, 2, 0], sizes = [3, 3, 16], strides = [1, 1, 1]} : vector<5x5x16xf32> to vector<3x3x16xf32>
    %85 = vector.shape_cast %84 : vector<3x3x16xf32> to vector<9x16xf32>
    %86 = vector.extract_strided_slice %78 {offsets = [1, 0, 0], sizes = [3, 3, 16], strides = [1, 1, 1]} : vector<5x5x16xf32> to vector<3x3x16xf32>
    %87 = vector.shape_cast %86 : vector<3x3x16xf32> to vector<9x16xf32>
    %88 = vector.extract_strided_slice %78 {offsets = [1, 1, 0], sizes = [3, 3, 16], strides = [1, 1, 1]} : vector<5x5x16xf32> to vector<3x3x16xf32>
    %89 = vector.shape_cast %88 : vector<3x3x16xf32> to vector<9x16xf32>
    %90 = vector.extract_strided_slice %78 {offsets = [1, 2, 0], sizes = [3, 3, 16], strides = [1, 1, 1]} : vector<5x5x16xf32> to vector<3x3x16xf32>
    %91 = vector.shape_cast %90 : vector<3x3x16xf32> to vector<9x16xf32>
    %92 = vector.extract_strided_slice %78 {offsets = [2, 0, 0], sizes = [3, 3, 16], strides = [1, 1, 1]} : vector<5x5x16xf32> to vector<3x3x16xf32>
    %93 = vector.shape_cast %92 : vector<3x3x16xf32> to vector<9x16xf32>
    %94 = vector.extract_strided_slice %78 {offsets = [2, 1, 0], sizes = [3, 3, 16], strides = [1, 1, 1]} : vector<5x5x16xf32> to vector<3x3x16xf32>
    %95 = vector.shape_cast %94 : vector<3x3x16xf32> to vector<9x16xf32>
    %96 = vector.extract_strided_slice %78 {offsets = [2, 2, 0], sizes = [3, 3, 16], strides = [1, 1, 1]} : vector<5x5x16xf32> to vector<3x3x16xf32>
    %97 = vector.shape_cast %96 : vector<3x3x16xf32> to vector<9x16xf32>
    %98 = tpu.concatenate %81, %83, %85, %87, %89, %91, %93, %95, %97 in 1 : vector<9x16xf32>, vector<9x16xf32>, vector<9x16xf32>, vector<9x16xf32>, vector<9x16xf32>, vector<9x16xf32>, vector<9x16xf32>, vector<9x16xf32>, vector<9x16xf32> -> vector<9x144xf32>
    %cst_16 = arith.constant dense<0.000000e+00> : vector<9x32xf32>
    %99 = tpu.matmul %98, %79, %cst_16 {dimension_numbers = #tpu.dot_dimension_numbers<[1], [0], [0], [1], [0, 0, 1, 1], [], []>} : vector<9x144xf32>, vector<144x32xf32>, vector<9x32xf32> -> vector<9x32xf32>
    %c0_17 = arith.constant 0 : index
    %c0_18 = arith.constant 0 : index
    %100 = vector.load %arg7[%c0_17, %c0_18] : memref<2x32xf32, #tpu.memory_space<vmem>>, vector<2x32xf32>
    %101 = vector.extract_strided_slice %100 {offsets = [0, 0], sizes = [1, 32], strides = [1, 1]} : vector<2x32xf32> to vector<1x32xf32>
    %102 = vector.broadcast %101 : vector<1x32xf32> to vector<9x32xf32>
    %103 = arith.addf %99, %102 : vector<9x32xf32>
    %cst_19 = arith.constant 0.000000e+00 : f32
    %104 = vector.broadcast %cst_19 : f32 to vector<9x32xf32>
    %105 = arith.cmpf oge, %103, %104 : vector<9x32xf32>
    %106 = vector.extract_strided_slice %100 {offsets = [1, 0], sizes = [1, 32], strides = [1, 1]} : vector<2x32xf32> to vector<1x32xf32>
    %107 = vector.broadcast %106 : vector<1x32xf32> to vector<9x32xf32>
    %108 = arith.mulf %103, %107 : vector<9x32xf32>
    %109 = arith.select %105, %103, %108 : vector<9x32xi1>, vector<9x32xf32>
    %c0_20 = arith.constant 0 : index
    %c0_21 = arith.constant 0 : index
    %110 = vector.load %arg8[%c0_20, %c0_21] : memref<32x6xf32, #tpu.memory_space<vmem>>, vector<32x6xf32>
    %cst_22 = arith.constant dense<0.000000e+00> : vector<9x6xf32>
    %111 = tpu.matmul %109, %110, %cst_22 {dimension_numbers = #tpu.dot_dimension_numbers<[1], [0], [0], [1], [0, 0, 1, 1], [], []>} : vector<9x32xf32>, vector<32x6xf32>, vector<9x6xf32> -> vector<9x6xf32>
    %c0_23 = arith.constant 0 : index
    %c0_24 = arith.constant 0 : index
    %112 = vector.load %arg9[%c0_23, %c0_24] : memref<1x6xf32, #tpu.memory_space<vmem>>, vector<1x6xf32>
    %113 = vector.broadcast %112 : vector<1x6xf32> to vector<9x6xf32>
    %114 = arith.addf %111, %113 : vector<9x6xf32>
    %115 = tpu.transpose %114, [1, 0] : vector<9x6xf32> -> vector<6x9xf32>
    %116 = vector.extract_strided_slice %115 {offsets = [0, 0], sizes = [1, 9], strides = [1, 1]} : vector<6x9xf32> to vector<1x9xf32>
    %117 = vector.extract_strided_slice %115 {offsets = [1, 0], sizes = [1, 9], strides = [1, 1]} : vector<6x9xf32> to vector<1x9xf32>
    %118 = arith.subf %116, %117 : vector<1x9xf32>
    %119 = math.exp %118 : vector<1x9xf32>
    %cst_25 = arith.constant 1.000000e+00 : f32
    %120 = vector.broadcast %cst_25 : f32 to vector<1x9xf32>
    %121 = arith.addf %120, %119 : vector<1x9xf32>
    %cst_26 = arith.constant 1.000000e+00 : f32
    %122 = vector.broadcast %cst_26 : f32 to vector<1x9xf32>
    %123 = arith.divf %122, %121 : vector<1x9xf32>
    %cst_27 = arith.constant 1.000000e+00 : f32
    %124 = vector.broadcast %cst_27 : f32 to vector<1x9xf32>
    %125 = arith.subf %124, %123 : vector<1x9xf32>
    %126 = tpu.concatenate %125, %123 in 0 : vector<1x9xf32>, vector<1x9xf32> -> vector<2x9xf32>
    %c0_28 = arith.constant 0 : index
    %c0_29 = arith.constant 0 : index
    %c0_30 = arith.constant 0 : index
    %127 = vector.load %arg11[%c0_28, %c0_29, %c0_30] : memref<1x2x9xf32, #tpu.memory_space<vmem>>, vector<1x2x9xf32>
    %128 = vector.shape_cast %127 : vector<1x2x9xf32> to vector<2x9xf32>
    %129 = vector.shape_cast %126 : vector<2x9xf32> to vector<1x2x9xf32>
    tpu.vector_store %arg11[%c0_28, %c0_29, %c0_30], %129 {strides = array<i32>} : memref<1x2x9xf32, #tpu.memory_space<vmem>>, vector<1x2x9xf32>,
    %130 = vector.extract_strided_slice %115 {offsets = [2, 0], sizes = [4, 9], strides = [1, 1]} : vector<6x9xf32> to vector<4x9xf32>
    %c0_31 = arith.constant 0 : index
    %c0_32 = arith.constant 0 : index
    %c0_33 = arith.constant 0 : index
    %131 = vector.load %arg10[%c0_31, %c0_32, %c0_33] : memref<1x4x9xf32, #tpu.memory_space<vmem>>, vector<1x4x9xf32>
    %132 = vector.shape_cast %131 : vector<1x4x9xf32> to vector<4x9xf32>
    %133 = vector.shape_cast %130 : vector<4x9xf32> to vector<1x4x9xf32>
    tpu.vector_store %arg10[%c0_31, %c0_32, %c0_33], %133 {strides = array<i32>} : memref<1x4x9xf32, #tpu.memory_space<vmem>>, vector<1x4x9xf32>,
    return
  }
  func.func @transform_0(%arg0: i32) -> (i32, i32, i32, i32) {
    %c0_i32 = arith.constant 0 : i32
    %c0_i32_0 = arith.constant 0 : i32
    %c0_i32_1 = arith.constant 0 : i32
    %c0_i32_2 = arith.constant 0 : i32
    return %arg0, %c0_i32, %c0_i32_0, %c0_i32_1 : i32, i32, i32, i32
  }
  func.func @transform_1(%arg0: i32) -> (i32, i32) {
    %c0_i32 = arith.constant 0 : i32
    %c0_i32_0 = arith.constant 0 : i32
    %c0_i32_1 = arith.constant 0 : i32
    return %c0_i32, %c0_i32_0 : i32, i32
  }
  func.func @transform_2(%arg0: i32) -> (i32, i32) {
    %c0_i32 = arith.constant 0 : i32
    %c0_i32_0 = arith.constant 0 : i32
    %c0_i32_1 = arith.constant 0 : i32
    return %c0_i32, %c0_i32_0 : i32, i32
  }
  func.func @transform_3(%arg0: i32) -> (i32, i32) {
    %c0_i32 = arith.constant 0 : i32
    %c0_i32_0 = arith.constant 0 : i32
    %c0_i32_1 = arith.constant 0 : i32
    return %c0_i32, %c0_i32_0 : i32, i32
  }
  func.func @transform_4(%arg0: i32) -> (i32, i32) {
    %c0_i32 = arith.constant 0 : i32
    %c0_i32_0 = arith.constant 0 : i32
    %c0_i32_1 = arith.constant 0 : i32
    return %c0_i32, %c0_i32_0 : i32, i32
  }
  func.func @transform_5(%arg0: i32) -> (i32, i32) {
    %c0_i32 = arith.constant 0 : i32
    %c0_i32_0 = arith.constant 0 : i32
    %c0_i32_1 = arith.constant 0 : i32
    return %c0_i32, %c0_i32_0 : i32, i32
  }
  func.func @transform_6(%arg0: i32) -> (i32, i32) {
    %c0_i32 = arith.constant 0 : i32
    %c0_i32_0 = arith.constant 0 : i32
    %c0_i32_1 = arith.constant 0 : i32
    return %c0_i32, %c0_i32_0 : i32, i32
  }
  func.func @transform_7(%arg0: i32) -> (i32, i32) {
    %c0_i32 = arith.constant 0 : i32
    %c0_i32_0 = arith.constant 0 : i32
    %c0_i32_1 = arith.constant 0 : i32
    return %c0_i32, %c0_i32_0 : i32, i32
  }
  func.func @transform_8(%arg0: i32) -> (i32, i32) {
    %c0_i32 = arith.constant 0 : i32
    %c0_i32_0 = arith.constant 0 : i32
    %c0_i32_1 = arith.constant 0 : i32
    return %c0_i32, %c0_i32_0 : i32, i32
  }
  func.func @transform_9(%arg0: i32) -> (i32, i32, i32) {
    %c0_i32 = arith.constant 0 : i32
    %c0_i32_0 = arith.constant 0 : i32
    %c0_i32_1 = arith.constant 0 : i32
    return %arg0, %c0_i32, %c0_i32_0 : i32, i32, i32
  }
  func.func @transform_10(%arg0: i32) -> (i32, i32, i32) {
    %c0_i32 = arith.constant 0 : i32
    %c0_i32_0 = arith.constant 0 : i32
    %c0_i32_1 = arith.constant 0 : i32
    return %arg0, %c0_i32, %c0_i32_0 : i32, i32, i32
  }
}

</mosaic_0001>

<llo_original>
// kernel: tpu_custom_call.1
$region0: #{tpu_custom_call.1}
  #allocation0 [shape = 'u32[]', space=smem, size = 0x4, offset = 0x4, fixed_abs, tag = 'smem constant byte address 0x4 - core index']
  #allocation1 [shape = 'u32[144,128]{1,0:T(1,128)}', space=vmem, size = 0x12000, scoped, tag = 'internal scratch']
  %s0 = inlined_call_operand.vmem [shape: f32[2,16,16,3], index: 0, kind: input, shape index: {}]
  %s1 = inlined_call_operand.vmem [shape: f32[27,10], index: 1, kind: input, shape index: {}]
  %s2 = inlined_call_operand.vmem [shape: f32[2,10], index: 2, kind: input, shape index: {}]
  %s3 = inlined_call_operand.vmem [shape: f32[90,16], index: 3, kind: input, shape index: {}]
  %s4 = inlined_call_operand.vmem [shape: f32[2,16], index: 4, kind: input, shape index: {}]
  %s5 = inlined_call_operand.vmem [shape: f32[144,32], index: 5, kind: input, shape index: {}]
  %s6 = inlined_call_operand.vmem [shape: f32[2,32], index: 6, kind: input, shape index: {}]
  %s7 = inlined_call_operand.vmem [shape: f32[32,6], index: 7, kind: input, shape index: {}]
  %s8 = inlined_call_operand.vmem [shape: f32[1,6], index: 8, kind: input, shape index: {}]
  %s9 = inlined_call_operand.hbm [shape: f32[2,4,9], index: 9, kind: output, shape index: {0}]
  %s10 = inlined_call_operand.hbm [shape: f32[2,2,9], index: 10, kind: output, shape index: {1}]
  %11 = xla_tuple %s9, %s10
  %s12 = sld [smem:[#allocation0]]
  $region77: #{tpu_custom_call.1} parent=0
    _
  %s14 = ssub.s32 1, %s12
  %s15 = scalar_select 0, %s14, %s12
  $region1: #{tpu_custom_call.1} parent=0
    #allocation2 [shape = 'u8[4096]{0}', space=vmem, size = 0x1000, scoped, tag = 'output window, operand 0']
    #allocation3 [shape = 's32[2]{0}', space=sflag, size = 0x8, scoped, tag = 'scoped memory for tpu_custom_call.1']
    #allocation4 [shape = 'u8[2048]{0}', space=vmem, size = 0x800, scoped, tag = 'output window, operand 1']
    #allocation5 [shape = 's32[2]{0}', space=sflag, size = 0x8, scoped, tag = 'scoped memory for tpu_custom_call.1']
    %16 = vsyncpa [#allocation3], 0
    %s17 = scalar_lea.sflag [#allocation3], 1
    %18 = vsyncpa %s17, 0
    %19 = vsyncpa [#allocation5], 0
    %s20 = scalar_lea.sflag [#allocation5], 1
    %21 = vsyncpa %s20, 0
    loop: start=0, step=1, limit=4
    $region2: #{tpu_custom_call.1} parent=1 // loop_pre_header
      _
    $region3: #{tpu_custom_call.1} parent=1 // loop_header
      %s23 = sphi 0, %s27
      %p24 = scmp.ge.s32.totalorder %s23, 4
      %s33 = sphi 0, %s35
      %s36 = sphi 0, %s33
      %s37 = sphi 0, %s36
      %s53 = sphi 0, %s37
      %s57 = sphi 0, %s57
      %s59 = sphi 0, %s57
      %s60 = sphi 0, %s59
      %s74 = sphi 0, %s60
      %s78 = sphi 0, %s78
      %s80 = sphi 0, %s78
      %s81 = sphi 0, %s80
      %s95 = sphi 0, %s81
      %s99 = sphi 0, %s99
      %s101 = sphi 0, %s99
      %s102 = sphi 0, %s101
      %s116 = sphi 0, %s102
      %s120 = sphi 0, %s120
      %s122 = sphi 0, %s120
      %s123 = sphi 0, %s122
      %s137 = sphi 0, %s123
      %s141 = sphi 0, %s141
      %s143 = sphi 0, %s141
      %s144 = sphi 0, %s143
      %s158 = sphi 0, %s144
      %s162 = sphi 0, %s162
      %s164 = sphi 0, %s162
      %s165 = sphi 0, %s164
      %s179 = sphi 0, %s165
      %s183 = sphi 0, %s183
      %s185 = sphi 0, %s183
      %s186 = sphi 0, %s185
      %s200 = sphi 0, %s186
      %s204 = sphi 0, %s204
      %s206 = sphi 0, %s204
      %s207 = sphi 0, %s206
      %s221 = sphi 0, %s207
      %s227 = sphi 0, %s229
      %s230 = sphi 0, %s227
      %s231 = sphi 0, %s230
      %s247 = sphi 0, %s231
      %s253 = sphi 0, %s255
      %s256 = sphi 0, %s253
      %s257 = sphi 0, %s256
      %s273 = sphi 0, %s257
    $region4: #{tpu_custom_call.1} parent=1 // loop_header_branch
      %26 = sbr.rel (%p24) target = $region8
    $region5: #{tpu_custom_call.1} parent=1 // loop_body
      %s28 = ssub.s32 %s23, 1
      %s29 = ssub.s32 %s23, 2
      %s30 = sadd.s32 %s23, 1
      %s31 = ssub.s32 %s23, %s30
      %p32 = scmp.eq.s32.totalorder %s31, 0
      %s34 = sadd.s32 %s33, 1
      %s35 = scalar_select %p32, %s33, %s34
      %p38 = pneg %p32
      %p39 = scmp.eq.s32.totalorder %s23, 1
      %p40 = por %p38, %p39
      %p41 = scmp.ne.s32.totalorder %s33, %s36
      %p42 = scmp.eq.s32.totalorder %s23, 0
      %p43 = por %p41, %p42
      %p44 = scmp.ne.s32.totalorder %s33, %s36
      %p45 = scmp.eq.s32.totalorder %s28, 1
      %p46 = por %p44, %p45
      %p47 = scmp.ne.s32.totalorder %s36, %s37
      %p48 = scmp.eq.s32.totalorder %s28, 0
      %p49 = por %p47, %p48
      %p50 = scmp.ne.s32.totalorder %s36, %s37
      %p51 = scmp.eq.s32.totalorder %s29, 1
      %p52 = por %p50, %p51
      %p54 = scmp.ne.s32.totalorder %s37, %s53
      %p55 = scmp.eq.s32.totalorder %s29, 0
      %p56 = por %p54, %p55
      %s58 = sadd.s32 %s57, 1
      %p61 = scmp.eq.s32.totalorder %s23, 1
      %p62 = scmp.ne.s32.totalorder %s57, %s59
      %p63 = scmp.eq.s32.totalorder %s23, 0
      %p64 = por %p62, %p63
      %p65 = scmp.ne.s32.totalorder %s57, %s59
      %p66 = scmp.eq.s32.totalorder %s28, 1
      %p67 = por %p65, %p66
      %p68 = scmp.ne.s32.totalorder %s59, %s60
      %p69 = scmp.eq.s32.totalorder %s28, 0
      %p70 = por %p68, %p69
      %p71 = scmp.ne.s32.totalorder %s59, %s60
      %p72 = scmp.eq.s32.totalorder %s29, 1
      %p73 = por %p71, %p72
      %p75 = scmp.ne.s32.totalorder %s60, %s74
      %p76 = scmp.eq.s32.totalorder %s29, 0
      %p77 = por %p75, %p76
      %s79 = sadd.s32 %s78, 1
      %p82 = scmp.eq.s32.totalorder %s23, 1
      %p83 = scmp.ne.s32.totalorder %s78, %s80
      %p84 = scmp.eq.s32.totalorder %s23, 0
      %p85 = por %p83, %p84
      %p86 = scmp.ne.s32.totalorder %s78, %s80
      %p87 = scmp.eq.s32.totalorder %s28, 1
      %p88 = por %p86, %p87
      %p89 = scmp.ne.s32.totalorder %s80, %s81
      %p90 = scmp.eq.s32.totalorder %s28, 0
      %p91 = por %p89, %p90
      %p92 = scmp.ne.s32.totalorder %s80, %s81
      %p93 = scmp.eq.s32.totalorder %s29, 1
      %p94 = por %p92, %p93
      %p96 = scmp.ne.s32.totalorder %s81, %s95
      %p97 = scmp.eq.s32.totalorder %s29, 0
      %p98 = por %p96, %p97
      %s100 = sadd.s32 %s99, 1
      %p103 = scmp.eq.s32.totalorder %s23, 1
      %p104 = scmp.ne.s32.totalorder %s99, %s101
      %p105 = scmp.eq.s32.totalorder %s23, 0
      %p106 = por %p104, %p105
      %p107 = scmp.ne.s32.totalorder %s99, %s101
      %p108 = scmp.eq.s32.totalorder %s28, 1
      %p109 = por %p107, %p108
      %p110 = scmp.ne.s32.totalorder %s101, %s102
      %p111 = scmp.eq.s32.totalorder %s28, 0
      %p112 = por %p110, %p111
      %p113 = scmp.ne.s32.totalorder %s101, %s102
      %p114 = scmp.eq.s32.totalorder %s29, 1
      %p115 = por %p113, %p114
      %p117 = scmp.ne.s32.totalorder %s102, %s116
      %p118 = scmp.eq.s32.totalorder %s29, 0
      %p119 = por %p117, %p118
      %s121 = sadd.s32 %s120, 1
      %p124 = scmp.eq.s32.totalorder %s23, 1
      %p125 = scmp.ne.s32.totalorder %s120, %s122
      %p126 = scmp.eq.s32.totalorder %s23, 0
      %p127 = por %p125, %p126
      %p128 = scmp.ne.s32.totalorder %s120, %s122
      %p129 = scmp.eq.s32.totalorder %s28, 1
      %p130 = por %p128, %p129
      %p131 = scmp.ne.s32.totalorder %s122, %s123
      %p132 = scmp.eq.s32.totalorder %s28, 0
      %p133 = por %p131, %p132
      %p134 = scmp.ne.s32.totalorder %s122, %s123
      %p135 = scmp.eq.s32.totalorder %s29, 1
      %p136 = por %p134, %p135
      %p138 = scmp.ne.s32.totalorder %s123, %s137
      %p139 = scmp.eq.s32.totalorder %s29, 0
      %p140 = por %p138, %p139
      %s142 = sadd.s32 %s141, 1
      %p145 = scmp.eq.s32.totalorder %s23, 1
      %p146 = scmp.ne.s32.totalorder %s141, %s143
      %p147 = scmp.eq.s32.totalorder %s23, 0
      %p148 = por %p146, %p147
      %p149 = scmp.ne.s32.totalorder %s141, %s143
      %p150 = scmp.eq.s32.totalorder %s28, 1
      %p151 = por %p149, %p150
      %p152 = scmp.ne.s32.totalorder %s143, %s144
      %p153 = scmp.eq.s32.totalorder %s28, 0
      %p154 = por %p152, %p153
      %p155 = scmp.ne.s32.totalorder %s143, %s144
      %p156 = scmp.eq.s32.totalorder %s29, 1
      %p157 = por %p155, %p156
      %p159 = scmp.ne.s32.totalorder %s144, %s158
      %p160 = scmp.eq.s32.totalorder %s29, 0
      %p161 = por %p159, %p160
      %s163 = sadd.s32 %s162, 1
      %p166 = scmp.eq.s32.totalorder %s23, 1
      %p167 = scmp.ne.s32.totalorder %s162, %s164
      %p168 = scmp.eq.s32.totalorder %s23, 0
      %p169 = por %p167, %p168
      %p170 = scmp.ne.s32.totalorder %s162, %s164
      %p171 = scmp.eq.s32.totalorder %s28, 1
      %p172 = por %p170, %p171
      %p173 = scmp.ne.s32.totalorder %s164, %s165
      %p174 = scmp.eq.s32.totalorder %s28, 0
      %p175 = por %p173, %p174
      %p176 = scmp.ne.s32.totalorder %s164, %s165
      %p177 = scmp.eq.s32.totalorder %s29, 1
      %p178 = por %p176, %p177
      %p180 = scmp.ne.s32.totalorder %s165, %s179
      %p181 = scmp.eq.s32.totalorder %s29, 0
      %p182 = por %p180, %p181
      %s184 = sadd.s32 %s183, 1
      %p187 = scmp.eq.s32.totalorder %s23, 1
      %p188 = scmp.ne.s32.totalorder %s183, %s185
      %p189 = scmp.eq.s32.totalorder %s23, 0
      %p190 = por %p188, %p189
      %p191 = scmp.ne.s32.totalorder %s183, %s185
      %p192 = scmp.eq.s32.totalorder %s28, 1
      %p193 = por %p191, %p192
      %p194 = scmp.ne.s32.totalorder %s185, %s186
      %p195 = scmp.eq.s32.totalorder %s28, 0
      %p196 = por %p194, %p195
      %p197 = scmp.ne.s32.totalorder %s185, %s186
      %p198 = scmp.eq.s32.totalorder %s29, 1
      %p199 = por %p197, %p198
      %p201 = scmp.ne.s32.totalorder %s186, %s200
      %p202 = scmp.eq.s32.totalorder %s29, 0
      %p203 = por %p201, %p202
      %s205 = sadd.s32 %s204, 1
      %p208 = scmp.eq.s32.totalorder %s23, 1
      %p209 = scmp.ne.s32.totalorder %s204, %s206
      %p210 = scmp.eq.s32.totalorder %s23, 0
      %p211 = por %p209, %p210
      %p212 = scmp.ne.s32.totalorder %s204, %s206
      %p213 = scmp.eq.s32.totalorder %s28, 1
      %p214 = por %p212, %p213
      %p215 = scmp.ne.s32.totalorder %s206, %s207
      %p216 = scmp.eq.s32.totalorder %s28, 0
      %p217 = por %p215, %p216
      %p218 = scmp.ne.s32.totalorder %s206, %s207
      %p219 = scmp.eq.s32.totalorder %s29, 1
      %p220 = por %p218, %p219
      %p222 = scmp.ne.s32.totalorder %s207, %s221
      %p223 = scmp.eq.s32.totalorder %s29, 0
      %p224 = por %p222, %p223
      %s225 = ssub.s32 %s23, %s30
      %p226 = scmp.eq.s32.totalorder %s225, 0
      %s228 = sadd.s32 %s227, 1
      %s229 = scalar_select %p226, %s227, %s228
      %p232 = pneg %p226
      %p233 = scmp.eq.s32.totalorder %s23, 1
      %p234 = por %p232, %p233
      %p235 = scmp.ne.s32.totalorder %s227, %s230
      %p236 = scmp.eq.s32.totalorder %s23, 0
      %p237 = por %p235, %p236
      %p238 = scmp.ne.s32.totalorder %s227, %s230
      %p239 = scmp.eq.s32.totalorder %s28, 1
      %p240 = por %p238, %p239
      %p241 = scmp.ne.s32.totalorder %s230, %s231
      %p242 = scmp.eq.s32.totalorder %s28, 0
      %p243 = por %p241, %p242
      %p244 = scmp.ne.s32.totalorder %s230, %s231
      %p245 = scmp.eq.s32.totalorder %s29, 1
      %p246 = por %p244, %p245
      %p248 = scmp.ne.s32.totalorder %s231, %s247
      %p249 = scmp.eq.s32.totalorder %s29, 0
      %p250 = por %p248, %p249
      %s251 = ssub.s32 %s23, %s30
      %p252 = scmp.eq.s32.totalorder %s251, 0
      %s254 = sadd.s32 %s253, 1
      %s255 = scalar_select %p252, %s253, %s254
      %p258 = pneg %p252
      %p259 = scmp.eq.s32.totalorder %s23, 1
      %p260 = por %p258, %p259
      %p261 = scmp.ne.s32.totalorder %s253, %s256
      %p262 = scmp.eq.s32.totalorder %s23, 0
      %p263 = por %p261, %p262
      %p264 = scmp.ne.s32.totalorder %s253, %s256
      %p265 = scmp.eq.s32.totalorder %s28, 1
      %p266 = por %p264, %p265
      %p267 = scmp.ne.s32.totalorder %s256, %s257
      %p268 = scmp.eq.s32.totalorder %s28, 0
      %p269 = por %p267, %p268
      %p270 = scmp.ne.s32.totalorder %s256, %s257
      %p271 = scmp.eq.s32.totalorder %s29, 1
      %p272 = por %p270, %p271
      %p274 = scmp.ne.s32.totalorder %s257, %s273
      %p275 = scmp.eq.s32.totalorder %s29, 0
      %p276 = por %p274, %p275
      %p277 = scmp.le.s32.totalorder 1, %s23
      %p278 = scmp.lt.s32.totalorder %s23, 3
      %p279 = pnand %p277, %p278
      %p280 = pneg %p279
      // Predicated region
      $region9: #{tpu_custom_call.1} parent=5 // pred_check
        _
      $region10: #{tpu_custom_call.1} parent=5 // pred_check_branch
        %282 = sbr.rel (%p279) target = $region12
      $region11: #{tpu_custom_call.1} parent=5 // pred_region
        %s283 = ssub.s32 %s23, 1
        // Predicated region
        $region13: #{tpu_custom_call.1} parent=11 // pred_check
          %p284 = pneg %p70
        $region14: #{tpu_custom_call.1} parent=11 // pred_check_branch
          %286 = sbr.rel (%p284) target = $region16
        $region15: #{tpu_custom_call.1} parent=11 // pred_region
          _
        $region16: #{tpu_custom_call.1} parent=11 // pred_fallthru
          _
        // Predicated region
        $region17: #{tpu_custom_call.1} parent=11 // pred_check
          %p287 = pneg %p91
        $region18: #{tpu_custom_call.1} parent=11 // pred_check_branch
          %289 = sbr.rel (%p287) target = $region20
        $region19: #{tpu_custom_call.1} parent=11 // pred_region
          _
        $region20: #{tpu_custom_call.1} parent=11 // pred_fallthru
          _
        // Predicated region
        $region21: #{tpu_custom_call.1} parent=11 // pred_check
          %p290 = pneg %p112
        $region22: #{tpu_custom_call.1} parent=11 // pred_check_branch
          %292 = sbr.rel (%p290) target = $region24
        $region23: #{tpu_custom_call.1} parent=11 // pred_region
          _
        $region24: #{tpu_custom_call.1} parent=11 // pred_fallthru
          _
        // Predicated region
        $region25: #{tpu_custom_call.1} parent=11 // pred_check
          %p293 = pneg %p133
        $region26: #{tpu_custom_call.1} parent=11 // pred_check_branch
          %295 = sbr.rel (%p293) target = $region28
        $region27: #{tpu_custom_call.1} parent=11 // pred_region
          _
        $region28: #{tpu_custom_call.1} parent=11 // pred_fallthru
          _
        // Predicated region
        $region29: #{tpu_custom_call.1} parent=11 // pred_check
          %p296 = pneg %p154
        $region30: #{tpu_custom_call.1} parent=11 // pred_check_branch
          %298 = sbr.rel (%p296) target = $region32
        $region31: #{tpu_custom_call.1} parent=11 // pred_region
          _
        $region32: #{tpu_custom_call.1} parent=11 // pred_fallthru
          _
        // Predicated region
        $region33: #{tpu_custom_call.1} parent=11 // pred_check
          %p299 = pneg %p175
        $region34: #{tpu_custom_call.1} parent=11 // pred_check_branch
          %301 = sbr.rel (%p299) target = $region36
        $region35: #{tpu_custom_call.1} parent=11 // pred_region
          _
        $region36: #{tpu_custom_call.1} parent=11 // pred_fallthru
          _
        // Predicated region
        $region37: #{tpu_custom_call.1} parent=11 // pred_check
          %p302 = pneg %p196
        $region38: #{tpu_custom_call.1} parent=11 // pred_check_branch
          %304 = sbr.rel (%p302) target = $region40
        $region39: #{tpu_custom_call.1} parent=11 // pred_region
          _
        $region40: #{tpu_custom_call.1} parent=11 // pred_fallthru
          _
        // Predicated region
        $region41: #{tpu_custom_call.1} parent=11 // pred_check
          %p305 = pneg %p217
        $region42: #{tpu_custom_call.1} parent=11 // pred_check_branch
          %307 = sbr.rel (%p305) target = $region44
        $region43: #{tpu_custom_call.1} parent=11 // pred_region
          _
        $region44: #{tpu_custom_call.1} parent=11 // pred_fallthru
          _
      $region12: #{tpu_custom_call.1} parent=5 // pred_fallthru
        _
      %p308 = scmp.lt.s32.totalorder %s23, 2
      // Predicated region
      $region45: #{tpu_custom_call.1} parent=5 // pred_check
        %p309 = pneg %p308
      $region46: #{tpu_custom_call.1} parent=5 // pred_check_branch
        %311 = sbr.rel (%p309) target = $region48
      $region47: #{tpu_custom_call.1} parent=5 // pred_region
        // Predicated region
        $region49: #{tpu_custom_call.1} parent=47 // pred_check
          %p312 = pneg %p43
        $region50: #{tpu_custom_call.1} parent=47 // pred_check_branch
          %314 = sbr.rel (%p312) target = $region52
        $region51: #{tpu_custom_call.1} parent=47 // pred_region
          %p315 = scmp.lt.s32.totalorder %s23, 1
          %s316 = scalar_select %p315, %s23, 1
          %s317 = smul.addr %s316, 32
          %s318 = smul.addr %s317, 8
          %s319 = scalar_lea.vmem %s0, %s318
        $region52: #{tpu_custom_call.1} parent=47 // pred_fallthru
          _
      $region48: #{tpu_custom_call.1} parent=5 // pred_fallthru
        _
      %p320 = scmp.le.s32.totalorder 1, %s23
      %p321 = scmp.lt.s32.totalorder %s23, 3
      %p322 = pnand %p320, %p321
      %p323 = pneg %p322
      // Predicated region
      $region53: #{tpu_custom_call.1} parent=5 // pred_check
        _
      $region54: #{tpu_custom_call.1} parent=5 // pred_check_branch
        %325 = sbr.rel (%p322) target = $region56
      $region55: #{tpu_custom_call.1} parent=5 // pred_region
        %s326 = ssub.s32 %s23, 1
        %p327 = scmp.lt.s32.totalorder %s28, 1
        %s328 = scalar_select %p327, %s28, 1
        %s329 = smul.addr %s328, 32
        %s330 = smul.addr %s329, 8
        %s331 = scalar_lea.vmem %s0, %s330
        %p332 = pneg %p49
        %p333 = pneg %p46
        %p334 = pneg %p70
        %p335 = pneg %p67
        %p336 = pneg %p91
        %p337 = pneg %p88
        %p338 = pneg %p112
        %p339 = pneg %p109
        %p340 = pneg %p133
        %p341 = pneg %p130
        %p342 = pneg %p154
        %p343 = pneg %p151
        %p344 = pneg %p175
        %p345 = pneg %p172
        %p346 = pneg %p196
        %p347 = pneg %p193
        %p348 = pneg %p217
        %p349 = pneg %p214
        %p350 = pneg %p243
        %p351 = pneg %p240
        %s352 = sand.u32 %s230, 1
        %s353 = scalar_lea.sflag [#allocation3], %s352
        %s354 = sand.u32 %s230, 1
        %s355 = smul.addr %s354, 4
        %s356 = scalar_lea.vmem [#allocation2], %s355
        %p357 = pneg %p269
        %p358 = pneg %p266
        %s359 = sand.u32 %s256, 1
        %s360 = scalar_lea.sflag [#allocation5], %s359
        %s361 = sand.u32 %s256, 1
        %s362 = smul.addr %s361, 2
        %s363 = scalar_lea.vmem [#allocation4], %s362
        %p364 = scmp.lt.s32.totalorder %s28, 1
        %s365 = scalar_select %p364, %s28, 1
        %s366 = smul.addr %s365, 32
        %s367 = smul.addr %s366, 8
        %s368 = scalar_lea.vmem %s0, %s367
        %v369 = vld [vmem:[%s368] sm:$0xff]
        %v370 = vld [vmem:[%s368 + $0x8] sm:$0xff]
        %v371 = vld [vmem:[%s368 + $0x10] sm:$0xff]
        %v372 = vld [vmem:[%s368 + $0x18] sm:$0xff]
        %v373 = vld [vmem:[%s368 + $0x20] sm:$0xff]
        %v374 = vld [vmem:[%s368 + $0x28] sm:$0xff]
        %v375 = vld [vmem:[%s368 + $0x30] sm:$0xff]
        %v376 = vld [vmem:[%s368 + $0x38] sm:$0xff]
        %v377 = vld [vmem:[%s368 + $0x40] sm:$0xff]
        %v378 = vld [vmem:[%s368 + $0x48] sm:$0xff]
        %v379 = vld [vmem:[%s368 + $0x50] sm:$0xff]
        %v380 = vld [vmem:[%s368 + $0x58] sm:$0xff]
        %v381 = vld [vmem:[%s368 + $0x60] sm:$0xff]
        %v382 = vld [vmem:[%s368 + $0x68] sm:$0xff]
        %v383 = vld [vmem:[%s368 + $0x70] sm:$0xff]
        %v384 = vld [vmem:[%s368 + $0x78] sm:$0xff]
        %v385 = vld [vmem:[%s368 + $0x80] sm:$0xff]
        %v386 = vld [vmem:[%s368 + $0x88] sm:$0xff]
        %v387 = vld [vmem:[%s368 + $0x90] sm:$0xff]
        %v388 = vld [vmem:[%s368 + $0x98] sm:$0xff]
        %v389 = vld [vmem:[%s368 + $0xa0] sm:$0xff]
        %v390 = vld [vmem:[%s368 + $0xa8] sm:$0xff]
        %v391 = vld [vmem:[%s368 + $0xb0] sm:$0xff]
        %v392 = vld [vmem:[%s368 + $0xb8] sm:$0xff]
        %v393 = vld [vmem:[%s368 + $0xc0] sm:$0xff]
        %v394 = vld [vmem:[%s368 + $0xc8] sm:$0xff]
        %v395 = vld [vmem:[%s368 + $0xd0] sm:$0xff]
        %v396 = vld [vmem:[%s368 + $0xd8] sm:$0xff]
        %v397 = vld [vmem:[%s368 + $0xe0] sm:$0xff]
        %v398 = vld [vmem:[%s368 + $0xe8] sm:$0xff]
        %v399 = vld [vmem:[%s368 + $0xf0] sm:$0xff]
        %v400 = vld [vmem:[%s368 + $0xf8] sm:$0xff]
        %v401 = vld [vmem:[%s1] sm:$0xff]
        %v402 = vld [vmem:[%s1 + $0x8] sm:$0xff]
        %v403 = vld [vmem:[%s1 + $0x10] sm:$0xff]
        %v404 = vld [vmem:[%s1 + $0x18] sm:$0x7]
        %v433 = vcombine.high %v369, %v369
        %v435 = vunpack.c.l.s4 1983009808
        %v436 = vunpack.c.0.s8 %v435
        %v437 = vlaneseq
        %v438 = vshrl.u32 %v437, 7
        %v439 = vsub.s32 %v436, %v438
        %v440 = vrot.slane %v369, %v439
        %v442 = vunpack.c.l.s4 1983009808
        %v443 = vunpack.c.0.s8 %v442
        %v444 = vlaneseq
        %v445 = vshrl.u32 %v444, 7
        %v446 = vsub.s32 %v443, %v445
        %v447 = vrot.slane %v433, %v446
        %v448 = vcombine.high %v440, %v440
        %v449 = vcombine.high %v447, %v447
        %v450 = vcombine.high %v370, %v370
        %v452 = vunpack.c.l.s4 1983009808
        %v453 = vunpack.c.0.s8 %v452
        %v454 = vlaneseq
        %v455 = vshrl.u32 %v454, 7
        %v456 = vsub.s32 %v453, %v455
        %v457 = vrot.slane %v370, %v456
        %v459 = vunpack.c.l.s4 1983009808
        %v460 = vunpack.c.0.s8 %v459
        %v461 = vlaneseq
        %v462 = vshrl.u32 %v461, 7
        %v463 = vsub.s32 %v460, %v462
        %v464 = vrot.slane %v450, %v463
        %v465 = vcombine.high %v457, %v457
        %v466 = vcombine.high %v371, %v371
        %v468 = vunpack.c.l.s4 1983009808
        %v469 = vunpack.c.0.s8 %v468
        %v470 = vlaneseq
        %v471 = vshrl.u32 %v470, 7
        %v472 = vsub.s32 %v469, %v471
        %v473 = vrot.slane %v371, %v472
        %v475 = vunpack.c.l.s4 1983009808
        %v476 = vunpack.c.0.s8 %v475
        %v477 = vlaneseq
        %v478 = vshrl.u32 %v477, 7
        %v479 = vsub.s32 %v476, %v478
        %v480 = vrot.slane %v466, %v479
        %v481 = vcombine.high %v473, %v473
        %v482 = vcombine.high %v480, %v480
        %v483 = vcombine.high %v372, %v372
        %v485 = vunpack.c.l.s4 1983009808
        %v486 = vunpack.c.0.s8 %v485
        %v487 = vlaneseq
        %v488 = vshrl.u32 %v487, 7
        %v489 = vsub.s32 %v486, %v488
        %v490 = vrot.slane %v372, %v489
        %v492 = vunpack.c.l.s4 1983009808
        %v493 = vunpack.c.0.s8 %v492
        %v494 = vlaneseq
        %v495 = vshrl.u32 %v494, 7
        %v496 = vsub.s32 %v493, %v495
        %v497 = vrot.slane %v483, %v496
        %v498 = vcombine.high %v490, %v490
        %v499 = vcombine.high %v373, %v373
        %v501 = vunpack.c.l.s4 1983009808
        %v502 = vunpack.c.0.s8 %v501
        %v503 = vlaneseq
        %v504 = vshrl.u32 %v503, 7
        %v505 = vsub.s32 %v502, %v504
        %v506 = vrot.slane %v373, %v505
        %v508 = vunpack.c.l.s4 1983009808
        %v509 = vunpack.c.0.s8 %v508
        %v510 = vlaneseq
        %v511 = vshrl.u32 %v510, 7
        %v512 = vsub.s32 %v509, %v511
        %v513 = vrot.slane %v499, %v512
        %v514 = vcombine.high %v506, %v506
        %v515 = vcombine.high %v513, %v513
        %v516 = vcombine.high %v374, %v374
        %v518 = vunpack.c.l.s4 1983009808
        %v519 = vunpack.c.0.s8 %v518
        %v520 = vlaneseq
        %v521 = vshrl.u32 %v520, 7
        %v522 = vsub.s32 %v519, %v521
        %v523 = vrot.slane %v374, %v522
        %v525 = vunpack.c.l.s4 1983009808
        %v526 = vunpack.c.0.s8 %v525
        %v527 = vlaneseq
        %v528 = vshrl.u32 %v527, 7
        %v529 = vsub.s32 %v526, %v528
        %v530 = vrot.slane %v516, %v529
        %v531 = vcombine.high %v523, %v523
        %v532 = vcombine.high %v375, %v375
        %v534 = vunpack.c.l.s4 1983009808
        %v535 = vunpack.c.0.s8 %v534
        %v536 = vlaneseq
        %v537 = vshrl.u32 %v536, 7
        %v538 = vsub.s32 %v535, %v537
        %v539 = vrot.slane %v375, %v538
        %v541 = vunpack.c.l.s4 1983009808
        %v542 = vunpack.c.0.s8 %v541
        %v543 = vlaneseq
        %v544 = vshrl.u32 %v543, 7
        %v545 = vsub.s32 %v542, %v544
        %v546 = vrot.slane %v532, %v545
        %v547 = vcombine.high %v539, %v539
        %v548 = vcombine.high %v546, %v546
        %v549 = vcombine.high %v376, %v376
        %v551 = vunpack.c.l.s4 1983009808
        %v552 = vunpack.c.0.s8 %v551
        %v553 = vlaneseq
        %v554 = vshrl.u32 %v553, 7
        %v555 = vsub.s32 %v552, %v554
        %v556 = vrot.slane %v376, %v555
        %v558 = vunpack.c.l.s4 1983009808
        %v559 = vunpack.c.0.s8 %v558
        %v560 = vlaneseq
        %v561 = vshrl.u32 %v560, 7
        %v562 = vsub.s32 %v559, %v561
        %v563 = vrot.slane %v549, %v562
        %v564 = vcombine.high %v556, %v556
        %v565 = vcombine.high %v377, %v377
        %v567 = vunpack.c.l.s4 1983009808
        %v568 = vunpack.c.0.s8 %v567
        %v569 = vlaneseq
        %v570 = vshrl.u32 %v569, 7
        %v571 = vsub.s32 %v568, %v570
        %v572 = vrot.slane %v377, %v571
        %v574 = vunpack.c.l.s4 1983009808
        %v575 = vunpack.c.0.s8 %v574
        %v576 = vlaneseq
        %v577 = vshrl.u32 %v576, 7
        %v578 = vsub.s32 %v575, %v577
        %v579 = vrot.slane %v565, %v578
        %v580 = vcombine.high %v572, %v572
        %v581 = vcombine.high %v579, %v579
        %v582 = vcombine.high %v378, %v378
        %v584 = vunpack.c.l.s4 1983009808
        %v585 = vunpack.c.0.s8 %v584
        %v586 = vlaneseq
        %v587 = vshrl.u32 %v586, 7
        %v588 = vsub.s32 %v585, %v587
        %v589 = vrot.slane %v378, %v588
        %v591 = vunpack.c.l.s4 1983009808
        %v592 = vunpack.c.0.s8 %v591
        %v593 = vlaneseq
        %v594 = vshrl.u32 %v593, 7
        %v595 = vsub.s32 %v592, %v594
        %v596 = vrot.slane %v582, %v595
        %v597 = vcombine.high %v589, %v589
        %v598 = vcombine.high %v379, %v379
        %v600 = vunpack.c.l.s4 1983009808
        %v601 = vunpack.c.0.s8 %v600
        %v602 = vlaneseq
        %v603 = vshrl.u32 %v602, 7
        %v604 = vsub.s32 %v601, %v603
        %v605 = vrot.slane %v379, %v604
        %v607 = vunpack.c.l.s4 1983009808
        %v608 = vunpack.c.0.s8 %v607
        %v609 = vlaneseq
        %v610 = vshrl.u32 %v609, 7
        %v611 = vsub.s32 %v608, %v610
        %v612 = vrot.slane %v598, %v611
        %v613 = vcombine.high %v605, %v605
        %v614 = vcombine.high %v612, %v612
        %v615 = vcombine.high %v380, %v380
        %v617 = vunpack.c.l.s4 1983009808
        %v618 = vunpack.c.0.s8 %v617
        %v619 = vlaneseq
        %v620 = vshrl.u32 %v619, 7
        %v621 = vsub.s32 %v618, %v620
        %v622 = vrot.slane %v380, %v621
        %v624 = vunpack.c.l.s4 1983009808
        %v625 = vunpack.c.0.s8 %v624
        %v626 = vlaneseq
        %v627 = vshrl.u32 %v626, 7
        %v628 = vsub.s32 %v625, %v627
        %v629 = vrot.slane %v615, %v628
        %v630 = vcombine.high %v622, %v622
        %v631 = vcombine.high %v381, %v381
        %v633 = vunpack.c.l.s4 1983009808
        %v634 = vunpack.c.0.s8 %v633
        %v635 = vlaneseq
        %v636 = vshrl.u32 %v635, 7
        %v637 = vsub.s32 %v634, %v636
        %v638 = vrot.slane %v381, %v637
        %v640 = vunpack.c.l.s4 1983009808
        %v641 = vunpack.c.0.s8 %v640
        %v642 = vlaneseq
        %v643 = vshrl.u32 %v642, 7
        %v644 = vsub.s32 %v641, %v643
        %v645 = vrot.slane %v631, %v644
        %v646 = vcombine.high %v638, %v638
        %v647 = vcombine.high %v645, %v645
        %v648 = vcombine.high %v382, %v382
        %v650 = vunpack.c.l.s4 1983009808
        %v651 = vunpack.c.0.s8 %v650
        %v652 = vlaneseq
        %v653 = vshrl.u32 %v652, 7
        %v654 = vsub.s32 %v651, %v653
        %v655 = vrot.slane %v382, %v654
        %v657 = vunpack.c.l.s4 1983009808
        %v658 = vunpack.c.0.s8 %v657
        %v659 = vlaneseq
        %v660 = vshrl.u32 %v659, 7
        %v661 = vsub.s32 %v658, %v660
        %v662 = vrot.slane %v648, %v661
        %v663 = vcombine.high %v655, %v655
        %v664 = vcombine.high %v383, %v383
        %v666 = vunpack.c.l.s4 1983009808
        %v667 = vunpack.c.0.s8 %v666
        %v668 = vlaneseq
        %v669 = vshrl.u32 %v668, 7
        %v670 = vsub.s32 %v667, %v669
        %v671 = vrot.slane %v383, %v670
        %v673 = vunpack.c.l.s4 1983009808
        %v674 = vunpack.c.0.s8 %v673
        %v675 = vlaneseq
        %v676 = vshrl.u32 %v675, 7
        %v677 = vsub.s32 %v674, %v676
        %v678 = vrot.slane %v664, %v677
        %v679 = vcombine.high %v671, %v671
        %v680 = vcombine.high %v678, %v678
        %v681 = vcombine.high %v384, %v384
        %v683 = vunpack.c.l.s4 1983009808
        %v684 = vunpack.c.0.s8 %v683
        %v685 = vlaneseq
        %v686 = vshrl.u32 %v685, 7
        %v687 = vsub.s32 %v684, %v686
        %v688 = vrot.slane %v384, %v687
        %v690 = vunpack.c.l.s4 1983009808
        %v691 = vunpack.c.0.s8 %v690
        %v692 = vlaneseq
        %v693 = vshrl.u32 %v692, 7
        %v694 = vsub.s32 %v691, %v693
        %v695 = vrot.slane %v681, %v694
        %v696 = vcombine.high %v688, %v688
        %v697 = vcombine.high %v385, %v385
        %v699 = vunpack.c.l.s4 1983009808
        %v700 = vunpack.c.0.s8 %v699
        %v701 = vlaneseq
        %v702 = vshrl.u32 %v701, 7
        %v703 = vsub.s32 %v700, %v702
        %v704 = vrot.slane %v385, %v703
        %v706 = vunpack.c.l.s4 1983009808
        %v707 = vunpack.c.0.s8 %v706
        %v708 = vlaneseq
        %v709 = vshrl.u32 %v708, 7
        %v710 = vsub.s32 %v707, %v709
        %v711 = vrot.slane %v697, %v710
        %v712 = vcombine.high %v704, %v704
        %v713 = vcombine.high %v711, %v711
        %v714 = vcombine.high %v386, %v386
        %v716 = vunpack.c.l.s4 1983009808
        %v717 = vunpack.c.0.s8 %v716
        %v718 = vlaneseq
        %v719 = vshrl.u32 %v718, 7
        %v720 = vsub.s32 %v717, %v719
        %v721 = vrot.slane %v386, %v720
        %v723 = vunpack.c.l.s4 1983009808
        %v724 = vunpack.c.0.s8 %v723
        %v725 = vlaneseq
        %v726 = vshrl.u32 %v725, 7
        %v727 = vsub.s32 %v724, %v726
        %v728 = vrot.slane %v714, %v727
        %v729 = vcombine.high %v721, %v721
        %v730 = vcombine.high %v387, %v387
        %v732 = vunpack.c.l.s4 1983009808
        %v733 = vunpack.c.0.s8 %v732
        %v734 = vlaneseq
        %v735 = vshrl.u32 %v734, 7
        %v736 = vsub.s32 %v733, %v735
        %v737 = vrot.slane %v387, %v736
        %v739 = vunpack.c.l.s4 1983009808
        %v740 = vunpack.c.0.s8 %v739
        %v741 = vlaneseq
        %v742 = vshrl.u32 %v741, 7
        %v743 = vsub.s32 %v740, %v742
        %v744 = vrot.slane %v730, %v743
        %v745 = vcombine.high %v737, %v737
        %v746 = vcombine.high %v744, %v744
        %v747 = vcombine.high %v388, %v388
        %v749 = vunpack.c.l.s4 1983009808
        %v750 = vunpack.c.0.s8 %v749
        %v751 = vlaneseq
        %v752 = vshrl.u32 %v751, 7
        %v753 = vsub.s32 %v750, %v752
        %v754 = vrot.slane %v388, %v753
        %v756 = vunpack.c.l.s4 1983009808
        %v757 = vunpack.c.0.s8 %v756
        %v758 = vlaneseq
        %v759 = vshrl.u32 %v758, 7
        %v760 = vsub.s32 %v757, %v759
        %v761 = vrot.slane %v747, %v760
        %v762 = vcombine.high %v754, %v754
        %v763 = vcombine.high %v389, %v389
        %v765 = vunpack.c.l.s4 1983009808
        %v766 = vunpack.c.0.s8 %v765
        %v767 = vlaneseq
        %v768 = vshrl.u32 %v767, 7
        %v769 = vsub.s32 %v766, %v768
        %v770 = vrot.slane %v389, %v769
        %v772 = vunpack.c.l.s4 1983009808
        %v773 = vunpack.c.0.s8 %v772
        %v774 = vlaneseq
        %v775 = vshrl.u32 %v774, 7
        %v776 = vsub.s32 %v773, %v775
        %v777 = vrot.slane %v763, %v776
        %v778 = vcombine.high %v770, %v770
        %v779 = vcombine.high %v777, %v777
        %v780 = vcombine.high %v390, %v390
        %v782 = vunpack.c.l.s4 1983009808
        %v783 = vunpack.c.0.s8 %v782
        %v784 = vlaneseq
        %v785 = vshrl.u32 %v784, 7
        %v786 = vsub.s32 %v783, %v785
        %v787 = vrot.slane %v390, %v786
        %v789 = vunpack.c.l.s4 1983009808
        %v790 = vunpack.c.0.s8 %v789
        %v791 = vlaneseq
        %v792 = vshrl.u32 %v791, 7
        %v793 = vsub.s32 %v790, %v792
        %v794 = vrot.slane %v780, %v793
        %v795 = vcombine.high %v787, %v787
        %v796 = vcombine.high %v391, %v391
        %v798 = vunpack.c.l.s4 1983009808
        %v799 = vunpack.c.0.s8 %v798
        %v800 = vlaneseq
        %v801 = vshrl.u32 %v800, 7
        %v802 = vsub.s32 %v799, %v801
        %v803 = vrot.slane %v391, %v802
        %v805 = vunpack.c.l.s4 1983009808
        %v806 = vunpack.c.0.s8 %v805
        %v807 = vlaneseq
        %v808 = vshrl.u32 %v807, 7
        %v809 = vsub.s32 %v806, %v808
        %v810 = vrot.slane %v796, %v809
        %v811 = vcombine.high %v803, %v803
        %v812 = vcombine.high %v810, %v810
        %v813 = vcombine.high %v392, %v392
        %v815 = vunpack.c.l.s4 1983009808
        %v816 = vunpack.c.0.s8 %v815
        %v817 = vlaneseq
        %v818 = vshrl.u32 %v817, 7
        %v819 = vsub.s32 %v816, %v818
        %v820 = vrot.slane %v392, %v819
        %v822 = vunpack.c.l.s4 1983009808
        %v823 = vunpack.c.0.s8 %v822
        %v824 = vlaneseq
        %v825 = vshrl.u32 %v824, 7
        %v826 = vsub.s32 %v823, %v825
        %v827 = vrot.slane %v813, %v826
        %v828 = vcombine.high %v820, %v820
        %v829 = vcombine.high %v393, %v393
        %v831 = vunpack.c.l.s4 1983009808
        %v832 = vunpack.c.0.s8 %v831
        %v833 = vlaneseq
        %v834 = vshrl.u32 %v833, 7
        %v835 = vsub.s32 %v832, %v834
        %v836 = vrot.slane %v393, %v835
        %v838 = vunpack.c.l.s4 1983009808
        %v839 = vunpack.c.0.s8 %v838
        %v840 = vlaneseq
        %v841 = vshrl.u32 %v840, 7
        %v842 = vsub.s32 %v839, %v841
        %v843 = vrot.slane %v829, %v842
        %v844 = vcombine.high %v836, %v836
        %v845 = vcombine.high %v843, %v843
        %v846 = vcombine.high %v394, %v394
        %v848 = vunpack.c.l.s4 1983009808
        %v849 = vunpack.c.0.s8 %v848
        %v850 = vlaneseq
        %v851 = vshrl.u32 %v850, 7
        %v852 = vsub.s32 %v849, %v851
        %v853 = vrot.slane %v394, %v852
        %v855 = vunpack.c.l.s4 1983009808
        %v856 = vunpack.c.0.s8 %v855
        %v857 = vlaneseq
        %v858 = vshrl.u32 %v857, 7
        %v859 = vsub.s32 %v856, %v858
        %v860 = vrot.slane %v846, %v859
        %v861 = vcombine.high %v853, %v853
        %v862 = vcombine.high %v395, %v395
        %v864 = vunpack.c.l.s4 1983009808
        %v865 = vunpack.c.0.s8 %v864
        %v866 = vlaneseq
        %v867 = vshrl.u32 %v866, 7
        %v868 = vsub.s32 %v865, %v867
        %v869 = vrot.slane %v395, %v868
        %v871 = vunpack.c.l.s4 1983009808
        %v872 = vunpack.c.0.s8 %v871
        %v873 = vlaneseq
        %v874 = vshrl.u32 %v873, 7
        %v875 = vsub.s32 %v872, %v874
        %v876 = vrot.slane %v862, %v875
        %v877 = vcombine.high %v869, %v869
        %v878 = vcombine.high %v876, %v876
        %v879 = vcombine.high %v396, %v396
        %v881 = vunpack.c.l.s4 1983009808
        %v882 = vunpack.c.0.s8 %v881
        %v883 = vlaneseq
        %v884 = vshrl.u32 %v883, 7
        %v885 = vsub.s32 %v882, %v884
        %v886 = vrot.slane %v396, %v885
        %v888 = vunpack.c.l.s4 1983009808
        %v889 = vunpack.c.0.s8 %v888
        %v890 = vlaneseq
        %v891 = vshrl.u32 %v890, 7
        %v892 = vsub.s32 %v889, %v891
        %v893 = vrot.slane %v879, %v892
        %v894 = vcombine.high %v886, %v886
        %v895 = vcombine.high %v464, %v464
        %v896 = vcombine.high %v497, %v497
        %v897 = vcombine.high %v530, %v530
        %v898 = vcombine.high %v563, %v563
        %v899 = vcombine.high %v596, %v596
        %v900 = vcombine.high %v629, %v629
        %v901 = vcombine.high %v662, %v662
        %v902 = vcombine.high %v695, %v695
        %v903 = vcombine.high %v728, %v728
        %v904 = vcombine.high %v761, %v761
        %v905 = vcombine.high %v794, %v794
        %v906 = vcombine.high %v827, %v827
        %v907 = vcombine.high %v860, %v860
        %v908 = vcombine.high %v893, %v893
        %vm909 = vcmask 1040384
        %vm910 = vcmask 1042434
        %vm911 = vmor %vm909, %vm910
        %vm912 = vcmask 1044484
        %vm913 = vmor %vm911, %vm912
        %vm914 = vcmask 1046534
        %vm915 = vmor %vm913, %vm914
        %v916 = vrot.slane %v440, 7
        %v917 = vrot.slane %v916, 2
        %v918 = vrot.slane %v448, 7
        %v919 = vsel %vm915, %v917, %v918
        %v920 = vrot.slane %v918, 2
        %v921 = vrot.slane %v447, 7
        %v922 = vsel %vm915, %v920, %v921
        %v923 = vrot.slane %v921, 2
        %v924 = vrot.slane %v449, 7
        %v925 = vsel %vm915, %v923, %v924
        %v926 = vrot.slane %v924, 2
        %v927 = vrot.slane %v457, 7
        %v928 = vsel %vm915, %v926, %v927
        %v929 = vrot.slane %v927, 2
        %v930 = vrot.slane %v465, 7
        %v931 = vsel %vm915, %v929, %v930
        %v932 = vrot.slane %v930, 2
        %v933 = vrot.slane %v464, 7
        %v934 = vsel %vm915, %v932, %v933
        %v935 = vrot.slane %v933, 2
        %v936 = vrot.slane %v895, 7
        %v937 = vsel %vm915, %v935, %v936
        %v938 = vrot.slane %v473, 7
        %v939 = vrot.slane %v938, 2
        %v940 = vrot.slane %v481, 7
        %v941 = vsel %vm915, %v939, %v940
        %v942 = vrot.slane %v940, 2
        %v943 = vrot.slane %v480, 7
        %v944 = vsel %vm915, %v942, %v943
        %v945 = vrot.slane %v943, 2
        %v946 = vrot.slane %v482, 7
        %v947 = vsel %vm915, %v945, %v946
        %v948 = vrot.slane %v946, 2
        %v949 = vrot.slane %v490, 7
        %v950 = vsel %vm915, %v948, %v949
        %v951 = vrot.slane %v949, 2
        %v952 = vrot.slane %v498, 7
        %v953 = vsel %vm915, %v951, %v952
        %v954 = vrot.slane %v952, 2
        %v955 = vrot.slane %v497, 7
        %v956 = vsel %vm915, %v954, %v955
        %v957 = vrot.slane %v955, 2
        %v958 = vrot.slane %v896, 7
        %v959 = vsel %vm915, %v957, %v958
        %v960 = vrot.slane %v506, 7
        %v961 = vrot.slane %v960, 2
        %v962 = vrot.slane %v514, 7
        %v963 = vsel %vm915, %v961, %v962
        %v964 = vrot.slane %v962, 2
        %v965 = vrot.slane %v513, 7
        %v966 = vsel %vm915, %v964, %v965
        %v967 = vrot.slane %v965, 2
        %v968 = vrot.slane %v515, 7
        %v969 = vsel %vm915, %v967, %v968
        %v970 = vrot.slane %v968, 2
        %v971 = vrot.slane %v523, 7
        %v972 = vsel %vm915, %v970, %v971
        %v973 = vrot.slane %v971, 2
        %v974 = vrot.slane %v531, 7
        %v975 = vsel %vm915, %v973, %v974
        %v976 = vrot.slane %v974, 2
        %v977 = vrot.slane %v530, 7
        %v978 = vsel %vm915, %v976, %v977
        %v979 = vrot.slane %v977, 2
        %v980 = vrot.slane %v897, 7
        %v981 = vsel %vm915, %v979, %v980
        %v982 = vrot.slane %v539, 7
        %v983 = vrot.slane %v982, 2
        %v984 = vrot.slane %v547, 7
        %v985 = vsel %vm915, %v983, %v984
        %v986 = vrot.slane %v984, 2
        %v987 = vrot.slane %v546, 7
        %v988 = vsel %vm915, %v986, %v987
        %v989 = vrot.slane %v987, 2
        %v990 = vrot.slane %v548, 7
        %v991 = vsel %vm915, %v989, %v990
        %v992 = vrot.slane %v990, 2
        %v993 = vrot.slane %v556, 7
        %v994 = vsel %vm915, %v992, %v993
        %v995 = vrot.slane %v993, 2
        %v996 = vrot.slane %v564, 7
        %v997 = vsel %vm915, %v995, %v996
        %v998 = vrot.slane %v996, 2
        %v999 = vrot.slane %v563, 7
        %v1000 = vsel %vm915, %v998, %v999
        %v1001 = vrot.slane %v999, 2
        %v1002 = vrot.slane %v898, 7
        %v1003 = vsel %vm915, %v1001, %v1002
        %v1004 = vrot.slane %v572, 7
        %v1005 = vrot.slane %v1004, 2
        %v1006 = vrot.slane %v580, 7
        %v1007 = vsel %vm915, %v1005, %v1006
        %v1008 = vrot.slane %v1006, 2
        %v1009 = vrot.slane %v579, 7
        %v1010 = vsel %vm915, %v1008, %v1009
        %v1011 = vrot.slane %v1009, 2
        %v1012 = vrot.slane %v581, 7
        %v1013 = vsel %vm915, %v1011, %v1012
        %v1014 = vrot.slane %v1012, 2
        %v1015 = vrot.slane %v589, 7
        %v1016 = vsel %vm915, %v1014, %v1015
        %v1017 = vrot.slane %v1015, 2
        %v1018 = vrot.slane %v597, 7
        %v1019 = vsel %vm915, %v1017, %v1018
        %v1020 = vrot.slane %v1018, 2
        %v1021 = vrot.slane %v596, 7
        %v1022 = vsel %vm915, %v1020, %v1021
        %v1023 = vrot.slane %v1021, 2
        %v1024 = vrot.slane %v899, 7
        %v1025 = vsel %vm915, %v1023, %v1024
        %v1026 = vrot.slane %v605, 7
        %v1027 = vrot.slane %v1026, 2
        %v1028 = vrot.slane %v613, 7
        %v1029 = vsel %vm915, %v1027, %v1028
        %v1030 = vrot.slane %v1028, 2
        %v1031 = vrot.slane %v612, 7
        %v1032 = vsel %vm915, %v1030, %v1031
        %v1033 = vrot.slane %v1031, 2
        %v1034 = vrot.slane %v614, 7
        %v1035 = vsel %vm915, %v1033, %v1034
        %v1036 = vrot.slane %v1034, 2
        %v1037 = vrot.slane %v622, 7
        %v1038 = vsel %vm915, %v1036, %v1037
        %v1039 = vrot.slane %v1037, 2
        %v1040 = vrot.slane %v630, 7
        %v1041 = vsel %vm915, %v1039, %v1040
        %v1042 = vrot.slane %v1040, 2
        %v1043 = vrot.slane %v629, 7
        %v1044 = vsel %vm915, %v1042, %v1043
        %v1045 = vrot.slane %v1043, 2
        %v1046 = vrot.slane %v900, 7
        %v1047 = vsel %vm915, %v1045, %v1046
        %v1048 = vrot.slane %v638, 7
        %v1049 = vrot.slane %v1048, 2
        %v1050 = vrot.slane %v646, 7
        %v1051 = vsel %vm915, %v1049, %v1050
        %v1052 = vrot.slane %v1050, 2
        %v1053 = vrot.slane %v645, 7
        %v1054 = vsel %vm915, %v1052, %v1053
        %v1055 = vrot.slane %v1053, 2
        %v1056 = vrot.slane %v647, 7
        %v1057 = vsel %vm915, %v1055, %v1056
        %v1058 = vrot.slane %v1056, 2
        %v1059 = vrot.slane %v655, 7
        %v1060 = vsel %vm915, %v1058, %v1059
        %v1061 = vrot.slane %v1059, 2
        %v1062 = vrot.slane %v663, 7
        %v1063 = vsel %vm915, %v1061, %v1062
        %v1064 = vrot.slane %v1062, 2
        %v1065 = vrot.slane %v662, 7
        %v1066 = vsel %vm915, %v1064, %v1065
        %v1067 = vrot.slane %v1065, 2
        %v1068 = vrot.slane %v901, 7
        %v1069 = vsel %vm915, %v1067, %v1068
        %v1070 = vrot.slane %v671, 7
        %v1071 = vrot.slane %v1070, 2
        %v1072 = vrot.slane %v679, 7
        %v1073 = vsel %vm915, %v1071, %v1072
        %v1074 = vrot.slane %v1072, 2
        %v1075 = vrot.slane %v678, 7
        %v1076 = vsel %vm915, %v1074, %v1075
        %v1077 = vrot.slane %v1075, 2
        %v1078 = vrot.slane %v680, 7
        %v1079 = vsel %vm915, %v1077, %v1078
        %v1080 = vrot.slane %v1078, 2
        %v1081 = vrot.slane %v688, 7
        %v1082 = vsel %vm915, %v1080, %v1081
        %v1083 = vrot.slane %v1081, 2
        %v1084 = vrot.slane %v696, 7
        %v1085 = vsel %vm915, %v1083, %v1084
        %v1086 = vrot.slane %v1084, 2
        %v1087 = vrot.slane %v695, 7
        %v1088 = vsel %vm915, %v1086, %v1087
        %v1089 = vrot.slane %v1087, 2
        %v1090 = vrot.slane %v902, 7
        %v1091 = vsel %vm915, %v1089, %v1090
        %v1092 = vrot.slane %v704, 7
        %v1093 = vrot.slane %v1092, 2
        %v1094 = vrot.slane %v712, 7
        %v1095 = vsel %vm915, %v1093, %v1094
        %v1096 = vrot.slane %v1094, 2
        %v1097 = vrot.slane %v711, 7
        %v1098 = vsel %vm915, %v1096, %v1097
        %v1099 = vrot.slane %v1097, 2
        %v1100 = vrot.slane %v713, 7
        %v1101 = vsel %vm915, %v1099, %v1100
        %v1102 = vrot.slane %v1100, 2
        %v1103 = vrot.slane %v721, 7
        %v1104 = vsel %vm915, %v1102, %v1103
        %v1105 = vrot.slane %v1103, 2
        %v1106 = vrot.slane %v729, 7
        %v1107 = vsel %vm915, %v1105, %v1106
        %v1108 = vrot.slane %v1106, 2
        %v1109 = vrot.slane %v728, 7
        %v1110 = vsel %vm915, %v1108, %v1109
        %v1111 = vrot.slane %v1109, 2
        %v1112 = vrot.slane %v903, 7
        %v1113 = vsel %vm915, %v1111, %v1112
        %v1114 = vrot.slane %v737, 7
        %v1115 = vrot.slane %v1114, 2
        %v1116 = vrot.slane %v745, 7
        %v1117 = vsel %vm915, %v1115, %v1116
        %v1118 = vrot.slane %v1116, 2
        %v1119 = vrot.slane %v744, 7
        %v1120 = vsel %vm915, %v1118, %v1119
        %v1121 = vrot.slane %v1119, 2
        %v1122 = vrot.slane %v746, 7
        %v1123 = vsel %vm915, %v1121, %v1122
        %v1124 = vrot.slane %v1122, 2
        %v1125 = vrot.slane %v754, 7
        %v1126 = vsel %vm915, %v1124, %v1125
        %v1127 = vrot.slane %v1125, 2
        %v1128 = vrot.slane %v762, 7
        %v1129 = vsel %vm915, %v1127, %v1128
        %v1130 = vrot.slane %v1128, 2
        %v1131 = vrot.slane %v761, 7
        %v1132 = vsel %vm915, %v1130, %v1131
        %v1133 = vrot.slane %v1131, 2
        %v1134 = vrot.slane %v904, 7
        %v1135 = vsel %vm915, %v1133, %v1134
        %v1136 = vrot.slane %v770, 7
        %v1137 = vrot.slane %v1136, 2
        %v1138 = vrot.slane %v778, 7
        %v1139 = vsel %vm915, %v1137, %v1138
        %v1140 = vrot.slane %v1138, 2
        %v1141 = vrot.slane %v777, 7
        %v1142 = vsel %vm915, %v1140, %v1141
        %v1143 = vrot.slane %v1141, 2
        %v1144 = vrot.slane %v779, 7
        %v1145 = vsel %vm915, %v1143, %v1144
        %v1146 = vrot.slane %v1144, 2
        %v1147 = vrot.slane %v787, 7
        %v1148 = vsel %vm915, %v1146, %v1147
        %v1149 = vrot.slane %v1147, 2
        %v1150 = vrot.slane %v795, 7
        %v1151 = vsel %vm915, %v1149, %v1150
        %v1152 = vrot.slane %v1150, 2
        %v1153 = vrot.slane %v794, 7
        %v1154 = vsel %vm915, %v1152, %v1153
        %v1155 = vrot.slane %v1153, 2
        %v1156 = vrot.slane %v905, 7
        %v1157 = vsel %vm915, %v1155, %v1156
        %v1158 = vrot.slane %v803, 7
        %v1159 = vrot.slane %v1158, 2
        %v1160 = vrot.slane %v811, 7
        %v1161 = vsel %vm915, %v1159, %v1160
        %v1162 = vrot.slane %v1160, 2
        %v1163 = vrot.slane %v810, 7
        %v1164 = vsel %vm915, %v1162, %v1163
        %v1165 = vrot.slane %v1163, 2
        %v1166 = vrot.slane %v812, 7
        %v1167 = vsel %vm915, %v1165, %v1166
        %v1168 = vrot.slane %v1166, 2
        %v1169 = vrot.slane %v820, 7
        %v1170 = vsel %vm915, %v1168, %v1169
        %v1171 = vrot.slane %v1169, 2
        %v1172 = vrot.slane %v828, 7
        %v1173 = vsel %vm915, %v1171, %v1172
        %v1174 = vrot.slane %v1172, 2
        %v1175 = vrot.slane %v827, 7
        %v1176 = vsel %vm915, %v1174, %v1175
        %v1177 = vrot.slane %v1175, 2
        %v1178 = vrot.slane %v906, 7
        %v1179 = vsel %vm915, %v1177, %v1178
        %v1180 = vrot.slane %v836, 7
        %v1181 = vrot.slane %v1180, 2
        %v1182 = vrot.slane %v844, 7
        %v1183 = vsel %vm915, %v1181, %v1182
        %v1184 = vrot.slane %v1182, 2
        %v1185 = vrot.slane %v843, 7
        %v1186 = vsel %vm915, %v1184, %v1185
        %v1187 = vrot.slane %v1185, 2
        %v1188 = vrot.slane %v845, 7
        %v1189 = vsel %vm915, %v1187, %v1188
        %v1190 = vrot.slane %v1188, 2
        %v1191 = vrot.slane %v853, 7
        %v1192 = vsel %vm915, %v1190, %v1191
        %v1193 = vrot.slane %v1191, 2
        %v1194 = vrot.slane %v861, 7
        %v1195 = vsel %vm915, %v1193, %v1194
        %v1196 = vrot.slane %v1194, 2
        %v1197 = vrot.slane %v860, 7
        %v1198 = vsel %vm915, %v1196, %v1197
        %v1199 = vrot.slane %v1197, 2
        %v1200 = vrot.slane %v907, 7
        %v1201 = vsel %vm915, %v1199, %v1200
        %v1202 = vrot.slane %v869, 7
        %v1203 = vrot.slane %v1202, 2
        %v1204 = vrot.slane %v877, 7
        %v1205 = vsel %vm915, %v1203, %v1204
        %v1206 = vrot.slane %v1204, 2
        %v1207 = vrot.slane %v876, 7
        %v1208 = vsel %vm915, %v1206, %v1207
        %v1209 = vrot.slane %v1207, 2
        %v1210 = vrot.slane %v878, 7
        %v1211 = vsel %vm915, %v1209, %v1210
        %v1212 = vrot.slane %v1210, 2
        %v1213 = vrot.slane %v886, 7
        %v1214 = vsel %vm915, %v1212, %v1213
        %v1215 = vrot.slane %v1213, 2
        %v1216 = vrot.slane %v894, 7
        %v1217 = vsel %vm915, %v1215, %v1216
        %v1218 = vrot.slane %v1216, 2
        %v1219 = vrot.slane %v893, 7
        %v1220 = vsel %vm915, %v1218, %v1219
        %v1221 = vrot.slane %v1219, 2
        %v1222 = vrot.slane %v908, 7
        %v1223 = vsel %vm915, %v1221, %v1222
        %v1226 = vcombine.high %v397, %v397
        %v1228 = vunpack.c.l.s4 1983009808
        %v1229 = vunpack.c.0.s8 %v1228
        %v1230 = vlaneseq
        %v1231 = vshrl.u32 %v1230, 7
        %v1232 = vsub.s32 %v1229, %v1231
        %v1233 = vrot.slane %v397, %v1232
        %v1235 = vunpack.c.l.s4 1983009808
        %v1236 = vunpack.c.0.s8 %v1235
        %v1237 = vlaneseq
        %v1238 = vshrl.u32 %v1237, 7
        %v1239 = vsub.s32 %v1236, %v1238
        %v1240 = vrot.slane %v1226, %v1239
        %v1241 = vcombine.high %v1233, %v1233
        %v1242 = vcombine.high %v1240, %v1240
        %v1243 = vcombine.high %v398, %v398
        %v1245 = vunpack.c.l.s4 1983009808
        %v1246 = vunpack.c.0.s8 %v1245
        %v1247 = vlaneseq
        %v1248 = vshrl.u32 %v1247, 7
        %v1249 = vsub.s32 %v1246, %v1248
        %v1250 = vrot.slane %v398, %v1249
        %v1252 = vunpack.c.l.s4 1983009808
        %v1253 = vunpack.c.0.s8 %v1252
        %v1254 = vlaneseq
        %v1255 = vshrl.u32 %v1254, 7
        %v1256 = vsub.s32 %v1253, %v1255
        %v1257 = vrot.slane %v1243, %v1256
        %v1258 = vcombine.high %v1250, %v1250
        %v1259 = vcombine.high %v1257, %v1257
        %v1260 = vrot.slane %v1233, 7
        %v1261 = vrot.slane %v1260, 2
        %v1262 = vrot.slane %v1241, 7
        %v1263 = vsel %vm915, %v1261, %v1262
        %v1264 = vrot.slane %v1262, 2
        %v1265 = vrot.slane %v1240, 7
        %v1266 = vsel %vm915, %v1264, %v1265
        %v1267 = vrot.slane %v1265, 2
        %v1268 = vrot.slane %v1242, 7
        %v1269 = vsel %vm915, %v1267, %v1268
        %v1270 = vrot.slane %v1268, 2
        %v1271 = vrot.slane %v1250, 7
        %v1272 = vsel %vm915, %v1270, %v1271
        %v1273 = vrot.slane %v1271, 2
        %v1274 = vrot.slane %v1258, 7
        %v1275 = vsel %vm915, %v1273, %v1274
        %v1276 = vrot.slane %v1274, 2
        %v1277 = vrot.slane %v1257, 7
        %v1278 = vsel %vm915, %v1276, %v1277
        %v1279 = vrot.slane %v1277, 2
        %v1280 = vrot.slane %v1259, 7
        %v1281 = vsel %vm915, %v1279, %v1280
        %v1284 = vcombine.high %v399, %v399
        %v1286 = vunpack.c.l.s4 1983009808
        %v1287 = vunpack.c.0.s8 %v1286
        %v1288 = vlaneseq
        %v1289 = vshrl.u32 %v1288, 7
        %v1290 = vsub.s32 %v1287, %v1289
        %v1291 = vrot.slane %v399, %v1290
        %v1293 = vunpack.c.l.s4 1983009808
        %v1294 = vunpack.c.0.s8 %v1293
        %v1295 = vlaneseq
        %v1296 = vshrl.u32 %v1295, 7
        %v1297 = vsub.s32 %v1294, %v1296
        %v1298 = vrot.slane %v1284, %v1297
        %v1299 = vcombine.high %v1291, %v1291
        %v1300 = vcombine.high %v1298, %v1298
        %v1301 = vcombine.high %v400, %v400
        %v1303 = vunpack.c.l.s4 1983009808
        %v1304 = vunpack.c.0.s8 %v1303
        %v1305 = vlaneseq
        %v1306 = vshrl.u32 %v1305, 7
        %v1307 = vsub.s32 %v1304, %v1306
        %v1308 = vrot.slane %v400, %v1307
        %v1310 = vunpack.c.l.s4 1983009808
        %v1311 = vunpack.c.0.s8 %v1310
        %v1312 = vlaneseq
        %v1313 = vshrl.u32 %v1312, 7
        %v1314 = vsub.s32 %v1311, %v1313
        %v1315 = vrot.slane %v1301, %v1314
        %v1316 = vcombine.high %v1308, %v1308
        %v1317 = vcombine.high %v1315, %v1315
        %v1318 = vrot.slane %v1291, 7
        %v1319 = vrot.slane %v1318, 2
        %v1320 = vrot.slane %v1299, 7
        %v1321 = vsel %vm915, %v1319, %v1320
        %v1322 = vrot.slane %v1320, 2
        %v1323 = vrot.slane %v1298, 7
        %v1324 = vsel %vm915, %v1322, %v1323
        %v1325 = vrot.slane %v1323, 2
        %v1326 = vrot.slane %v1300, 7
        %v1327 = vsel %vm915, %v1325, %v1326
        %v1328 = vrot.slane %v1326, 2
        %v1329 = vrot.slane %v1308, 7
        %v1330 = vsel %vm915, %v1328, %v1329
        %v1331 = vrot.slane %v1329, 2
        %v1332 = vrot.slane %v1316, 7
        %v1333 = vsel %vm915, %v1331, %v1332
        %v1334 = vrot.slane %v1332, 2
        %v1335 = vrot.slane %v1315, 7
        %v1336 = vsel %vm915, %v1334, %v1335
        %v1337 = vrot.slane %v1335, 2
        %v1338 = vrot.slane %v1317, 7
        %v1339 = vsel %vm915, %v1337, %v1338
        %v1340 = vcombine.low %v440, %v448
        %v1341 = vcombine.low %v447, %v449
        %v1343 = vunpack.c.l.s4 1983009808
        %v1344 = vunpack.c.0.s8 %v1343
        %v1345 = vlaneseq
        %v1346 = vshrl.u32 %v1345, 7
        %v1347 = vsub.s32 %v1344, %v1346
        %v1348 = vrot.slane %v1340, %v1347
        %v1350 = vunpack.c.l.s4 1983009808
        %v1351 = vunpack.c.0.s8 %v1350
        %v1352 = vlaneseq
        %v1353 = vshrl.u32 %v1352, 7
        %v1354 = vsub.s32 %v1351, %v1353
        %v1355 = vrot.slane %v1341, %v1354
        %v1356 = vcombine.low %v1348, %v1355
        %v1357 = vcombine.low %v457, %v465
        %v1358 = vcombine.low %v464, %v473
        %v1360 = vunpack.c.l.s4 1983009808
        %v1361 = vunpack.c.0.s8 %v1360
        %v1362 = vlaneseq
        %v1363 = vshrl.u32 %v1362, 7
        %v1364 = vsub.s32 %v1361, %v1363
        %v1365 = vrot.slane %v1357, %v1364
        %v1367 = vunpack.c.l.s4 1983009808
        %v1368 = vunpack.c.0.s8 %v1367
        %v1369 = vlaneseq
        %v1370 = vshrl.u32 %v1369, 7
        %v1371 = vsub.s32 %v1368, %v1370
        %v1372 = vrot.slane %v1358, %v1371
        %v1373 = vcombine.low %v1365, %v1372
        %v1374 = vcombine.low %v481, %v480
        %v1375 = vcombine.low %v482, %v490
        %v1377 = vunpack.c.l.s4 1983009808
        %v1378 = vunpack.c.0.s8 %v1377
        %v1379 = vlaneseq
        %v1380 = vshrl.u32 %v1379, 7
        %v1381 = vsub.s32 %v1378, %v1380
        %v1382 = vrot.slane %v1374, %v1381
        %v1384 = vunpack.c.l.s4 1983009808
        %v1385 = vunpack.c.0.s8 %v1384
        %v1386 = vlaneseq
        %v1387 = vshrl.u32 %v1386, 7
        %v1388 = vsub.s32 %v1385, %v1387
        %v1389 = vrot.slane %v1375, %v1388
        %v1390 = vcombine.low %v1382, %v1389
        %v1391 = vcombine.low %v498, %v497
        %v1392 = vcombine.low %v506, %v514
        %v1394 = vunpack.c.l.s4 1983009808
        %v1395 = vunpack.c.0.s8 %v1394
        %v1396 = vlaneseq
        %v1397 = vshrl.u32 %v1396, 7
        %v1398 = vsub.s32 %v1395, %v1397
        %v1399 = vrot.slane %v1391, %v1398
        %v1401 = vunpack.c.l.s4 1983009808
        %v1402 = vunpack.c.0.s8 %v1401
        %v1403 = vlaneseq
        %v1404 = vshrl.u32 %v1403, 7
        %v1405 = vsub.s32 %v1402, %v1404
        %v1406 = vrot.slane %v1392, %v1405
        %v1407 = vcombine.low %v1399, %v1406
        %v1408 = vcombine.low %v513, %v515
        %v1409 = vcombine.low %v523, %v531
        %v1411 = vunpack.c.l.s4 1983009808
        %v1412 = vunpack.c.0.s8 %v1411
        %v1413 = vlaneseq
        %v1414 = vshrl.u32 %v1413, 7
        %v1415 = vsub.s32 %v1412, %v1414
        %v1416 = vrot.slane %v1408, %v1415
        %v1418 = vunpack.c.l.s4 1983009808
        %v1419 = vunpack.c.0.s8 %v1418
        %v1420 = vlaneseq
        %v1421 = vshrl.u32 %v1420, 7
        %v1422 = vsub.s32 %v1419, %v1421
        %v1423 = vrot.slane %v1409, %v1422
        %v1424 = vcombine.low %v1416, %v1423
        %v1425 = vcombine.low %v530, %v539
        %v1426 = vcombine.low %v547, %v546
        %v1428 = vunpack.c.l.s4 1983009808
        %v1429 = vunpack.c.0.s8 %v1428
        %v1430 = vlaneseq
        %v1431 = vshrl.u32 %v1430, 7
        %v1432 = vsub.s32 %v1429, %v1431
        %v1433 = vrot.slane %v1425, %v1432
        %v1435 = vunpack.c.l.s4 1983009808
        %v1436 = vunpack.c.0.s8 %v1435
        %v1437 = vlaneseq
        %v1438 = vshrl.u32 %v1437, 7
        %v1439 = vsub.s32 %v1436, %v1438
        %v1440 = vrot.slane %v1426, %v1439
        %v1441 = vcombine.low %v1433, %v1440
        %v1442 = vcombine.low %v548, %v556
        %v1443 = vcombine.low %v564, %v563
        %v1445 = vunpack.c.l.s4 1983009808
        %v1446 = vunpack.c.0.s8 %v1445
        %v1447 = vlaneseq
        %v1448 = vshrl.u32 %v1447, 7
        %v1449 = vsub.s32 %v1446, %v1448
        %v1450 = vrot.slane %v1442, %v1449
        %v1452 = vunpack.c.l.s4 1983009808
        %v1453 = vunpack.c.0.s8 %v1452
        %v1454 = vlaneseq
        %v1455 = vshrl.u32 %v1454, 7
        %v1456 = vsub.s32 %v1453, %v1455
        %v1457 = vrot.slane %v1443, %v1456
        %v1458 = vcombine.low %v1450, %v1457
        %v1459 = vcombine.low %v572, %v580
        %v1460 = vcombine.low %v579, %v581
        %v1462 = vunpack.c.l.s4 1983009808
        %v1463 = vunpack.c.0.s8 %v1462
        %v1464 = vlaneseq
        %v1465 = vshrl.u32 %v1464, 7
        %v1466 = vsub.s32 %v1463, %v1465
        %v1467 = vrot.slane %v1459, %v1466
        %v1469 = vunpack.c.l.s4 1983009808
        %v1470 = vunpack.c.0.s8 %v1469
        %v1471 = vlaneseq
        %v1472 = vshrl.u32 %v1471, 7
        %v1473 = vsub.s32 %v1470, %v1472
        %v1474 = vrot.slane %v1460, %v1473
        %v1475 = vcombine.low %v1467, %v1474
        %v1476 = vcombine.low %v589, %v597
        %v1477 = vcombine.low %v596, %v605
        %v1479 = vunpack.c.l.s4 1983009808
        %v1480 = vunpack.c.0.s8 %v1479
        %v1481 = vlaneseq
        %v1482 = vshrl.u32 %v1481, 7
        %v1483 = vsub.s32 %v1480, %v1482
        %v1484 = vrot.slane %v1476, %v1483
        %v1486 = vunpack.c.l.s4 1983009808
        %v1487 = vunpack.c.0.s8 %v1486
        %v1488 = vlaneseq
        %v1489 = vshrl.u32 %v1488, 7
        %v1490 = vsub.s32 %v1487, %v1489
        %v1491 = vrot.slane %v1477, %v1490
        %v1492 = vcombine.low %v1484, %v1491
        %v1493 = vcombine.low %v613, %v612
        %v1494 = vcombine.low %v614, %v622
        %v1496 = vunpack.c.l.s4 1983009808
        %v1497 = vunpack.c.0.s8 %v1496
        %v1498 = vlaneseq
        %v1499 = vshrl.u32 %v1498, 7
        %v1500 = vsub.s32 %v1497, %v1499
        %v1501 = vrot.slane %v1493, %v1500
        %v1503 = vunpack.c.l.s4 1983009808
        %v1504 = vunpack.c.0.s8 %v1503
        %v1505 = vlaneseq
        %v1506 = vshrl.u32 %v1505, 7
        %v1507 = vsub.s32 %v1504, %v1506
        %v1508 = vrot.slane %v1494, %v1507
        %v1509 = vcombine.low %v1501, %v1508
        %v1510 = vcombine.low %v630, %v629
        %v1511 = vcombine.low %v638, %v646
        %v1513 = vunpack.c.l.s4 1983009808
        %v1514 = vunpack.c.0.s8 %v1513
        %v1515 = vlaneseq
        %v1516 = vshrl.u32 %v1515, 7
        %v1517 = vsub.s32 %v1514, %v1516
        %v1518 = vrot.slane %v1510, %v1517
        %v1520 = vunpack.c.l.s4 1983009808
        %v1521 = vunpack.c.0.s8 %v1520
        %v1522 = vlaneseq
        %v1523 = vshrl.u32 %v1522, 7
        %v1524 = vsub.s32 %v1521, %v1523
        %v1525 = vrot.slane %v1511, %v1524
        %v1526 = vcombine.low %v1518, %v1525
        %v1527 = vcombine.low %v645, %v647
        %v1528 = vcombine.low %v655, %v663
        %v1530 = vunpack.c.l.s4 1983009808
        %v1531 = vunpack.c.0.s8 %v1530
        %v1532 = vlaneseq
        %v1533 = vshrl.u32 %v1532, 7
        %v1534 = vsub.s32 %v1531, %v1533
        %v1535 = vrot.slane %v1527, %v1534
        %v1537 = vunpack.c.l.s4 1983009808
        %v1538 = vunpack.c.0.s8 %v1537
        %v1539 = vlaneseq
        %v1540 = vshrl.u32 %v1539, 7
        %v1541 = vsub.s32 %v1538, %v1540
        %v1542 = vrot.slane %v1528, %v1541
        %v1543 = vcombine.low %v1535, %v1542
        %v1544 = vcombine.low %v662, %v671
        %v1545 = vcombine.low %v679, %v678
        %v1547 = vunpack.c.l.s4 1983009808
        %v1548 = vunpack.c.0.s8 %v1547
        %v1549 = vlaneseq
        %v1550 = vshrl.u32 %v1549, 7
        %v1551 = vsub.s32 %v1548, %v1550
        %v1552 = vrot.slane %v1544, %v1551
        %v1554 = vunpack.c.l.s4 1983009808
        %v1555 = vunpack.c.0.s8 %v1554
        %v1556 = vlaneseq
        %v1557 = vshrl.u32 %v1556, 7
        %v1558 = vsub.s32 %v1555, %v1557
        %v1559 = vrot.slane %v1545, %v1558
        %v1560 = vcombine.low %v1552, %v1559
        %v1561 = vcombine.low %v680, %v688
        %v1562 = vcombine.low %v696, %v695
        %v1564 = vunpack.c.l.s4 1983009808
        %v1565 = vunpack.c.0.s8 %v1564
        %v1566 = vlaneseq
        %v1567 = vshrl.u32 %v1566, 7
        %v1568 = vsub.s32 %v1565, %v1567
        %v1569 = vrot.slane %v1561, %v1568
        %v1571 = vunpack.c.l.s4 1983009808
        %v1572 = vunpack.c.0.s8 %v1571
        %v1573 = vlaneseq
        %v1574 = vshrl.u32 %v1573, 7
        %v1575 = vsub.s32 %v1572, %v1574
        %v1576 = vrot.slane %v1562, %v1575
        %v1577 = vcombine.low %v1569, %v1576
        %v1578 = vcombine.low %v704, %v712
        %v1579 = vcombine.low %v711, %v713
        %v1581 = vunpack.c.l.s4 1983009808
        %v1582 = vunpack.c.0.s8 %v1581
        %v1583 = vlaneseq
        %v1584 = vshrl.u32 %v1583, 7
        %v1585 = vsub.s32 %v1582, %v1584
        %v1586 = vrot.slane %v1578, %v1585
        %v1588 = vunpack.c.l.s4 1983009808
        %v1589 = vunpack.c.0.s8 %v1588
        %v1590 = vlaneseq
        %v1591 = vshrl.u32 %v1590, 7
        %v1592 = vsub.s32 %v1589, %v1591
        %v1593 = vrot.slane %v1579, %v1592
        %v1594 = vcombine.low %v1586, %v1593
        %v1595 = vcombine.low %v721, %v729
        %v1596 = vcombine.low %v728, %v737
        %v1598 = vunpack.c.l.s4 1983009808
        %v1599 = vunpack.c.0.s8 %v1598
        %v1600 = vlaneseq
        %v1601 = vshrl.u32 %v1600, 7
        %v1602 = vsub.s32 %v1599, %v1601
        %v1603 = vrot.slane %v1595, %v1602
        %v1605 = vunpack.c.l.s4 1983009808
        %v1606 = vunpack.c.0.s8 %v1605
        %v1607 = vlaneseq
        %v1608 = vshrl.u32 %v1607, 7
        %v1609 = vsub.s32 %v1606, %v1608
        %v1610 = vrot.slane %v1596, %v1609
        %v1611 = vcombine.low %v1603, %v1610
        %v1612 = vcombine.low %v745, %v744
        %v1613 = vcombine.low %v746, %v754
        %v1615 = vunpack.c.l.s4 1983009808
        %v1616 = vunpack.c.0.s8 %v1615
        %v1617 = vlaneseq
        %v1618 = vshrl.u32 %v1617, 7
        %v1619 = vsub.s32 %v1616, %v1618
        %v1620 = vrot.slane %v1612, %v1619
        %v1622 = vunpack.c.l.s4 1983009808
        %v1623 = vunpack.c.0.s8 %v1622
        %v1624 = vlaneseq
        %v1625 = vshrl.u32 %v1624, 7
        %v1626 = vsub.s32 %v1623, %v1625
        %v1627 = vrot.slane %v1613, %v1626
        %v1628 = vcombine.low %v1620, %v1627
        %v1629 = vcombine.low %v762, %v761
        %v1630 = vcombine.low %v770, %v778
        %v1632 = vunpack.c.l.s4 1983009808
        %v1633 = vunpack.c.0.s8 %v1632
        %v1634 = vlaneseq
        %v1635 = vshrl.u32 %v1634, 7
        %v1636 = vsub.s32 %v1633, %v1635
        %v1637 = vrot.slane %v1629, %v1636
        %v1639 = vunpack.c.l.s4 1983009808
        %v1640 = vunpack.c.0.s8 %v1639
        %v1641 = vlaneseq
        %v1642 = vshrl.u32 %v1641, 7
        %v1643 = vsub.s32 %v1640, %v1642
        %v1644 = vrot.slane %v1630, %v1643
        %v1645 = vcombine.low %v1637, %v1644
        %v1646 = vcombine.low %v777, %v779
        %v1647 = vcombine.low %v787, %v795
        %v1649 = vunpack.c.l.s4 1983009808
        %v1650 = vunpack.c.0.s8 %v1649
        %v1651 = vlaneseq
        %v1652 = vshrl.u32 %v1651, 7
        %v1653 = vsub.s32 %v1650, %v1652
        %v1654 = vrot.slane %v1646, %v1653
        %v1656 = vunpack.c.l.s4 1983009808
        %v1657 = vunpack.c.0.s8 %v1656
        %v1658 = vlaneseq
        %v1659 = vshrl.u32 %v1658, 7
        %v1660 = vsub.s32 %v1657, %v1659
        %v1661 = vrot.slane %v1647, %v1660
        %v1662 = vcombine.low %v1654, %v1661
        %v1663 = vcombine.low %v794, %v803
        %v1664 = vcombine.low %v811, %v810
        %v1666 = vunpack.c.l.s4 1983009808
        %v1667 = vunpack.c.0.s8 %v1666
        %v1668 = vlaneseq
        %v1669 = vshrl.u32 %v1668, 7
        %v1670 = vsub.s32 %v1667, %v1669
        %v1671 = vrot.slane %v1663, %v1670
        %v1673 = vunpack.c.l.s4 1983009808
        %v1674 = vunpack.c.0.s8 %v1673
        %v1675 = vlaneseq
        %v1676 = vshrl.u32 %v1675, 7
        %v1677 = vsub.s32 %v1674, %v1676
        %v1678 = vrot.slane %v1664, %v1677
        %v1679 = vcombine.low %v1671, %v1678
        %v1680 = vcombine.low %v812, %v820
        %v1681 = vcombine.low %v828, %v827
        %v1683 = vunpack.c.l.s4 1983009808
        %v1684 = vunpack.c.0.s8 %v1683
        %v1685 = vlaneseq
        %v1686 = vshrl.u32 %v1685, 7
        %v1687 = vsub.s32 %v1684, %v1686
        %v1688 = vrot.slane %v1680, %v1687
        %v1690 = vunpack.c.l.s4 1983009808
        %v1691 = vunpack.c.0.s8 %v1690
        %v1692 = vlaneseq
        %v1693 = vshrl.u32 %v1692, 7
        %v1694 = vsub.s32 %v1691, %v1693
        %v1695 = vrot.slane %v1681, %v1694
        %v1696 = vcombine.low %v1688, %v1695
        %v1697 = vcombine.low %v836, %v844
        %v1698 = vcombine.low %v843, %v845
        %v1700 = vunpack.c.l.s4 1983009808
        %v1701 = vunpack.c.0.s8 %v1700
        %v1702 = vlaneseq
        %v1703 = vshrl.u32 %v1702, 7
        %v1704 = vsub.s32 %v1701, %v1703
        %v1705 = vrot.slane %v1697, %v1704
        %v1707 = vunpack.c.l.s4 1983009808
        %v1708 = vunpack.c.0.s8 %v1707
        %v1709 = vlaneseq
        %v1710 = vshrl.u32 %v1709, 7
        %v1711 = vsub.s32 %v1708, %v1710
        %v1712 = vrot.slane %v1698, %v1711
        %v1713 = vcombine.low %v1705, %v1712
        %v1714 = vcombine.low %v853, %v861
        %v1715 = vcombine.low %v860, %v869
        %v1717 = vunpack.c.l.s4 1983009808
        %v1718 = vunpack.c.0.s8 %v1717
        %v1719 = vlaneseq
        %v1720 = vshrl.u32 %v1719, 7
        %v1721 = vsub.s32 %v1718, %v1720
        %v1722 = vrot.slane %v1714, %v1721
        %v1724 = vunpack.c.l.s4 1983009808
        %v1725 = vunpack.c.0.s8 %v1724
        %v1726 = vlaneseq
        %v1727 = vshrl.u32 %v1726, 7
        %v1728 = vsub.s32 %v1725, %v1727
        %v1729 = vrot.slane %v1715, %v1728
        %v1730 = vcombine.low %v1722, %v1729
        %v1731 = vcombine.low %v877, %v876
        %v1732 = vcombine.low %v878, %v886
        %v1734 = vunpack.c.l.s4 1983009808
        %v1735 = vunpack.c.0.s8 %v1734
        %v1736 = vlaneseq
        %v1737 = vshrl.u32 %v1736, 7
        %v1738 = vsub.s32 %v1735, %v1737
        %v1739 = vrot.slane %v1731, %v1738
        %v1741 = vunpack.c.l.s4 1983009808
        %v1742 = vunpack.c.0.s8 %v1741
        %v1743 = vlaneseq
        %v1744 = vshrl.u32 %v1743, 7
        %v1745 = vsub.s32 %v1742, %v1744
        %v1746 = vrot.slane %v1732, %v1745
        %v1747 = vcombine.low %v1739, %v1746
        %v1748 = vcombine.low %v894, %v893
        %v1750 = vunpack.c.l.s4 1983009808
        %v1751 = vunpack.c.0.s8 %v1750
        %v1752 = vlaneseq
        %v1753 = vshrl.u32 %v1752, 7
        %v1754 = vsub.s32 %v1751, %v1753
        %v1755 = vrot.slane %v1748, %v1754
        %v1781 = vcombine.low %v919, %v922
        %v1782 = vcombine.low %v925, %v928
        %v1784 = vunpack.c.l.s4 1983009808
        %v1785 = vunpack.c.0.s8 %v1784
        %v1786 = vlaneseq
        %v1787 = vshrl.u32 %v1786, 7
        %v1788 = vsub.s32 %v1785, %v1787
        %v1789 = vrot.slane %v1781, %v1788
        %v1791 = vunpack.c.l.s4 1983009808
        %v1792 = vunpack.c.0.s8 %v1791
        %v1793 = vlaneseq
        %v1794 = vshrl.u32 %v1793, 7
        %v1795 = vsub.s32 %v1792, %v1794
        %v1796 = vrot.slane %v1782, %v1795
        %v1797 = vcombine.low %v1789, %v1796
        %v1798 = vcombine.low %v931, %v934
        %v1799 = vcombine.low %v937, %v941
        %v1801 = vunpack.c.l.s4 1983009808
        %v1802 = vunpack.c.0.s8 %v1801
        %v1803 = vlaneseq
        %v1804 = vshrl.u32 %v1803, 7
        %v1805 = vsub.s32 %v1802, %v1804
        %v1806 = vrot.slane %v1798, %v1805
        %v1808 = vunpack.c.l.s4 1983009808
        %v1809 = vunpack.c.0.s8 %v1808
        %v1810 = vlaneseq
        %v1811 = vshrl.u32 %v1810, 7
        %v1812 = vsub.s32 %v1809, %v1811
        %v1813 = vrot.slane %v1799, %v1812
        %v1814 = vcombine.low %v1806, %v1813
        %v1815 = vcombine.low %v944, %v947
        %v1816 = vcombine.low %v950, %v953
        %v1818 = vunpack.c.l.s4 1983009808
        %v1819 = vunpack.c.0.s8 %v1818
        %v1820 = vlaneseq
        %v1821 = vshrl.u32 %v1820, 7
        %v1822 = vsub.s32 %v1819, %v1821
        %v1823 = vrot.slane %v1815, %v1822
        %v1825 = vunpack.c.l.s4 1983009808
        %v1826 = vunpack.c.0.s8 %v1825
        %v1827 = vlaneseq
        %v1828 = vshrl.u32 %v1827, 7
        %v1829 = vsub.s32 %v1826, %v1828
        %v1830 = vrot.slane %v1816, %v1829
        %v1831 = vcombine.low %v1823, %v1830
        %v1832 = vcombine.low %v956, %v959
        %v1833 = vcombine.low %v963, %v966
        %v1835 = vunpack.c.l.s4 1983009808
        %v1836 = vunpack.c.0.s8 %v1835
        %v1837 = vlaneseq
        %v1838 = vshrl.u32 %v1837, 7
        %v1839 = vsub.s32 %v1836, %v1838
        %v1840 = vrot.slane %v1832, %v1839
        %v1842 = vunpack.c.l.s4 1983009808
        %v1843 = vunpack.c.0.s8 %v1842
        %v1844 = vlaneseq
        %v1845 = vshrl.u32 %v1844, 7
        %v1846 = vsub.s32 %v1843, %v1845
        %v1847 = vrot.slane %v1833, %v1846
        %v1848 = vcombine.low %v1840, %v1847
        %v1849 = vcombine.low %v969, %v972
        %v1850 = vcombine.low %v975, %v978
        %v1852 = vunpack.c.l.s4 1983009808
        %v1853 = vunpack.c.0.s8 %v1852
        %v1854 = vlaneseq
        %v1855 = vshrl.u32 %v1854, 7
        %v1856 = vsub.s32 %v1853, %v1855
        %v1857 = vrot.slane %v1849, %v1856
        %v1859 = vunpack.c.l.s4 1983009808
        %v1860 = vunpack.c.0.s8 %v1859
        %v1861 = vlaneseq
        %v1862 = vshrl.u32 %v1861, 7
        %v1863 = vsub.s32 %v1860, %v1862
        %v1864 = vrot.slane %v1850, %v1863
        %v1865 = vcombine.low %v1857, %v1864
        %v1866 = vcombine.low %v981, %v985
        %v1867 = vcombine.low %v988, %v991
        %v1869 = vunpack.c.l.s4 1983009808
        %v1870 = vunpack.c.0.s8 %v1869
        %v1871 = vlaneseq
        %v1872 = vshrl.u32 %v1871, 7
        %v1873 = vsub.s32 %v1870, %v1872
        %v1874 = vrot.slane %v1866, %v1873
        %v1876 = vunpack.c.l.s4 1983009808
        %v1877 = vunpack.c.0.s8 %v1876
        %v1878 = vlaneseq
        %v1879 = vshrl.u32 %v1878, 7
        %v1880 = vsub.s32 %v1877, %v1879
        %v1881 = vrot.slane %v1867, %v1880
        %v1882 = vcombine.low %v1874, %v1881
        %v1883 = vcombine.low %v994, %v997
        %v1884 = vcombine.low %v1000, %v1003
        %v1886 = vunpack.c.l.s4 1983009808
        %v1887 = vunpack.c.0.s8 %v1886
        %v1888 = vlaneseq
        %v1889 = vshrl.u32 %v1888, 7
        %v1890 = vsub.s32 %v1887, %v1889
        %v1891 = vrot.slane %v1883, %v1890
        %v1893 = vunpack.c.l.s4 1983009808
        %v1894 = vunpack.c.0.s8 %v1893
        %v1895 = vlaneseq
        %v1896 = vshrl.u32 %v1895, 7
        %v1897 = vsub.s32 %v1894, %v1896
        %v1898 = vrot.slane %v1884, %v1897
        %v1899 = vcombine.low %v1891, %v1898
        %v1900 = vcombine.low %v1007, %v1010
        %v1901 = vcombine.low %v1013, %v1016
        %v1903 = vunpack.c.l.s4 1983009808
        %v1904 = vunpack.c.0.s8 %v1903
        %v1905 = vlaneseq
        %v1906 = vshrl.u32 %v1905, 7
        %v1907 = vsub.s32 %v1904, %v1906
        %v1908 = vrot.slane %v1900, %v1907
        %v1910 = vunpack.c.l.s4 1983009808
        %v1911 = vunpack.c.0.s8 %v1910
        %v1912 = vlaneseq
        %v1913 = vshrl.u32 %v1912, 7
        %v1914 = vsub.s32 %v1911, %v1913
        %v1915 = vrot.slane %v1901, %v1914
        %v1916 = vcombine.low %v1908, %v1915
        %v1917 = vcombine.low %v1019, %v1022
        %v1918 = vcombine.low %v1025, %v1029
        %v1920 = vunpack.c.l.s4 1983009808
        %v1921 = vunpack.c.0.s8 %v1920
        %v1922 = vlaneseq
        %v1923 = vshrl.u32 %v1922, 7
        %v1924 = vsub.s32 %v1921, %v1923
        %v1925 = vrot.slane %v1917, %v1924
        %v1927 = vunpack.c.l.s4 1983009808
        %v1928 = vunpack.c.0.s8 %v1927
        %v1929 = vlaneseq
        %v1930 = vshrl.u32 %v1929, 7
        %v1931 = vsub.s32 %v1928, %v1930
        %v1932 = vrot.slane %v1918, %v1931
        %v1933 = vcombine.low %v1925, %v1932
        %v1934 = vcombine.low %v1032, %v1035
        %v1935 = vcombine.low %v1038, %v1041
        %v1937 = vunpack.c.l.s4 1983009808
        %v1938 = vunpack.c.0.s8 %v1937
        %v1939 = vlaneseq
        %v1940 = vshrl.u32 %v1939, 7
        %v1941 = vsub.s32 %v1938, %v1940
        %v1942 = vrot.slane %v1934, %v1941
        %v1944 = vunpack.c.l.s4 1983009808
        %v1945 = vunpack.c.0.s8 %v1944
        %v1946 = vlaneseq
        %v1947 = vshrl.u32 %v1946, 7
        %v1948 = vsub.s32 %v1945, %v1947
        %v1949 = vrot.slane %v1935, %v1948
        %v1950 = vcombine.low %v1942, %v1949
        %v1951 = vcombine.low %v1044, %v1047
        %v1952 = vcombine.low %v1051, %v1054
        %v1954 = vunpack.c.l.s4 1983009808
        %v1955 = vunpack.c.0.s8 %v1954
        %v1956 = vlaneseq
        %v1957 = vshrl.u32 %v1956, 7
        %v1958 = vsub.s32 %v1955, %v1957
        %v1959 = vrot.slane %v1951, %v1958
        %v1961 = vunpack.c.l.s4 1983009808
        %v1962 = vunpack.c.0.s8 %v1961
        %v1963 = vlaneseq
        %v1964 = vshrl.u32 %v1963, 7
        %v1965 = vsub.s32 %v1962, %v1964
        %v1966 = vrot.slane %v1952, %v1965
        %v1967 = vcombine.low %v1959, %v1966
        %v1968 = vcombine.low %v1057, %v1060
        %v1969 = vcombine.low %v1063, %v1066
        %v1971 = vunpack.c.l.s4 1983009808
        %v1972 = vunpack.c.0.s8 %v1971
        %v1973 = vlaneseq
        %v1974 = vshrl.u32 %v1973, 7
        %v1975 = vsub.s32 %v1972, %v1974
        %v1976 = vrot.slane %v1968, %v1975
        %v1978 = vunpack.c.l.s4 1983009808
        %v1979 = vunpack.c.0.s8 %v1978
        %v1980 = vlaneseq
        %v1981 = vshrl.u32 %v1980, 7
        %v1982 = vsub.s32 %v1979, %v1981
        %v1983 = vrot.slane %v1969, %v1982
        %v1984 = vcombine.low %v1976, %v1983
        %v1985 = vcombine.low %v1069, %v1073
        %v1986 = vcombine.low %v1076, %v1079
        %v1988 = vunpack.c.l.s4 1983009808
        %v1989 = vunpack.c.0.s8 %v1988
        %v1990 = vlaneseq
        %v1991 = vshrl.u32 %v1990, 7
        %v1992 = vsub.s32 %v1989, %v1991
        %v1993 = vrot.slane %v1985, %v1992
        %v1995 = vunpack.c.l.s4 1983009808
        %v1996 = vunpack.c.0.s8 %v1995
        %v1997 = vlaneseq
        %v1998 = vshrl.u32 %v1997, 7
        %v1999 = vsub.s32 %v1996, %v1998
        %v2000 = vrot.slane %v1986, %v1999
        %v2001 = vcombine.low %v1993, %v2000
        %v2002 = vcombine.low %v1082, %v1085
        %v2003 = vcombine.low %v1088, %v1091
        %v2005 = vunpack.c.l.s4 1983009808
        %v2006 = vunpack.c.0.s8 %v2005
        %v2007 = vlaneseq
        %v2008 = vshrl.u32 %v2007, 7
        %v2009 = vsub.s32 %v2006, %v2008
        %v2010 = vrot.slane %v2002, %v2009
        %v2012 = vunpack.c.l.s4 1983009808
        %v2013 = vunpack.c.0.s8 %v2012
        %v2014 = vlaneseq
        %v2015 = vshrl.u32 %v2014, 7
        %v2016 = vsub.s32 %v2013, %v2015
        %v2017 = vrot.slane %v2003, %v2016
        %v2018 = vcombine.low %v2010, %v2017
        %v2019 = vcombine.low %v1095, %v1098
        %v2020 = vcombine.low %v1101, %v1104
        %v2022 = vunpack.c.l.s4 1983009808
        %v2023 = vunpack.c.0.s8 %v2022
        %v2024 = vlaneseq
        %v2025 = vshrl.u32 %v2024, 7
        %v2026 = vsub.s32 %v2023, %v2025
        %v2027 = vrot.slane %v2019, %v2026
        %v2029 = vunpack.c.l.s4 1983009808
        %v2030 = vunpack.c.0.s8 %v2029
        %v2031 = vlaneseq
        %v2032 = vshrl.u32 %v2031, 7
        %v2033 = vsub.s32 %v2030, %v2032
        %v2034 = vrot.slane %v2020, %v2033
        %v2035 = vcombine.low %v2027, %v2034
        %v2036 = vcombine.low %v1107, %v1110
        %v2037 = vcombine.low %v1113, %v1117
        %v2039 = vunpack.c.l.s4 1983009808
        %v2040 = vunpack.c.0.s8 %v2039
        %v2041 = vlaneseq
        %v2042 = vshrl.u32 %v2041, 7
        %v2043 = vsub.s32 %v2040, %v2042
        %v2044 = vrot.slane %v2036, %v2043
        %v2046 = vunpack.c.l.s4 1983009808
        %v2047 = vunpack.c.0.s8 %v2046
        %v2048 = vlaneseq
        %v2049 = vshrl.u32 %v2048, 7
        %v2050 = vsub.s32 %v2047, %v2049
        %v2051 = vrot.slane %v2037, %v2050
        %v2052 = vcombine.low %v2044, %v2051
        %v2053 = vcombine.low %v1120, %v1123
        %v2054 = vcombine.low %v1126, %v1129
        %v2056 = vunpack.c.l.s4 1983009808
        %v2057 = vunpack.c.0.s8 %v2056
        %v2058 = vlaneseq
        %v2059 = vshrl.u32 %v2058, 7
        %v2060 = vsub.s32 %v2057, %v2059
        %v2061 = vrot.slane %v2053, %v2060
        %v2063 = vunpack.c.l.s4 1983009808
        %v2064 = vunpack.c.0.s8 %v2063
        %v2065 = vlaneseq
        %v2066 = vshrl.u32 %v2065, 7
        %v2067 = vsub.s32 %v2064, %v2066
        %v2068 = vrot.slane %v2054, %v2067
        %v2069 = vcombine.low %v2061, %v2068
        %v2070 = vcombine.low %v1132, %v1135
        %v2071 = vcombine.low %v1139, %v1142
        %v2073 = vunpack.c.l.s4 1983009808
        %v2074 = vunpack.c.0.s8 %v2073
        %v2075 = vlaneseq
        %v2076 = vshrl.u32 %v2075, 7
        %v2077 = vsub.s32 %v2074, %v2076
        %v2078 = vrot.slane %v2070, %v2077
        %v2080 = vunpack.c.l.s4 1983009808
        %v2081 = vunpack.c.0.s8 %v2080
        %v2082 = vlaneseq
        %v2083 = vshrl.u32 %v2082, 7
        %v2084 = vsub.s32 %v2081, %v2083
        %v2085 = vrot.slane %v2071, %v2084
        %v2086 = vcombine.low %v2078, %v2085
        %v2087 = vcombine.low %v1145, %v1148
        %v2088 = vcombine.low %v1151, %v1154
        %v2090 = vunpack.c.l.s4 1983009808
        %v2091 = vunpack.c.0.s8 %v2090
        %v2092 = vlaneseq
        %v2093 = vshrl.u32 %v2092, 7
        %v2094 = vsub.s32 %v2091, %v2093
        %v2095 = vrot.slane %v2087, %v2094
        %v2097 = vunpack.c.l.s4 1983009808
        %v2098 = vunpack.c.0.s8 %v2097
        %v2099 = vlaneseq
        %v2100 = vshrl.u32 %v2099, 7
        %v2101 = vsub.s32 %v2098, %v2100
        %v2102 = vrot.slane %v2088, %v2101
        %v2103 = vcombine.low %v2095, %v2102
        %v2104 = vcombine.low %v1157, %v1161
        %v2105 = vcombine.low %v1164, %v1167
        %v2107 = vunpack.c.l.s4 1983009808
        %v2108 = vunpack.c.0.s8 %v2107
        %v2109 = vlaneseq
        %v2110 = vshrl.u32 %v2109, 7
        %v2111 = vsub.s32 %v2108, %v2110
        %v2112 = vrot.slane %v2104, %v2111
        %v2114 = vunpack.c.l.s4 1983009808
        %v2115 = vunpack.c.0.s8 %v2114
        %v2116 = vlaneseq
        %v2117 = vshrl.u32 %v2116, 7
        %v2118 = vsub.s32 %v2115, %v2117
        %v2119 = vrot.slane %v2105, %v2118
        %v2120 = vcombine.low %v2112, %v2119
        %v2121 = vcombine.low %v1170, %v1173
        %v2122 = vcombine.low %v1176, %v1179
        %v2124 = vunpack.c.l.s4 1983009808
        %v2125 = vunpack.c.0.s8 %v2124
        %v2126 = vlaneseq
        %v2127 = vshrl.u32 %v2126, 7
        %v2128 = vsub.s32 %v2125, %v2127
        %v2129 = vrot.slane %v2121, %v2128
        %v2131 = vunpack.c.l.s4 1983009808
        %v2132 = vunpack.c.0.s8 %v2131
        %v2133 = vlaneseq
        %v2134 = vshrl.u32 %v2133, 7
        %v2135 = vsub.s32 %v2132, %v2134
        %v2136 = vrot.slane %v2122, %v2135
        %v2137 = vcombine.low %v2129, %v2136
        %v2138 = vcombine.low %v1183, %v1186
        %v2139 = vcombine.low %v1189, %v1192
        %v2141 = vunpack.c.l.s4 1983009808
        %v2142 = vunpack.c.0.s8 %v2141
        %v2143 = vlaneseq
        %v2144 = vshrl.u32 %v2143, 7
        %v2145 = vsub.s32 %v2142, %v2144
        %v2146 = vrot.slane %v2138, %v2145
        %v2148 = vunpack.c.l.s4 1983009808
        %v2149 = vunpack.c.0.s8 %v2148
        %v2150 = vlaneseq
        %v2151 = vshrl.u32 %v2150, 7
        %v2152 = vsub.s32 %v2149, %v2151
        %v2153 = vrot.slane %v2139, %v2152
        %v2154 = vcombine.low %v2146, %v2153
        %v2155 = vcombine.low %v1195, %v1198
        %v2156 = vcombine.low %v1201, %v1205
        %v2158 = vunpack.c.l.s4 1983009808
        %v2159 = vunpack.c.0.s8 %v2158
        %v2160 = vlaneseq
        %v2161 = vshrl.u32 %v2160, 7
        %v2162 = vsub.s32 %v2159, %v2161
        %v2163 = vrot.slane %v2155, %v2162
        %v2165 = vunpack.c.l.s4 1983009808
        %v2166 = vunpack.c.0.s8 %v2165
        %v2167 = vlaneseq
        %v2168 = vshrl.u32 %v2167, 7
        %v2169 = vsub.s32 %v2166, %v2168
        %v2170 = vrot.slane %v2156, %v2169
        %v2171 = vcombine.low %v2163, %v2170
        %v2172 = vcombine.low %v1208, %v1211
        %v2173 = vcombine.low %v1214, %v1217
        %v2175 = vunpack.c.l.s4 1983009808
        %v2176 = vunpack.c.0.s8 %v2175
        %v2177 = vlaneseq
        %v2178 = vshrl.u32 %v2177, 7
        %v2179 = vsub.s32 %v2176, %v2178
        %v2180 = vrot.slane %v2172, %v2179
        %v2182 = vunpack.c.l.s4 1983009808
        %v2183 = vunpack.c.0.s8 %v2182
        %v2184 = vlaneseq
        %v2185 = vshrl.u32 %v2184, 7
        %v2186 = vsub.s32 %v2183, %v2185
        %v2187 = vrot.slane %v2173, %v2186
        %v2188 = vcombine.low %v2180, %v2187
        %v2189 = vcombine.low %v1220, %v1223
        %v2191 = vunpack.c.l.s4 1983009808
        %v2192 = vunpack.c.0.s8 %v2191
        %v2193 = vlaneseq
        %v2194 = vshrl.u32 %v2193, 7
        %v2195 = vsub.s32 %v2192, %v2194
        %v2196 = vrot.slane %v2189, %v2195
        %2197 = vrot.lane.b32.xlu0 %v1797, 3
        %v2198 = vpop.permute.xlu0 %2197
        %2199 = vrot.lane.b32.xlu0 %v1814, 3
        %v2200 = vpop.permute.xlu0 %2199
        %2201 = vrot.lane.b32.xlu0 %v1831, 3
        %v2202 = vpop.permute.xlu0 %2201
        %2203 = vrot.lane.b32.xlu0 %v1848, 3
        %v2204 = vpop.permute.xlu0 %2203
        %2205 = vrot.lane.b32.xlu0 %v1865, 3
        %v2206 = vpop.permute.xlu0 %2205
        %2207 = vrot.lane.b32.xlu0 %v1882, 3
        %v2208 = vpop.permute.xlu0 %2207
        %2209 = vrot.lane.b32.xlu0 %v1899, 3
        %v2210 = vpop.permute.xlu0 %2209
        %2211 = vrot.lane.b32.xlu0 %v1916, 3
        %v2212 = vpop.permute.xlu0 %2211
        %2213 = vrot.lane.b32.xlu0 %v1933, 3
        %v2214 = vpop.permute.xlu0 %2213
        %2215 = vrot.lane.b32.xlu0 %v1950, 3
        %v2216 = vpop.permute.xlu0 %2215
        %2217 = vrot.lane.b32.xlu0 %v1967, 3
        %v2218 = vpop.permute.xlu0 %2217
        %2219 = vrot.lane.b32.xlu0 %v1984, 3
        %v2220 = vpop.permute.xlu0 %2219
        %2221 = vrot.lane.b32.xlu0 %v2001, 3
        %v2222 = vpop.permute.xlu0 %2221
        %2223 = vrot.lane.b32.xlu0 %v2018, 3
        %v2224 = vpop.permute.xlu0 %2223
        %2225 = vrot.lane.b32.xlu0 %v2035, 3
        %v2226 = vpop.permute.xlu0 %2225
        %2227 = vrot.lane.b32.xlu0 %v2052, 3
        %v2228 = vpop.permute.xlu0 %2227
        %2229 = vrot.lane.b32.xlu0 %v2069, 3
        %v2230 = vpop.permute.xlu0 %2229
        %2231 = vrot.lane.b32.xlu0 %v2086, 3
        %v2232 = vpop.permute.xlu0 %2231
        %2233 = vrot.lane.b32.xlu0 %v2103, 3
        %v2234 = vpop.permute.xlu0 %2233
        %2235 = vrot.lane.b32.xlu0 %v2120, 3
        %v2236 = vpop.permute.xlu0 %2235
        %2237 = vrot.lane.b32.xlu0 %v2137, 3
        %v2238 = vpop.permute.xlu0 %2237
        %2239 = vrot.lane.b32.xlu0 %v2154, 3
        %v2240 = vpop.permute.xlu0 %2239
        %2241 = vrot.lane.b32.xlu0 %v2171, 3
        %v2242 = vpop.permute.xlu0 %2241
        %2243 = vrot.lane.b32.xlu0 %v2188, 3
        %v2244 = vpop.permute.xlu0 %2243
        %2245 = vrot.lane.b32.xlu0 %v2196, 3
        %v2246 = vpop.permute.xlu0 %2245
        %v2272 = vcombine.low %v448, %v447
        %v2273 = vcombine.low %v449, %v457
        %v2275 = vunpack.c.l.s4 1983009808
        %v2276 = vunpack.c.0.s8 %v2275
        %v2277 = vlaneseq
        %v2278 = vshrl.u32 %v2277, 7
        %v2279 = vsub.s32 %v2276, %v2278
        %v2280 = vrot.slane %v2272, %v2279
        %v2282 = vunpack.c.l.s4 1983009808
        %v2283 = vunpack.c.0.s8 %v2282
        %v2284 = vlaneseq
        %v2285 = vshrl.u32 %v2284, 7
        %v2286 = vsub.s32 %v2283, %v2285
        %v2287 = vrot.slane %v2273, %v2286
        %v2288 = vcombine.low %v2280, %v2287
        %v2289 = vcombine.low %v465, %v464
        %v2290 = vcombine.low %v895, %v481
        %v2292 = vunpack.c.l.s4 1983009808
        %v2293 = vunpack.c.0.s8 %v2292
        %v2294 = vlaneseq
        %v2295 = vshrl.u32 %v2294, 7
        %v2296 = vsub.s32 %v2293, %v2295
        %v2297 = vrot.slane %v2289, %v2296
        %v2299 = vunpack.c.l.s4 1983009808
        %v2300 = vunpack.c.0.s8 %v2299
        %v2301 = vlaneseq
        %v2302 = vshrl.u32 %v2301, 7
        %v2303 = vsub.s32 %v2300, %v2302
        %v2304 = vrot.slane %v2290, %v2303
        %v2305 = vcombine.low %v2297, %v2304
        %v2306 = vcombine.low %v480, %v482
        %v2307 = vcombine.low %v490, %v498
        %v2309 = vunpack.c.l.s4 1983009808
        %v2310 = vunpack.c.0.s8 %v2309
        %v2311 = vlaneseq
        %v2312 = vshrl.u32 %v2311, 7
        %v2313 = vsub.s32 %v2310, %v2312
        %v2314 = vrot.slane %v2306, %v2313
        %v2316 = vunpack.c.l.s4 1983009808
        %v2317 = vunpack.c.0.s8 %v2316
        %v2318 = vlaneseq
        %v2319 = vshrl.u32 %v2318, 7
        %v2320 = vsub.s32 %v2317, %v2319
        %v2321 = vrot.slane %v2307, %v2320
        %v2322 = vcombine.low %v2314, %v2321
        %v2323 = vcombine.low %v497, %v896
        %v2324 = vcombine.low %v514, %v513
        %v2326 = vunpack.c.l.s4 1983009808
        %v2327 = vunpack.c.0.s8 %v2326
        %v2328 = vlaneseq
        %v2329 = vshrl.u32 %v2328, 7
        %v2330 = vsub.s32 %v2327, %v2329
        %v2331 = vrot.slane %v2323, %v2330
        %v2333 = vunpack.c.l.s4 1983009808
        %v2334 = vunpack.c.0.s8 %v2333
        %v2335 = vlaneseq
        %v2336 = vshrl.u32 %v2335, 7
        %v2337 = vsub.s32 %v2334, %v2336
        %v2338 = vrot.slane %v2324, %v2337
        %v2339 = vcombine.low %v2331, %v2338
        %v2340 = vcombine.low %v515, %v523
        %v2341 = vcombine.low %v531, %v530
        %v2343 = vunpack.c.l.s4 1983009808
        %v2344 = vunpack.c.0.s8 %v2343
        %v2345 = vlaneseq
        %v2346 = vshrl.u32 %v2345, 7
        %v2347 = vsub.s32 %v2344, %v2346
        %v2348 = vrot.slane %v2340, %v2347
        %v2350 = vunpack.c.l.s4 1983009808
        %v2351 = vunpack.c.0.s8 %v2350
        %v2352 = vlaneseq
        %v2353 = vshrl.u32 %v2352, 7
        %v2354 = vsub.s32 %v2351, %v2353
        %v2355 = vrot.slane %v2341, %v2354
        %v2356 = vcombine.low %v2348, %v2355
        %v2357 = vcombine.low %v897, %v547
        %v2358 = vcombine.low %v546, %v548
        %v2360 = vunpack.c.l.s4 1983009808
        %v2361 = vunpack.c.0.s8 %v2360
        %v2362 = vlaneseq
        %v2363 = vshrl.u32 %v2362, 7
        %v2364 = vsub.s32 %v2361, %v2363
        %v2365 = vrot.slane %v2357, %v2364
        %v2367 = vunpack.c.l.s4 1983009808
        %v2368 = vunpack.c.0.s8 %v2367
        %v2369 = vlaneseq
        %v2370 = vshrl.u32 %v2369, 7
        %v2371 = vsub.s32 %v2368, %v2370
        %v2372 = vrot.slane %v2358, %v2371
        %v2373 = vcombine.low %v2365, %v2372
        %v2374 = vcombine.low %v556, %v564
        %v2375 = vcombine.low %v563, %v898
        %v2377 = vunpack.c.l.s4 1983009808
        %v2378 = vunpack.c.0.s8 %v2377
        %v2379 = vlaneseq
        %v2380 = vshrl.u32 %v2379, 7
        %v2381 = vsub.s32 %v2378, %v2380
        %v2382 = vrot.slane %v2374, %v2381
        %v2384 = vunpack.c.l.s4 1983009808
        %v2385 = vunpack.c.0.s8 %v2384
        %v2386 = vlaneseq
        %v2387 = vshrl.u32 %v2386, 7
        %v2388 = vsub.s32 %v2385, %v2387
        %v2389 = vrot.slane %v2375, %v2388
        %v2390 = vcombine.low %v2382, %v2389
        %v2391 = vcombine.low %v580, %v579
        %v2392 = vcombine.low %v581, %v589
        %v2394 = vunpack.c.l.s4 1983009808
        %v2395 = vunpack.c.0.s8 %v2394
        %v2396 = vlaneseq
        %v2397 = vshrl.u32 %v2396, 7
        %v2398 = vsub.s32 %v2395, %v2397
        %v2399 = vrot.slane %v2391, %v2398
        %v2401 = vunpack.c.l.s4 1983009808
        %v2402 = vunpack.c.0.s8 %v2401
        %v2403 = vlaneseq
        %v2404 = vshrl.u32 %v2403, 7
        %v2405 = vsub.s32 %v2402, %v2404
        %v2406 = vrot.slane %v2392, %v2405
        %v2407 = vcombine.low %v2399, %v2406
        %v2408 = vcombine.low %v597, %v596
        %v2409 = vcombine.low %v899, %v613
        %v2411 = vunpack.c.l.s4 1983009808
        %v2412 = vunpack.c.0.s8 %v2411
        %v2413 = vlaneseq
        %v2414 = vshrl.u32 %v2413, 7
        %v2415 = vsub.s32 %v2412, %v2414
        %v2416 = vrot.slane %v2408, %v2415
        %v2418 = vunpack.c.l.s4 1983009808
        %v2419 = vunpack.c.0.s8 %v2418
        %v2420 = vlaneseq
        %v2421 = vshrl.u32 %v2420, 7
        %v2422 = vsub.s32 %v2419, %v2421
        %v2423 = vrot.slane %v2409, %v2422
        %v2424 = vcombine.low %v2416, %v2423
        %v2425 = vcombine.low %v612, %v614
        %v2426 = vcombine.low %v622, %v630
        %v2428 = vunpack.c.l.s4 1983009808
        %v2429 = vunpack.c.0.s8 %v2428
        %v2430 = vlaneseq
        %v2431 = vshrl.u32 %v2430, 7
        %v2432 = vsub.s32 %v2429, %v2431
        %v2433 = vrot.slane %v2425, %v2432
        %v2435 = vunpack.c.l.s4 1983009808
        %v2436 = vunpack.c.0.s8 %v2435
        %v2437 = vlaneseq
        %v2438 = vshrl.u32 %v2437, 7
        %v2439 = vsub.s32 %v2436, %v2438
        %v2440 = vrot.slane %v2426, %v2439
        %v2441 = vcombine.low %v2433, %v2440
        %v2442 = vcombine.low %v629, %v900
        %v2443 = vcombine.low %v646, %v645
        %v2445 = vunpack.c.l.s4 1983009808
        %v2446 = vunpack.c.0.s8 %v2445
        %v2447 = vlaneseq
        %v2448 = vshrl.u32 %v2447, 7
        %v2449 = vsub.s32 %v2446, %v2448
        %v2450 = vrot.slane %v2442, %v2449
        %v2452 = vunpack.c.l.s4 1983009808
        %v2453 = vunpack.c.0.s8 %v2452
        %v2454 = vlaneseq
        %v2455 = vshrl.u32 %v2454, 7
        %v2456 = vsub.s32 %v2453, %v2455
        %v2457 = vrot.slane %v2443, %v2456
        %v2458 = vcombine.low %v2450, %v2457
        %v2459 = vcombine.low %v647, %v655
        %v2460 = vcombine.low %v663, %v662
        %v2462 = vunpack.c.l.s4 1983009808
        %v2463 = vunpack.c.0.s8 %v2462
        %v2464 = vlaneseq
        %v2465 = vshrl.u32 %v2464, 7
        %v2466 = vsub.s32 %v2463, %v2465
        %v2467 = vrot.slane %v2459, %v2466
        %v2469 = vunpack.c.l.s4 1983009808
        %v2470 = vunpack.c.0.s8 %v2469
        %v2471 = vlaneseq
        %v2472 = vshrl.u32 %v2471, 7
        %v2473 = vsub.s32 %v2470, %v2472
        %v2474 = vrot.slane %v2460, %v2473
        %v2475 = vcombine.low %v2467, %v2474
        %v2476 = vcombine.low %v901, %v679
        %v2477 = vcombine.low %v678, %v680
        %v2479 = vunpack.c.l.s4 1983009808
        %v2480 = vunpack.c.0.s8 %v2479
        %v2481 = vlaneseq
        %v2482 = vshrl.u32 %v2481, 7
        %v2483 = vsub.s32 %v2480, %v2482
        %v2484 = vrot.slane %v2476, %v2483
        %v2486 = vunpack.c.l.s4 1983009808
        %v2487 = vunpack.c.0.s8 %v2486
        %v2488 = vlaneseq
        %v2489 = vshrl.u32 %v2488, 7
        %v2490 = vsub.s32 %v2487, %v2489
        %v2491 = vrot.slane %v2477, %v2490
        %v2492 = vcombine.low %v2484, %v2491
        %v2493 = vcombine.low %v688, %v696
        %v2494 = vcombine.low %v695, %v902
        %v2496 = vunpack.c.l.s4 1983009808
        %v2497 = vunpack.c.0.s8 %v2496
        %v2498 = vlaneseq
        %v2499 = vshrl.u32 %v2498, 7
        %v2500 = vsub.s32 %v2497, %v2499
        %v2501 = vrot.slane %v2493, %v2500
        %v2503 = vunpack.c.l.s4 1983009808
        %v2504 = vunpack.c.0.s8 %v2503
        %v2505 = vlaneseq
        %v2506 = vshrl.u32 %v2505, 7
        %v2507 = vsub.s32 %v2504, %v2506
        %v2508 = vrot.slane %v2494, %v2507
        %v2509 = vcombine.low %v2501, %v2508
        %v2510 = vcombine.low %v712, %v711
        %v2511 = vcombine.low %v713, %v721
        %v2513 = vunpack.c.l.s4 1983009808
        %v2514 = vunpack.c.0.s8 %v2513
        %v2515 = vlaneseq
        %v2516 = vshrl.u32 %v2515, 7
        %v2517 = vsub.s32 %v2514, %v2516
        %v2518 = vrot.slane %v2510, %v2517
        %v2520 = vunpack.c.l.s4 1983009808
        %v2521 = vunpack.c.0.s8 %v2520
        %v2522 = vlaneseq
        %v2523 = vshrl.u32 %v2522, 7
        %v2524 = vsub.s32 %v2521, %v2523
        %v2525 = vrot.slane %v2511, %v2524
        %v2526 = vcombine.low %v2518, %v2525
        %v2527 = vcombine.low %v729, %v728
        %v2528 = vcombine.low %v903, %v745
        %v2530 = vunpack.c.l.s4 1983009808
        %v2531 = vunpack.c.0.s8 %v2530
        %v2532 = vlaneseq
        %v2533 = vshrl.u32 %v2532, 7
        %v2534 = vsub.s32 %v2531, %v2533
        %v2535 = vrot.slane %v2527, %v2534
        %v2537 = vunpack.c.l.s4 1983009808
        %v2538 = vunpack.c.0.s8 %v2537
        %v2539 = vlaneseq
        %v2540 = vshrl.u32 %v2539, 7
        %v2541 = vsub.s32 %v2538, %v2540
        %v2542 = vrot.slane %v2528, %v2541
        %v2543 = vcombine.low %v2535, %v2542
        %v2544 = vcombine.low %v744, %v746
        %v2545 = vcombine.low %v754, %v762
        %v2547 = vunpack.c.l.s4 1983009808
        %v2548 = vunpack.c.0.s8 %v2547
        %v2549 = vlaneseq
        %v2550 = vshrl.u32 %v2549, 7
        %v2551 = vsub.s32 %v2548, %v2550
        %v2552 = vrot.slane %v2544, %v2551
        %v2554 = vunpack.c.l.s4 1983009808
        %v2555 = vunpack.c.0.s8 %v2554
        %v2556 = vlaneseq
        %v2557 = vshrl.u32 %v2556, 7
        %v2558 = vsub.s32 %v2555, %v2557
        %v2559 = vrot.slane %v2545, %v2558
        %v2560 = vcombine.low %v2552, %v2559
        %v2561 = vcombine.low %v761, %v904
        %v2562 = vcombine.low %v778, %v777
        %v2564 = vunpack.c.l.s4 1983009808
        %v2565 = vunpack.c.0.s8 %v2564
        %v2566 = vlaneseq
        %v2567 = vshrl.u32 %v2566, 7
        %v2568 = vsub.s32 %v2565, %v2567
        %v2569 = vrot.slane %v2561, %v2568
        %v2571 = vunpack.c.l.s4 1983009808
        %v2572 = vunpack.c.0.s8 %v2571
        %v2573 = vlaneseq
        %v2574 = vshrl.u32 %v2573, 7
        %v2575 = vsub.s32 %v2572, %v2574
        %v2576 = vrot.slane %v2562, %v2575
        %v2577 = vcombine.low %v2569, %v2576
        %v2578 = vcombine.low %v779, %v787
        %v2579 = vcombine.low %v795, %v794
        %v2581 = vunpack.c.l.s4 1983009808
        %v2582 = vunpack.c.0.s8 %v2581
        %v2583 = vlaneseq
        %v2584 = vshrl.u32 %v2583, 7
        %v2585 = vsub.s32 %v2582, %v2584
        %v2586 = vrot.slane %v2578, %v2585
        %v2588 = vunpack.c.l.s4 1983009808
        %v2589 = vunpack.c.0.s8 %v2588
        %v2590 = vlaneseq
        %v2591 = vshrl.u32 %v2590, 7
        %v2592 = vsub.s32 %v2589, %v2591
        %v2593 = vrot.slane %v2579, %v2592
        %v2594 = vcombine.low %v2586, %v2593
        %v2595 = vcombine.low %v905, %v811
        %v2596 = vcombine.low %v810, %v812
        %v2598 = vunpack.c.l.s4 1983009808
        %v2599 = vunpack.c.0.s8 %v2598
        %v2600 = vlaneseq
        %v2601 = vshrl.u32 %v2600, 7
        %v2602 = vsub.s32 %v2599, %v2601
        %v2603 = vrot.slane %v2595, %v2602
        %v2605 = vunpack.c.l.s4 1983009808
        %v2606 = vunpack.c.0.s8 %v2605
        %v2607 = vlaneseq
        %v2608 = vshrl.u32 %v2607, 7
        %v2609 = vsub.s32 %v2606, %v2608
        %v2610 = vrot.slane %v2596, %v2609
        %v2611 = vcombine.low %v2603, %v2610
        %v2612 = vcombine.low %v820, %v828
        %v2613 = vcombine.low %v827, %v906
        %v2615 = vunpack.c.l.s4 1983009808
        %v2616 = vunpack.c.0.s8 %v2615
        %v2617 = vlaneseq
        %v2618 = vshrl.u32 %v2617, 7
        %v2619 = vsub.s32 %v2616, %v2618
        %v2620 = vrot.slane %v2612, %v2619
        %v2622 = vunpack.c.l.s4 1983009808
        %v2623 = vunpack.c.0.s8 %v2622
        %v2624 = vlaneseq
        %v2625 = vshrl.u32 %v2624, 7
        %v2626 = vsub.s32 %v2623, %v2625
        %v2627 = vrot.slane %v2613, %v2626
        %v2628 = vcombine.low %v2620, %v2627
        %v2629 = vcombine.low %v844, %v843
        %v2630 = vcombine.low %v845, %v853
        %v2632 = vunpack.c.l.s4 1983009808
        %v2633 = vunpack.c.0.s8 %v2632
        %v2634 = vlaneseq
        %v2635 = vshrl.u32 %v2634, 7
        %v2636 = vsub.s32 %v2633, %v2635
        %v2637 = vrot.slane %v2629, %v2636
        %v2639 = vunpack.c.l.s4 1983009808
        %v2640 = vunpack.c.0.s8 %v2639
        %v2641 = vlaneseq
        %v2642 = vshrl.u32 %v2641, 7
        %v2643 = vsub.s32 %v2640, %v2642
        %v2644 = vrot.slane %v2630, %v2643
        %v2645 = vcombine.low %v2637, %v2644
        %v2646 = vcombine.low %v861, %v860
        %v2647 = vcombine.low %v907, %v877
        %v2649 = vunpack.c.l.s4 1983009808
        %v2650 = vunpack.c.0.s8 %v2649
        %v2651 = vlaneseq
        %v2652 = vshrl.u32 %v2651, 7
        %v2653 = vsub.s32 %v2650, %v2652
        %v2654 = vrot.slane %v2646, %v2653
        %v2656 = vunpack.c.l.s4 1983009808
        %v2657 = vunpack.c.0.s8 %v2656
        %v2658 = vlaneseq
        %v2659 = vshrl.u32 %v2658, 7
        %v2660 = vsub.s32 %v2657, %v2659
        %v2661 = vrot.slane %v2647, %v2660
        %v2662 = vcombine.low %v2654, %v2661
        %v2663 = vcombine.low %v876, %v878
        %v2664 = vcombine.low %v886, %v894
        %v2666 = vunpack.c.l.s4 1983009808
        %v2667 = vunpack.c.0.s8 %v2666
        %v2668 = vlaneseq
        %v2669 = vshrl.u32 %v2668, 7
        %v2670 = vsub.s32 %v2667, %v2669
        %v2671 = vrot.slane %v2663, %v2670
        %v2673 = vunpack.c.l.s4 1983009808
        %v2674 = vunpack.c.0.s8 %v2673
        %v2675 = vlaneseq
        %v2676 = vshrl.u32 %v2675, 7
        %v2677 = vsub.s32 %v2674, %v2676
        %v2678 = vrot.slane %v2664, %v2677
        %v2679 = vcombine.low %v2671, %v2678
        %v2680 = vcombine.low %v893, %v908
        %v2682 = vunpack.c.l.s4 1983009808
        %v2683 = vunpack.c.0.s8 %v2682
        %v2684 = vlaneseq
        %v2685 = vshrl.u32 %v2684, 7
        %v2686 = vsub.s32 %v2683, %v2685
        %v2687 = vrot.slane %v2680, %v2686
        %2688 = vrot.lane.b32.xlu0 %v2288, 6
        %v2689 = vpop.permute.xlu0 %2688
        %2690 = vrot.lane.b32.xlu0 %v2305, 6
        %v2691 = vpop.permute.xlu0 %2690
        %2692 = vrot.lane.b32.xlu0 %v2322, 6
        %v2693 = vpop.permute.xlu0 %2692
        %2694 = vrot.lane.b32.xlu0 %v2339, 6
        %v2695 = vpop.permute.xlu0 %2694
        %2696 = vrot.lane.b32.xlu0 %v2356, 6
        %v2697 = vpop.permute.xlu0 %2696
        %2698 = vrot.lane.b32.xlu0 %v2373, 6
        %v2699 = vpop.permute.xlu0 %2698
        %2700 = vrot.lane.b32.xlu0 %v2390, 6
        %v2701 = vpop.permute.xlu0 %2700
        %2702 = vrot.lane.b32.xlu0 %v2407, 6
        %v2703 = vpop.permute.xlu0 %2702
        %2704 = vrot.lane.b32.xlu0 %v2424, 6
        %v2705 = vpop.permute.xlu0 %2704
        %2706 = vrot.lane.b32.xlu0 %v2441, 6
        %v2707 = vpop.permute.xlu0 %2706
        %2708 = vrot.lane.b32.xlu0 %v2458, 6
        %v2709 = vpop.permute.xlu0 %2708
        %2710 = vrot.lane.b32.xlu0 %v2475, 6
        %v2711 = vpop.permute.xlu0 %2710
        %2712 = vrot.lane.b32.xlu0 %v2492, 6
        %v2713 = vpop.permute.xlu0 %2712
        %2714 = vrot.lane.b32.xlu0 %v2509, 6
        %v2715 = vpop.permute.xlu0 %2714
        %2716 = vrot.lane.b32.xlu0 %v2526, 6
        %v2717 = vpop.permute.xlu0 %2716
        %2718 = vrot.lane.b32.xlu0 %v2543, 6
        %v2719 = vpop.permute.xlu0 %2718
        %2720 = vrot.lane.b32.xlu0 %v2560, 6
        %v2721 = vpop.permute.xlu0 %2720
        %2722 = vrot.lane.b32.xlu0 %v2577, 6
        %v2723 = vpop.permute.xlu0 %2722
        %2724 = vrot.lane.b32.xlu0 %v2594, 6
        %v2725 = vpop.permute.xlu0 %2724
        %2726 = vrot.lane.b32.xlu0 %v2611, 6
        %v2727 = vpop.permute.xlu0 %2726
        %2728 = vrot.lane.b32.xlu0 %v2628, 6
        %v2729 = vpop.permute.xlu0 %2728
        %2730 = vrot.lane.b32.xlu0 %v2645, 6
        %v2731 = vpop.permute.xlu0 %2730
        %2732 = vrot.lane.b32.xlu0 %v2662, 6
        %v2733 = vpop.permute.xlu0 %2732
        %2734 = vrot.lane.b32.xlu0 %v2679, 6
        %v2735 = vpop.permute.xlu0 %2734
        %2736 = vrot.lane.b32.xlu0 %v2687, 6
        %v2737 = vpop.permute.xlu0 %2736
        %v2763 = vcombine.low %v473, %v481
        %v2765 = vunpack.c.l.s4 1983009808
        %v2766 = vunpack.c.0.s8 %v2765
        %v2767 = vlaneseq
        %v2768 = vshrl.u32 %v2767, 7
        %v2769 = vsub.s32 %v2766, %v2768
        %v2770 = vrot.slane %v2763, %v2769
        %v2771 = vcombine.low %v2770, %v2314
        %v2772 = vcombine.low %v497, %v506
        %v2774 = vunpack.c.l.s4 1983009808
        %v2775 = vunpack.c.0.s8 %v2774
        %v2776 = vlaneseq
        %v2777 = vshrl.u32 %v2776, 7
        %v2778 = vsub.s32 %v2775, %v2777
        %v2779 = vrot.slane %v2772, %v2778
        %v2780 = vcombine.low %v2321, %v2779
        %v2781 = vcombine.low %v2338, %v2348
        %v2782 = vcombine.low %v539, %v547
        %v2784 = vunpack.c.l.s4 1983009808
        %v2785 = vunpack.c.0.s8 %v2784
        %v2786 = vlaneseq
        %v2787 = vshrl.u32 %v2786, 7
        %v2788 = vsub.s32 %v2785, %v2787
        %v2789 = vrot.slane %v2782, %v2788
        %v2790 = vcombine.low %v2355, %v2789
        %v2791 = vcombine.low %v2372, %v2382
        %v2792 = vcombine.low %v563, %v572
        %v2794 = vunpack.c.l.s4 1983009808
        %v2795 = vunpack.c.0.s8 %v2794
        %v2796 = vlaneseq
        %v2797 = vshrl.u32 %v2796, 7
        %v2798 = vsub.s32 %v2795, %v2797
        %v2799 = vrot.slane %v2792, %v2798
        %v2800 = vcombine.low %v2799, %v2399
        %v2801 = vcombine.low %v2406, %v2416
        %v2802 = vcombine.low %v605, %v613
        %v2804 = vunpack.c.l.s4 1983009808
        %v2805 = vunpack.c.0.s8 %v2804
        %v2806 = vlaneseq
        %v2807 = vshrl.u32 %v2806, 7
        %v2808 = vsub.s32 %v2805, %v2807
        %v2809 = vrot.slane %v2802, %v2808
        %v2810 = vcombine.low %v2809, %v2433
        %v2811 = vcombine.low %v629, %v638
        %v2813 = vunpack.c.l.s4 1983009808
        %v2814 = vunpack.c.0.s8 %v2813
        %v2815 = vlaneseq
        %v2816 = vshrl.u32 %v2815, 7
        %v2817 = vsub.s32 %v2814, %v2816
        %v2818 = vrot.slane %v2811, %v2817
        %v2819 = vcombine.low %v2440, %v2818
        %v2820 = vcombine.low %v2457, %v2467
        %v2821 = vcombine.low %v671, %v679
        %v2823 = vunpack.c.l.s4 1983009808
        %v2824 = vunpack.c.0.s8 %v2823
        %v2825 = vlaneseq
        %v2826 = vshrl.u32 %v2825, 7
        %v2827 = vsub.s32 %v2824, %v2826
        %v2828 = vrot.slane %v2821, %v2827
        %v2829 = vcombine.low %v2474, %v2828
        %v2830 = vcombine.low %v2491, %v2501
        %v2831 = vcombine.low %v695, %v704
        %v2833 = vunpack.c.l.s4 1983009808
        %v2834 = vunpack.c.0.s8 %v2833
        %v2835 = vlaneseq
        %v2836 = vshrl.u32 %v2835, 7
        %v2837 = vsub.s32 %v2834, %v2836
        %v2838 = vrot.slane %v2831, %v2837
        %v2839 = vcombine.low %v2838, %v2518
        %v2840 = vcombine.low %v2525, %v2535
        %v2841 = vcombine.low %v737, %v745
        %v2843 = vunpack.c.l.s4 1983009808
        %v2844 = vunpack.c.0.s8 %v2843
        %v2845 = vlaneseq
        %v2846 = vshrl.u32 %v2845, 7
        %v2847 = vsub.s32 %v2844, %v2846
        %v2848 = vrot.slane %v2841, %v2847
        %v2849 = vcombine.low %v2848, %v2552
        %v2850 = vcombine.low %v761, %v770
        %v2852 = vunpack.c.l.s4 1983009808
        %v2853 = vunpack.c.0.s8 %v2852
        %v2854 = vlaneseq
        %v2855 = vshrl.u32 %v2854, 7
        %v2856 = vsub.s32 %v2853, %v2855
        %v2857 = vrot.slane %v2850, %v2856
        %v2858 = vcombine.low %v2559, %v2857
        %v2859 = vcombine.low %v2576, %v2586
        %v2860 = vcombine.low %v803, %v811
        %v2862 = vunpack.c.l.s4 1983009808
        %v2863 = vunpack.c.0.s8 %v2862
        %v2864 = vlaneseq
        %v2865 = vshrl.u32 %v2864, 7
        %v2866 = vsub.s32 %v2863, %v2865
        %v2867 = vrot.slane %v2860, %v2866
        %v2868 = vcombine.low %v2593, %v2867
        %v2869 = vcombine.low %v2610, %v2620
        %v2870 = vcombine.low %v827, %v836
        %v2872 = vunpack.c.l.s4 1983009808
        %v2873 = vunpack.c.0.s8 %v2872
        %v2874 = vlaneseq
        %v2875 = vshrl.u32 %v2874, 7
        %v2876 = vsub.s32 %v2873, %v2875
        %v2877 = vrot.slane %v2870, %v2876
        %v2878 = vcombine.low %v2877, %v2637
        %v2879 = vcombine.low %v2644, %v2654
        %v2880 = vcombine.low %v869, %v877
        %v2882 = vunpack.c.l.s4 1983009808
        %v2883 = vunpack.c.0.s8 %v2882
        %v2884 = vlaneseq
        %v2885 = vshrl.u32 %v2884, 7
        %v2886 = vsub.s32 %v2883, %v2885
        %v2887 = vrot.slane %v2880, %v2886
        %v2888 = vcombine.low %v2887, %v2671
        %v2889 = vcombine.low %v893, %v1233
        %v2891 = vunpack.c.l.s4 1983009808
        %v2892 = vunpack.c.0.s8 %v2891
        %v2893 = vlaneseq
        %v2894 = vshrl.u32 %v2893, 7
        %v2895 = vsub.s32 %v2892, %v2894
        %v2896 = vrot.slane %v2889, %v2895
        %v2897 = vcombine.low %v2678, %v2896
        %v2898 = vcombine.low %v1241, %v1240
        %v2899 = vcombine.low %v1242, %v1250
        %v2901 = vunpack.c.l.s4 1983009808
        %v2902 = vunpack.c.0.s8 %v2901
        %v2903 = vlaneseq
        %v2904 = vshrl.u32 %v2903, 7
        %v2905 = vsub.s32 %v2902, %v2904
        %v2906 = vrot.slane %v2898, %v2905
        %v2908 = vunpack.c.l.s4 1983009808
        %v2909 = vunpack.c.0.s8 %v2908
        %v2910 = vlaneseq
        %v2911 = vshrl.u32 %v2910, 7
        %v2912 = vsub.s32 %v2909, %v2911
        %v2913 = vrot.slane %v2899, %v2912
        %v2914 = vcombine.low %v2906, %v2913
        %v2915 = vcombine.low %v1258, %v1257
        %v2917 = vunpack.c.l.s4 1983009808
        %v2918 = vunpack.c.0.s8 %v2917
        %v2919 = vlaneseq
        %v2920 = vshrl.u32 %v2919, 7
        %v2921 = vsub.s32 %v2918, %v2920
        %v2922 = vrot.slane %v2915, %v2921
        %2923 = vrot.lane.b32.xlu0 %v2771, 9
        %v2924 = vpop.permute.xlu0 %2923
        %2925 = vrot.lane.b32.xlu0 %v2780, 9
        %v2926 = vpop.permute.xlu0 %2925
        %2927 = vrot.lane.b32.xlu0 %v2781, 9
        %v2928 = vpop.permute.xlu0 %2927
        %2929 = vrot.lane.b32.xlu0 %v2790, 9
        %v2930 = vpop.permute.xlu0 %2929
        %2931 = vrot.lane.b32.xlu0 %v2791, 9
        %v2932 = vpop.permute.xlu0 %2931
        %2933 = vrot.lane.b32.xlu0 %v2800, 9
        %v2934 = vpop.permute.xlu0 %2933
        %2935 = vrot.lane.b32.xlu0 %v2801, 9
        %v2936 = vpop.permute.xlu0 %2935
        %2937 = vrot.lane.b32.xlu0 %v2810, 9
        %v2938 = vpop.permute.xlu0 %2937
        %2939 = vrot.lane.b32.xlu0 %v2819, 9
        %v2940 = vpop.permute.xlu0 %2939
        %2941 = vrot.lane.b32.xlu0 %v2820, 9
        %v2942 = vpop.permute.xlu0 %2941
        %2943 = vrot.lane.b32.xlu0 %v2829, 9
        %v2944 = vpop.permute.xlu0 %2943
        %2945 = vrot.lane.b32.xlu0 %v2830, 9
        %v2946 = vpop.permute.xlu0 %2945
        %2947 = vrot.lane.b32.xlu0 %v2839, 9
        %v2948 = vpop.permute.xlu0 %2947
        %2949 = vrot.lane.b32.xlu0 %v2840, 9
        %v2950 = vpop.permute.xlu0 %2949
        %2951 = vrot.lane.b32.xlu0 %v2849, 9
        %v2952 = vpop.permute.xlu0 %2951
        %2953 = vrot.lane.b32.xlu0 %v2858, 9
        %v2954 = vpop.permute.xlu0 %2953
        %2955 = vrot.lane.b32.xlu0 %v2859, 9
        %v2956 = vpop.permute.xlu0 %2955
        %2957 = vrot.lane.b32.xlu0 %v2868, 9
        %v2958 = vpop.permute.xlu0 %2957
        %2959 = vrot.lane.b32.xlu0 %v2869, 9
        %v2960 = vpop.permute.xlu0 %2959
        %2961 = vrot.lane.b32.xlu0 %v2878, 9
        %v2962 = vpop.permute.xlu0 %2961
        %2963 = vrot.lane.b32.xlu0 %v2879, 9
        %v2964 = vpop.permute.xlu0 %2963
        %2965 = vrot.lane.b32.xlu0 %v2888, 9
        %v2966 = vpop.permute.xlu0 %2965
        %2967 = vrot.lane.b32.xlu0 %v2897, 9
        %v2968 = vpop.permute.xlu0 %2967
        %2969 = vrot.lane.b32.xlu0 %v2914, 9
        %v2970 = vpop.permute.xlu0 %2969
        %2971 = vrot.lane.b32.xlu0 %v2922, 9
        %v2972 = vpop.permute.xlu0 %2971
        %v2998 = vcombine.low %v941, %v944
        %v2999 = vcombine.low %v947, %v950
        %v3001 = vunpack.c.l.s4 1983009808
        %v3002 = vunpack.c.0.s8 %v3001
        %v3003 = vlaneseq
        %v3004 = vshrl.u32 %v3003, 7
        %v3005 = vsub.s32 %v3002, %v3004
        %v3006 = vrot.slane %v2998, %v3005
        %v3008 = vunpack.c.l.s4 1983009808
        %v3009 = vunpack.c.0.s8 %v3008
        %v3010 = vlaneseq
        %v3011 = vshrl.u32 %v3010, 7
        %v3012 = vsub.s32 %v3009, %v3011
        %v3013 = vrot.slane %v2999, %v3012
        %v3014 = vcombine.low %v3006, %v3013
        %v3015 = vcombine.low %v953, %v956
        %v3016 = vcombine.low %v959, %v963
        %v3018 = vunpack.c.l.s4 1983009808
        %v3019 = vunpack.c.0.s8 %v3018
        %v3020 = vlaneseq
        %v3021 = vshrl.u32 %v3020, 7
        %v3022 = vsub.s32 %v3019, %v3021
        %v3023 = vrot.slane %v3015, %v3022
        %v3025 = vunpack.c.l.s4 1983009808
        %v3026 = vunpack.c.0.s8 %v3025
        %v3027 = vlaneseq
        %v3028 = vshrl.u32 %v3027, 7
        %v3029 = vsub.s32 %v3026, %v3028
        %v3030 = vrot.slane %v3016, %v3029
        %v3031 = vcombine.low %v3023, %v3030
        %v3032 = vcombine.low %v966, %v969
        %v3033 = vcombine.low %v972, %v975
        %v3035 = vunpack.c.l.s4 1983009808
        %v3036 = vunpack.c.0.s8 %v3035
        %v3037 = vlaneseq
        %v3038 = vshrl.u32 %v3037, 7
        %v3039 = vsub.s32 %v3036, %v3038
        %v3040 = vrot.slane %v3032, %v3039
        %v3042 = vunpack.c.l.s4 1983009808
        %v3043 = vunpack.c.0.s8 %v3042
        %v3044 = vlaneseq
        %v3045 = vshrl.u32 %v3044, 7
        %v3046 = vsub.s32 %v3043, %v3045
        %v3047 = vrot.slane %v3033, %v3046
        %v3048 = vcombine.low %v3040, %v3047
        %v3049 = vcombine.low %v978, %v981
        %v3050 = vcombine.low %v985, %v988
        %v3052 = vunpack.c.l.s4 1983009808
        %v3053 = vunpack.c.0.s8 %v3052
        %v3054 = vlaneseq
        %v3055 = vshrl.u32 %v3054, 7
        %v3056 = vsub.s32 %v3053, %v3055
        %v3057 = vrot.slane %v3049, %v3056
        %v3059 = vunpack.c.l.s4 1983009808
        %v3060 = vunpack.c.0.s8 %v3059
        %v3061 = vlaneseq
        %v3062 = vshrl.u32 %v3061, 7
        %v3063 = vsub.s32 %v3060, %v3062
        %v3064 = vrot.slane %v3050, %v3063
        %v3065 = vcombine.low %v3057, %v3064
        %v3066 = vcombine.low %v991, %v994
        %v3067 = vcombine.low %v997, %v1000
        %v3069 = vunpack.c.l.s4 1983009808
        %v3070 = vunpack.c.0.s8 %v3069
        %v3071 = vlaneseq
        %v3072 = vshrl.u32 %v3071, 7
        %v3073 = vsub.s32 %v3070, %v3072
        %v3074 = vrot.slane %v3066, %v3073
        %v3076 = vunpack.c.l.s4 1983009808
        %v3077 = vunpack.c.0.s8 %v3076
        %v3078 = vlaneseq
        %v3079 = vshrl.u32 %v3078, 7
        %v3080 = vsub.s32 %v3077, %v3079
        %v3081 = vrot.slane %v3067, %v3080
        %v3082 = vcombine.low %v3074, %v3081
        %v3083 = vcombine.low %v1003, %v1007
        %v3084 = vcombine.low %v1010, %v1013
        %v3086 = vunpack.c.l.s4 1983009808
        %v3087 = vunpack.c.0.s8 %v3086
        %v3088 = vlaneseq
        %v3089 = vshrl.u32 %v3088, 7
        %v3090 = vsub.s32 %v3087, %v3089
        %v3091 = vrot.slane %v3083, %v3090
        %v3093 = vunpack.c.l.s4 1983009808
        %v3094 = vunpack.c.0.s8 %v3093
        %v3095 = vlaneseq
        %v3096 = vshrl.u32 %v3095, 7
        %v3097 = vsub.s32 %v3094, %v3096
        %v3098 = vrot.slane %v3084, %v3097
        %v3099 = vcombine.low %v3091, %v3098
        %v3100 = vcombine.low %v1016, %v1019
        %v3101 = vcombine.low %v1022, %v1025
        %v3103 = vunpack.c.l.s4 1983009808
        %v3104 = vunpack.c.0.s8 %v3103
        %v3105 = vlaneseq
        %v3106 = vshrl.u32 %v3105, 7
        %v3107 = vsub.s32 %v3104, %v3106
        %v3108 = vrot.slane %v3100, %v3107
        %v3110 = vunpack.c.l.s4 1983009808
        %v3111 = vunpack.c.0.s8 %v3110
        %v3112 = vlaneseq
        %v3113 = vshrl.u32 %v3112, 7
        %v3114 = vsub.s32 %v3111, %v3113
        %v3115 = vrot.slane %v3101, %v3114
        %v3116 = vcombine.low %v3108, %v3115
        %v3117 = vcombine.low %v1029, %v1032
        %v3118 = vcombine.low %v1035, %v1038
        %v3120 = vunpack.c.l.s4 1983009808
        %v3121 = vunpack.c.0.s8 %v3120
        %v3122 = vlaneseq
        %v3123 = vshrl.u32 %v3122, 7
        %v3124 = vsub.s32 %v3121, %v3123
        %v3125 = vrot.slane %v3117, %v3124
        %v3127 = vunpack.c.l.s4 1983009808
        %v3128 = vunpack.c.0.s8 %v3127
        %v3129 = vlaneseq
        %v3130 = vshrl.u32 %v3129, 7
        %v3131 = vsub.s32 %v3128, %v3130
        %v3132 = vrot.slane %v3118, %v3131
        %v3133 = vcombine.low %v3125, %v3132
        %v3134 = vcombine.low %v1041, %v1044
        %v3135 = vcombine.low %v1047, %v1051
        %v3137 = vunpack.c.l.s4 1983009808
        %v3138 = vunpack.c.0.s8 %v3137
        %v3139 = vlaneseq
        %v3140 = vshrl.u32 %v3139, 7
        %v3141 = vsub.s32 %v3138, %v3140
        %v3142 = vrot.slane %v3134, %v3141
        %v3144 = vunpack.c.l.s4 1983009808
        %v3145 = vunpack.c.0.s8 %v3144
        %v3146 = vlaneseq
        %v3147 = vshrl.u32 %v3146, 7
        %v3148 = vsub.s32 %v3145, %v3147
        %v3149 = vrot.slane %v3135, %v3148
        %v3150 = vcombine.low %v3142, %v3149
        %v3151 = vcombine.low %v1054, %v1057
        %v3152 = vcombine.low %v1060, %v1063
        %v3154 = vunpack.c.l.s4 1983009808
        %v3155 = vunpack.c.0.s8 %v3154
        %v3156 = vlaneseq
        %v3157 = vshrl.u32 %v3156, 7
        %v3158 = vsub.s32 %v3155, %v3157
        %v3159 = vrot.slane %v3151, %v3158
        %v3161 = vunpack.c.l.s4 1983009808
        %v3162 = vunpack.c.0.s8 %v3161
        %v3163 = vlaneseq
        %v3164 = vshrl.u32 %v3163, 7
        %v3165 = vsub.s32 %v3162, %v3164
        %v3166 = vrot.slane %v3152, %v3165
        %v3167 = vcombine.low %v3159, %v3166
        %v3168 = vcombine.low %v1066, %v1069
        %v3169 = vcombine.low %v1073, %v1076
        %v3171 = vunpack.c.l.s4 1983009808
        %v3172 = vunpack.c.0.s8 %v3171
        %v3173 = vlaneseq
        %v3174 = vshrl.u32 %v3173, 7
        %v3175 = vsub.s32 %v3172, %v3174
        %v3176 = vrot.slane %v3168, %v3175
        %v3178 = vunpack.c.l.s4 1983009808
        %v3179 = vunpack.c.0.s8 %v3178
        %v3180 = vlaneseq
        %v3181 = vshrl.u32 %v3180, 7
        %v3182 = vsub.s32 %v3179, %v3181
        %v3183 = vrot.slane %v3169, %v3182
        %v3184 = vcombine.low %v3176, %v3183
        %v3185 = vcombine.low %v1079, %v1082
        %v3186 = vcombine.low %v1085, %v1088
        %v3188 = vunpack.c.l.s4 1983009808
        %v3189 = vunpack.c.0.s8 %v3188
        %v3190 = vlaneseq
        %v3191 = vshrl.u32 %v3190, 7
        %v3192 = vsub.s32 %v3189, %v3191
        %v3193 = vrot.slane %v3185, %v3192
        %v3195 = vunpack.c.l.s4 1983009808
        %v3196 = vunpack.c.0.s8 %v3195
        %v3197 = vlaneseq
        %v3198 = vshrl.u32 %v3197, 7
        %v3199 = vsub.s32 %v3196, %v3198
        %v3200 = vrot.slane %v3186, %v3199
        %v3201 = vcombine.low %v3193, %v3200
        %v3202 = vcombine.low %v1091, %v1095
        %v3203 = vcombine.low %v1098, %v1101
        %v3205 = vunpack.c.l.s4 1983009808
        %v3206 = vunpack.c.0.s8 %v3205
        %v3207 = vlaneseq
        %v3208 = vshrl.u32 %v3207, 7
        %v3209 = vsub.s32 %v3206, %v3208
        %v3210 = vrot.slane %v3202, %v3209
        %v3212 = vunpack.c.l.s4 1983009808
        %v3213 = vunpack.c.0.s8 %v3212
        %v3214 = vlaneseq
        %v3215 = vshrl.u32 %v3214, 7
        %v3216 = vsub.s32 %v3213, %v3215
        %v3217 = vrot.slane %v3203, %v3216
        %v3218 = vcombine.low %v3210, %v3217
        %v3219 = vcombine.low %v1104, %v1107
        %v3220 = vcombine.low %v1110, %v1113
        %v3222 = vunpack.c.l.s4 1983009808
        %v3223 = vunpack.c.0.s8 %v3222
        %v3224 = vlaneseq
        %v3225 = vshrl.u32 %v3224, 7
        %v3226 = vsub.s32 %v3223, %v3225
        %v3227 = vrot.slane %v3219, %v3226
        %v3229 = vunpack.c.l.s4 1983009808
        %v3230 = vunpack.c.0.s8 %v3229
        %v3231 = vlaneseq
        %v3232 = vshrl.u32 %v3231, 7
        %v3233 = vsub.s32 %v3230, %v3232
        %v3234 = vrot.slane %v3220, %v3233
        %v3235 = vcombine.low %v3227, %v3234
        %v3236 = vcombine.low %v1117, %v1120
        %v3237 = vcombine.low %v1123, %v1126
        %v3239 = vunpack.c.l.s4 1983009808
        %v3240 = vunpack.c.0.s8 %v3239
        %v3241 = vlaneseq
        %v3242 = vshrl.u32 %v3241, 7
        %v3243 = vsub.s32 %v3240, %v3242
        %v3244 = vrot.slane %v3236, %v3243
        %v3246 = vunpack.c.l.s4 1983009808
        %v3247 = vunpack.c.0.s8 %v3246
        %v3248 = vlaneseq
        %v3249 = vshrl.u32 %v3248, 7
        %v3250 = vsub.s32 %v3247, %v3249
        %v3251 = vrot.slane %v3237, %v3250
        %v3252 = vcombine.low %v3244, %v3251
        %v3253 = vcombine.low %v1129, %v1132
        %v3254 = vcombine.low %v1135, %v1139
        %v3256 = vunpack.c.l.s4 1983009808
        %v3257 = vunpack.c.0.s8 %v3256
        %v3258 = vlaneseq
        %v3259 = vshrl.u32 %v3258, 7
        %v3260 = vsub.s32 %v3257, %v3259
        %v3261 = vrot.slane %v3253, %v3260
        %v3263 = vunpack.c.l.s4 1983009808
        %v3264 = vunpack.c.0.s8 %v3263
        %v3265 = vlaneseq
        %v3266 = vshrl.u32 %v3265, 7
        %v3267 = vsub.s32 %v3264, %v3266
        %v3268 = vrot.slane %v3254, %v3267
        %v3269 = vcombine.low %v3261, %v3268
        %v3270 = vcombine.low %v1142, %v1145
        %v3271 = vcombine.low %v1148, %v1151
        %v3273 = vunpack.c.l.s4 1983009808
        %v3274 = vunpack.c.0.s8 %v3273
        %v3275 = vlaneseq
        %v3276 = vshrl.u32 %v3275, 7
        %v3277 = vsub.s32 %v3274, %v3276
        %v3278 = vrot.slane %v3270, %v3277
        %v3280 = vunpack.c.l.s4 1983009808
        %v3281 = vunpack.c.0.s8 %v3280
        %v3282 = vlaneseq
        %v3283 = vshrl.u32 %v3282, 7
        %v3284 = vsub.s32 %v3281, %v3283
        %v3285 = vrot.slane %v3271, %v3284
        %v3286 = vcombine.low %v3278, %v3285
        %v3287 = vcombine.low %v1154, %v1157
        %v3288 = vcombine.low %v1161, %v1164
        %v3290 = vunpack.c.l.s4 1983009808
        %v3291 = vunpack.c.0.s8 %v3290
        %v3292 = vlaneseq
        %v3293 = vshrl.u32 %v3292, 7
        %v3294 = vsub.s32 %v3291, %v3293
        %v3295 = vrot.slane %v3287, %v3294
        %v3297 = vunpack.c.l.s4 1983009808
        %v3298 = vunpack.c.0.s8 %v3297
        %v3299 = vlaneseq
        %v3300 = vshrl.u32 %v3299, 7
        %v3301 = vsub.s32 %v3298, %v3300
        %v3302 = vrot.slane %v3288, %v3301
        %v3303 = vcombine.low %v3295, %v3302
        %v3304 = vcombine.low %v1167, %v1170
        %v3305 = vcombine.low %v1173, %v1176
        %v3307 = vunpack.c.l.s4 1983009808
        %v3308 = vunpack.c.0.s8 %v3307
        %v3309 = vlaneseq
        %v3310 = vshrl.u32 %v3309, 7
        %v3311 = vsub.s32 %v3308, %v3310
        %v3312 = vrot.slane %v3304, %v3311
        %v3314 = vunpack.c.l.s4 1983009808
        %v3315 = vunpack.c.0.s8 %v3314
        %v3316 = vlaneseq
        %v3317 = vshrl.u32 %v3316, 7
        %v3318 = vsub.s32 %v3315, %v3317
        %v3319 = vrot.slane %v3305, %v3318
        %v3320 = vcombine.low %v3312, %v3319
        %v3321 = vcombine.low %v1179, %v1183
        %v3322 = vcombine.low %v1186, %v1189
        %v3324 = vunpack.c.l.s4 1983009808
        %v3325 = vunpack.c.0.s8 %v3324
        %v3326 = vlaneseq
        %v3327 = vshrl.u32 %v3326, 7
        %v3328 = vsub.s32 %v3325, %v3327
        %v3329 = vrot.slane %v3321, %v3328
        %v3331 = vunpack.c.l.s4 1983009808
        %v3332 = vunpack.c.0.s8 %v3331
        %v3333 = vlaneseq
        %v3334 = vshrl.u32 %v3333, 7
        %v3335 = vsub.s32 %v3332, %v3334
        %v3336 = vrot.slane %v3322, %v3335
        %v3337 = vcombine.low %v3329, %v3336
        %v3338 = vcombine.low %v1192, %v1195
        %v3339 = vcombine.low %v1198, %v1201
        %v3341 = vunpack.c.l.s4 1983009808
        %v3342 = vunpack.c.0.s8 %v3341
        %v3343 = vlaneseq
        %v3344 = vshrl.u32 %v3343, 7
        %v3345 = vsub.s32 %v3342, %v3344
        %v3346 = vrot.slane %v3338, %v3345
        %v3348 = vunpack.c.l.s4 1983009808
        %v3349 = vunpack.c.0.s8 %v3348
        %v3350 = vlaneseq
        %v3351 = vshrl.u32 %v3350, 7
        %v3352 = vsub.s32 %v3349, %v3351
        %v3353 = vrot.slane %v3339, %v3352
        %v3354 = vcombine.low %v3346, %v3353
        %v3355 = vcombine.low %v1205, %v1208
        %v3356 = vcombine.low %v1211, %v1214
        %v3358 = vunpack.c.l.s4 1983009808
        %v3359 = vunpack.c.0.s8 %v3358
        %v3360 = vlaneseq
        %v3361 = vshrl.u32 %v3360, 7
        %v3362 = vsub.s32 %v3359, %v3361
        %v3363 = vrot.slane %v3355, %v3362
        %v3365 = vunpack.c.l.s4 1983009808
        %v3366 = vunpack.c.0.s8 %v3365
        %v3367 = vlaneseq
        %v3368 = vshrl.u32 %v3367, 7
        %v3369 = vsub.s32 %v3366, %v3368
        %v3370 = vrot.slane %v3356, %v3369
        %v3371 = vcombine.low %v3363, %v3370
        %v3372 = vcombine.low %v1217, %v1220
        %v3373 = vcombine.low %v1223, %v1263
        %v3375 = vunpack.c.l.s4 1983009808
        %v3376 = vunpack.c.0.s8 %v3375
        %v3377 = vlaneseq
        %v3378 = vshrl.u32 %v3377, 7
        %v3379 = vsub.s32 %v3376, %v3378
        %v3380 = vrot.slane %v3372, %v3379
        %v3382 = vunpack.c.l.s4 1983009808
        %v3383 = vunpack.c.0.s8 %v3382
        %v3384 = vlaneseq
        %v3385 = vshrl.u32 %v3384, 7
        %v3386 = vsub.s32 %v3383, %v3385
        %v3387 = vrot.slane %v3373, %v3386
        %v3388 = vcombine.low %v3380, %v3387
        %v3389 = vcombine.low %v1266, %v1269
        %v3390 = vcombine.low %v1272, %v1275
        %v3392 = vunpack.c.l.s4 1983009808
        %v3393 = vunpack.c.0.s8 %v3392
        %v3394 = vlaneseq
        %v3395 = vshrl.u32 %v3394, 7
        %v3396 = vsub.s32 %v3393, %v3395
        %v3397 = vrot.slane %v3389, %v3396
        %v3399 = vunpack.c.l.s4 1983009808
        %v3400 = vunpack.c.0.s8 %v3399
        %v3401 = vlaneseq
        %v3402 = vshrl.u32 %v3401, 7
        %v3403 = vsub.s32 %v3400, %v3402
        %v3404 = vrot.slane %v3390, %v3403
        %v3405 = vcombine.low %v3397, %v3404
        %v3406 = vcombine.low %v1278, %v1281
        %v3408 = vunpack.c.l.s4 1983009808
        %v3409 = vunpack.c.0.s8 %v3408
        %v3410 = vlaneseq
        %v3411 = vshrl.u32 %v3410, 7
        %v3412 = vsub.s32 %v3409, %v3411
        %v3413 = vrot.slane %v3406, %v3412
        %3414 = vrot.lane.b32.xlu0 %v3014, 12
        %v3415 = vpop.permute.xlu0 %3414
        %3416 = vrot.lane.b32.xlu0 %v3031, 12
        %v3417 = vpop.permute.xlu0 %3416
        %3418 = vrot.lane.b32.xlu0 %v3048, 12
        %v3419 = vpop.permute.xlu0 %3418
        %3420 = vrot.lane.b32.xlu0 %v3065, 12
        %v3421 = vpop.permute.xlu0 %3420
        %3422 = vrot.lane.b32.xlu0 %v3082, 12
        %v3423 = vpop.permute.xlu0 %3422
        %3424 = vrot.lane.b32.xlu0 %v3099, 12
        %v3425 = vpop.permute.xlu0 %3424
        %3426 = vrot.lane.b32.xlu0 %v3116, 12
        %v3427 = vpop.permute.xlu0 %3426
        %3428 = vrot.lane.b32.xlu0 %v3133, 12
        %v3429 = vpop.permute.xlu0 %3428
        %3430 = vrot.lane.b32.xlu0 %v3150, 12
        %v3431 = vpop.permute.xlu0 %3430
        %3432 = vrot.lane.b32.xlu0 %v3167, 12
        %v3433 = vpop.permute.xlu0 %3432
        %3434 = vrot.lane.b32.xlu0 %v3184, 12
        %v3435 = vpop.permute.xlu0 %3434
        %3436 = vrot.lane.b32.xlu0 %v3201, 12
        %v3437 = vpop.permute.xlu0 %3436
        %3438 = vrot.lane.b32.xlu0 %v3218, 12
        %v3439 = vpop.permute.xlu0 %3438
        %3440 = vrot.lane.b32.xlu0 %v3235, 12
        %v3441 = vpop.permute.xlu0 %3440
        %3442 = vrot.lane.b32.xlu0 %v3252, 12
        %v3443 = vpop.permute.xlu0 %3442
        %3444 = vrot.lane.b32.xlu0 %v3269, 12
        %v3445 = vpop.permute.xlu0 %3444
        %3446 = vrot.lane.b32.xlu0 %v3286, 12
        %v3447 = vpop.permute.xlu0 %3446
        %3448 = vrot.lane.b32.xlu0 %v3303, 12
        %v3449 = vpop.permute.xlu0 %3448
        %3450 = vrot.lane.b32.xlu0 %v3320, 12
        %v3451 = vpop.permute.xlu0 %3450
        %3452 = vrot.lane.b32.xlu0 %v3337, 12
        %v3453 = vpop.permute.xlu0 %3452
        %3454 = vrot.lane.b32.xlu0 %v3354, 12
        %v3455 = vpop.permute.xlu0 %3454
        %3456 = vrot.lane.b32.xlu0 %v3371, 12
        %v3457 = vpop.permute.xlu0 %3456
        %3458 = vrot.lane.b32.xlu0 %v3388, 12
        %v3459 = vpop.permute.xlu0 %3458
        %3460 = vrot.lane.b32.xlu0 %v3405, 12
        %v3461 = vpop.permute.xlu0 %3460
        %3462 = vrot.lane.b32.xlu0 %v3413, 12
        %v3463 = vpop.permute.xlu0 %3462
        %v3489 = vcombine.low %v896, %v514
        %v3491 = vunpack.c.l.s4 1983009808
        %v3492 = vunpack.c.0.s8 %v3491
        %v3493 = vlaneseq
        %v3494 = vshrl.u32 %v3493, 7
        %v3495 = vsub.s32 %v3492, %v3494
        %v3496 = vrot.slane %v3489, %v3495
        %v3497 = vcombine.low %v1399, %v3496
        %v3498 = vcombine.low %v530, %v897
        %v3500 = vunpack.c.l.s4 1983009808
        %v3501 = vunpack.c.0.s8 %v3500
        %v3502 = vlaneseq
        %v3503 = vshrl.u32 %v3502, 7
        %v3504 = vsub.s32 %v3501, %v3503
        %v3505 = vrot.slane %v3498, %v3504
        %v3506 = vcombine.low %v3505, %v1440
        %v3507 = vcombine.low %v898, %v580
        %v3509 = vunpack.c.l.s4 1983009808
        %v3510 = vunpack.c.0.s8 %v3509
        %v3511 = vlaneseq
        %v3512 = vshrl.u32 %v3511, 7
        %v3513 = vsub.s32 %v3510, %v3512
        %v3514 = vrot.slane %v3507, %v3513
        %v3515 = vcombine.low %v3514, %v1474
        %v3516 = vcombine.low %v596, %v899
        %v3518 = vunpack.c.l.s4 1983009808
        %v3519 = vunpack.c.0.s8 %v3518
        %v3520 = vlaneseq
        %v3521 = vshrl.u32 %v3520, 7
        %v3522 = vsub.s32 %v3519, %v3521
        %v3523 = vrot.slane %v3516, %v3522
        %v3524 = vcombine.low %v1484, %v3523
        %v3525 = vcombine.low %v900, %v646
        %v3527 = vunpack.c.l.s4 1983009808
        %v3528 = vunpack.c.0.s8 %v3527
        %v3529 = vlaneseq
        %v3530 = vshrl.u32 %v3529, 7
        %v3531 = vsub.s32 %v3528, %v3530
        %v3532 = vrot.slane %v3525, %v3531
        %v3533 = vcombine.low %v1518, %v3532
        %v3534 = vcombine.low %v662, %v901
        %v3536 = vunpack.c.l.s4 1983009808
        %v3537 = vunpack.c.0.s8 %v3536
        %v3538 = vlaneseq
        %v3539 = vshrl.u32 %v3538, 7
        %v3540 = vsub.s32 %v3537, %v3539
        %v3541 = vrot.slane %v3534, %v3540
        %v3542 = vcombine.low %v3541, %v1559
        %v3543 = vcombine.low %v902, %v712
        %v3545 = vunpack.c.l.s4 1983009808
        %v3546 = vunpack.c.0.s8 %v3545
        %v3547 = vlaneseq
        %v3548 = vshrl.u32 %v3547, 7
        %v3549 = vsub.s32 %v3546, %v3548
        %v3550 = vrot.slane %v3543, %v3549
        %v3551 = vcombine.low %v3550, %v1593
        %v3552 = vcombine.low %v728, %v903
        %v3554 = vunpack.c.l.s4 1983009808
        %v3555 = vunpack.c.0.s8 %v3554
        %v3556 = vlaneseq
        %v3557 = vshrl.u32 %v3556, 7
        %v3558 = vsub.s32 %v3555, %v3557
        %v3559 = vrot.slane %v3552, %v3558
        %v3560 = vcombine.low %v1603, %v3559
        %v3561 = vcombine.low %v904, %v778
        %v3563 = vunpack.c.l.s4 1983009808
        %v3564 = vunpack.c.0.s8 %v3563
        %v3565 = vlaneseq
        %v3566 = vshrl.u32 %v3565, 7
        %v3567 = vsub.s32 %v3564, %v3566
        %v3568 = vrot.slane %v3561, %v3567
        %v3569 = vcombine.low %v1637, %v3568
        %v3570 = vcombine.low %v794, %v905
        %v3572 = vunpack.c.l.s4 1983009808
        %v3573 = vunpack.c.0.s8 %v3572
        %v3574 = vlaneseq
        %v3575 = vshrl.u32 %v3574, 7
        %v3576 = vsub.s32 %v3573, %v3575
        %v3577 = vrot.slane %v3570, %v3576
        %v3578 = vcombine.low %v3577, %v1678
        %v3579 = vcombine.low %v906, %v844
        %v3581 = vunpack.c.l.s4 1983009808
        %v3582 = vunpack.c.0.s8 %v3581
        %v3583 = vlaneseq
        %v3584 = vshrl.u32 %v3583, 7
        %v3585 = vsub.s32 %v3582, %v3584
        %v3586 = vrot.slane %v3579, %v3585
        %v3587 = vcombine.low %v3586, %v1712
        %v3588 = vcombine.low %v860, %v907
        %v3590 = vunpack.c.l.s4 1983009808
        %v3591 = vunpack.c.0.s8 %v3590
        %v3592 = vlaneseq
        %v3593 = vshrl.u32 %v3592, 7
        %v3594 = vsub.s32 %v3591, %v3593
        %v3595 = vrot.slane %v3588, %v3594
        %v3596 = vcombine.low %v1722, %v3595
        %v3597 = vcombine.low %v908, %v1241
        %v3599 = vunpack.c.l.s4 1983009808
        %v3600 = vunpack.c.0.s8 %v3599
        %v3601 = vlaneseq
        %v3602 = vshrl.u32 %v3601, 7
        %v3603 = vsub.s32 %v3600, %v3602
        %v3604 = vrot.slane %v3597, %v3603
        %v3605 = vcombine.low %v1755, %v3604
        %v3606 = vcombine.low %v1240, %v1242
        %v3607 = vcombine.low %v1250, %v1258
        %v3609 = vunpack.c.l.s4 1983009808
        %v3610 = vunpack.c.0.s8 %v3609
        %v3611 = vlaneseq
        %v3612 = vshrl.u32 %v3611, 7
        %v3613 = vsub.s32 %v3610, %v3612
        %v3614 = vrot.slane %v3606, %v3613
        %v3616 = vunpack.c.l.s4 1983009808
        %v3617 = vunpack.c.0.s8 %v3616
        %v3618 = vlaneseq
        %v3619 = vshrl.u32 %v3618, 7
        %v3620 = vsub.s32 %v3617, %v3619
        %v3621 = vrot.slane %v3607, %v3620
        %v3622 = vcombine.low %v3614, %v3621
        %v3623 = vcombine.low %v1257, %v1259
        %v3625 = vunpack.c.l.s4 1983009808
        %v3626 = vunpack.c.0.s8 %v3625
        %v3627 = vlaneseq
        %v3628 = vshrl.u32 %v3627, 7
        %v3629 = vsub.s32 %v3626, %v3628
        %v3630 = vrot.slane %v3623, %v3629
        %3631 = vrot.lane.b32.xlu0 %v1390, 15
        %v3632 = vpop.permute.xlu0 %3631
        %3633 = vrot.lane.b32.xlu0 %v3497, 15
        %v3634 = vpop.permute.xlu0 %3633
        %3635 = vrot.lane.b32.xlu0 %v1424, 15
        %v3636 = vpop.permute.xlu0 %3635
        %3637 = vrot.lane.b32.xlu0 %v3506, 15
        %v3638 = vpop.permute.xlu0 %3637
        %3639 = vrot.lane.b32.xlu0 %v1458, 15
        %v3640 = vpop.permute.xlu0 %3639
        %3641 = vrot.lane.b32.xlu0 %v3515, 15
        %v3642 = vpop.permute.xlu0 %3641
        %3643 = vrot.lane.b32.xlu0 %v3524, 15
        %v3644 = vpop.permute.xlu0 %3643
        %3645 = vrot.lane.b32.xlu0 %v1509, 15
        %v3646 = vpop.permute.xlu0 %3645
        %3647 = vrot.lane.b32.xlu0 %v3533, 15
        %v3648 = vpop.permute.xlu0 %3647
        %3649 = vrot.lane.b32.xlu0 %v1543, 15
        %v3650 = vpop.permute.xlu0 %3649
        %3651 = vrot.lane.b32.xlu0 %v3542, 15
        %v3652 = vpop.permute.xlu0 %3651
        %3653 = vrot.lane.b32.xlu0 %v1577, 15
        %v3654 = vpop.permute.xlu0 %3653
        %3655 = vrot.lane.b32.xlu0 %v3551, 15
        %v3656 = vpop.permute.xlu0 %3655
        %3657 = vrot.lane.b32.xlu0 %v3560, 15
        %v3658 = vpop.permute.xlu0 %3657
        %3659 = vrot.lane.b32.xlu0 %v1628, 15
        %v3660 = vpop.permute.xlu0 %3659
        %3661 = vrot.lane.b32.xlu0 %v3569, 15
        %v3662 = vpop.permute.xlu0 %3661
        %3663 = vrot.lane.b32.xlu0 %v1662, 15
        %v3664 = vpop.permute.xlu0 %3663
        %3665 = vrot.lane.b32.xlu0 %v3578, 15
        %v3666 = vpop.permute.xlu0 %3665
        %3667 = vrot.lane.b32.xlu0 %v1696, 15
        %v3668 = vpop.permute.xlu0 %3667
        %3669 = vrot.lane.b32.xlu0 %v3587, 15
        %v3670 = vpop.permute.xlu0 %3669
        %3671 = vrot.lane.b32.xlu0 %v3596, 15
        %v3672 = vpop.permute.xlu0 %3671
        %3673 = vrot.lane.b32.xlu0 %v1747, 15
        %v3674 = vpop.permute.xlu0 %3673
        %3675 = vrot.lane.b32.xlu0 %v3605, 15
        %v3676 = vpop.permute.xlu0 %3675
        %3677 = vrot.lane.b32.xlu0 %v3622, 15
        %v3678 = vpop.permute.xlu0 %3677
        %3679 = vrot.lane.b32.xlu0 %v3630, 15
        %v3680 = vpop.permute.xlu0 %3679
        %v3706 = vcombine.low %v1406, %v1416
        %v3707 = vcombine.low %v1423, %v1433
        %v3708 = vcombine.low %v1440, %v1450
        %v3709 = vcombine.low %v1457, %v1467
        %v3710 = vcombine.low %v1474, %v1484
        %v3711 = vcombine.low %v1491, %v1501
        %v3712 = vcombine.low %v1508, %v1518
        %v3713 = vcombine.low %v1525, %v1535
        %v3714 = vcombine.low %v1542, %v1552
        %v3715 = vcombine.low %v1559, %v1569
        %v3716 = vcombine.low %v1576, %v1586
        %v3717 = vcombine.low %v1593, %v1603
        %v3718 = vcombine.low %v1610, %v1620
        %v3719 = vcombine.low %v1627, %v1637
        %v3720 = vcombine.low %v1644, %v1654
        %v3721 = vcombine.low %v1661, %v1671
        %v3722 = vcombine.low %v1678, %v1688
        %v3723 = vcombine.low %v1695, %v1705
        %v3724 = vcombine.low %v1712, %v1722
        %v3725 = vcombine.low %v1729, %v1739
        %v3726 = vcombine.low %v1746, %v1755
        %v3727 = vcombine.low %v1233, %v1241
        %v3729 = vunpack.c.l.s4 1983009808
        %v3730 = vunpack.c.0.s8 %v3729
        %v3731 = vlaneseq
        %v3732 = vshrl.u32 %v3731, 7
        %v3733 = vsub.s32 %v3730, %v3732
        %v3734 = vrot.slane %v3727, %v3733
        %v3735 = vcombine.low %v3734, %v3614
        %v3736 = vcombine.low %v1257, %v1291
        %v3738 = vunpack.c.l.s4 1983009808
        %v3739 = vunpack.c.0.s8 %v3738
        %v3740 = vlaneseq
        %v3741 = vshrl.u32 %v3740, 7
        %v3742 = vsub.s32 %v3739, %v3741
        %v3743 = vrot.slane %v3736, %v3742
        %v3744 = vcombine.low %v3621, %v3743
        %v3745 = vcombine.low %v1299, %v1298
        %v3746 = vcombine.low %v1300, %v1308
        %v3748 = vunpack.c.l.s4 1983009808
        %v3749 = vunpack.c.0.s8 %v3748
        %v3750 = vlaneseq
        %v3751 = vshrl.u32 %v3750, 7
        %v3752 = vsub.s32 %v3749, %v3751
        %v3753 = vrot.slane %v3745, %v3752
        %v3755 = vunpack.c.l.s4 1983009808
        %v3756 = vunpack.c.0.s8 %v3755
        %v3757 = vlaneseq
        %v3758 = vshrl.u32 %v3757, 7
        %v3759 = vsub.s32 %v3756, %v3758
        %v3760 = vrot.slane %v3746, %v3759
        %v3761 = vcombine.low %v3753, %v3760
        %v3762 = vcombine.low %v1316, %v1315
        %v3764 = vunpack.c.l.s4 1983009808
        %v3765 = vunpack.c.0.s8 %v3764
        %v3766 = vlaneseq
        %v3767 = vshrl.u32 %v3766, 7
        %v3768 = vsub.s32 %v3765, %v3767
        %v3769 = vrot.slane %v3762, %v3768
        %3770 = vrot.lane.b32.xlu0 %v3706, 18
        %v3771 = vpop.permute.xlu0 %3770
        %3772 = vrot.lane.b32.xlu0 %v3707, 18
        %v3773 = vpop.permute.xlu0 %3772
        %3774 = vrot.lane.b32.xlu0 %v3708, 18
        %v3775 = vpop.permute.xlu0 %3774
        %3776 = vrot.lane.b32.xlu0 %v3709, 18
        %v3777 = vpop.permute.xlu0 %3776
        %3778 = vrot.lane.b32.xlu0 %v3710, 18
        %v3779 = vpop.permute.xlu0 %3778
        %3780 = vrot.lane.b32.xlu0 %v3711, 18
        %v3781 = vpop.permute.xlu0 %3780
        %3782 = vrot.lane.b32.xlu0 %v3712, 18
        %v3783 = vpop.permute.xlu0 %3782
        %3784 = vrot.lane.b32.xlu0 %v3713, 18
        %v3785 = vpop.permute.xlu0 %3784
        %3786 = vrot.lane.b32.xlu0 %v3714, 18
        %v3787 = vpop.permute.xlu0 %3786
        %3788 = vrot.lane.b32.xlu0 %v3715, 18
        %v3789 = vpop.permute.xlu0 %3788
        %3790 = vrot.lane.b32.xlu0 %v3716, 18
        %v3791 = vpop.permute.xlu0 %3790
        %3792 = vrot.lane.b32.xlu0 %v3717, 18
        %v3793 = vpop.permute.xlu0 %3792
        %3794 = vrot.lane.b32.xlu0 %v3718, 18
        %v3795 = vpop.permute.xlu0 %3794
        %3796 = vrot.lane.b32.xlu0 %v3719, 18
        %v3797 = vpop.permute.xlu0 %3796
        %3798 = vrot.lane.b32.xlu0 %v3720, 18
        %v3799 = vpop.permute.xlu0 %3798
        %3800 = vrot.lane.b32.xlu0 %v3721, 18
        %v3801 = vpop.permute.xlu0 %3800
        %3802 = vrot.lane.b32.xlu0 %v3722, 18
        %v3803 = vpop.permute.xlu0 %3802
        %3804 = vrot.lane.b32.xlu0 %v3723, 18
        %v3805 = vpop.permute.xlu0 %3804
        %3806 = vrot.lane.b32.xlu0 %v3724, 18
        %v3807 = vpop.permute.xlu0 %3806
        %3808 = vrot.lane.b32.xlu0 %v3725, 18
        %v3809 = vpop.permute.xlu0 %3808
        %3810 = vrot.lane.b32.xlu0 %v3726, 18
        %v3811 = vpop.permute.xlu0 %3810
        %3812 = vrot.lane.b32.xlu0 %v3735, 18
        %v3813 = vpop.permute.xlu0 %3812
        %3814 = vrot.lane.b32.xlu0 %v3744, 18
        %v3815 = vpop.permute.xlu0 %3814
        %3816 = vrot.lane.b32.xlu0 %v3761, 18
        %v3817 = vpop.permute.xlu0 %3816
        %3818 = vrot.lane.b32.xlu0 %v3769, 18
        %v3819 = vpop.permute.xlu0 %3818
        %v3845 = vcombine.low %v1847, %v1857
        %v3846 = vcombine.low %v1864, %v1874
        %v3847 = vcombine.low %v1881, %v1891
        %v3848 = vcombine.low %v1898, %v1908
        %v3849 = vcombine.low %v1915, %v1925
        %v3850 = vcombine.low %v1932, %v1942
        %v3851 = vcombine.low %v1949, %v1959
        %v3852 = vcombine.low %v1966, %v1976
        %v3853 = vcombine.low %v1983, %v1993
        %v3854 = vcombine.low %v2000, %v2010
        %v3855 = vcombine.low %v2017, %v2027
        %v3856 = vcombine.low %v2034, %v2044
        %v3857 = vcombine.low %v2051, %v2061
        %v3858 = vcombine.low %v2068, %v2078
        %v3859 = vcombine.low %v2085, %v2095
        %v3860 = vcombine.low %v2102, %v2112
        %v3861 = vcombine.low %v2119, %v2129
        %v3862 = vcombine.low %v2136, %v2146
        %v3863 = vcombine.low %v2153, %v2163
        %v3864 = vcombine.low %v2170, %v2180
        %v3865 = vcombine.low %v2187, %v2196
        %v3866 = vcombine.low %v1263, %v1266
        %v3867 = vcombine.low %v1269, %v1272
        %v3869 = vunpack.c.l.s4 1983009808
        %v3870 = vunpack.c.0.s8 %v3869
        %v3871 = vlaneseq
        %v3872 = vshrl.u32 %v3871, 7
        %v3873 = vsub.s32 %v3870, %v3872
        %v3874 = vrot.slane %v3866, %v3873
        %v3876 = vunpack.c.l.s4 1983009808
        %v3877 = vunpack.c.0.s8 %v3876
        %v3878 = vlaneseq
        %v3879 = vshrl.u32 %v3878, 7
        %v3880 = vsub.s32 %v3877, %v3879
        %v3881 = vrot.slane %v3867, %v3880
        %v3882 = vcombine.low %v3874, %v3881
        %v3883 = vcombine.low %v1275, %v1278
        %v3884 = vcombine.low %v1281, %v1321
        %v3886 = vunpack.c.l.s4 1983009808
        %v3887 = vunpack.c.0.s8 %v3886
        %v3888 = vlaneseq
        %v3889 = vshrl.u32 %v3888, 7
        %v3890 = vsub.s32 %v3887, %v3889
        %v3891 = vrot.slane %v3883, %v3890
        %v3893 = vunpack.c.l.s4 1983009808
        %v3894 = vunpack.c.0.s8 %v3893
        %v3895 = vlaneseq
        %v3896 = vshrl.u32 %v3895, 7
        %v3897 = vsub.s32 %v3894, %v3896
        %v3898 = vrot.slane %v3884, %v3897
        %v3899 = vcombine.low %v3891, %v3898
        %v3900 = vcombine.low %v1324, %v1327
        %v3901 = vcombine.low %v1330, %v1333
        %v3903 = vunpack.c.l.s4 1983009808
        %v3904 = vunpack.c.0.s8 %v3903
        %v3905 = vlaneseq
        %v3906 = vshrl.u32 %v3905, 7
        %v3907 = vsub.s32 %v3904, %v3906
        %v3908 = vrot.slane %v3900, %v3907
        %v3910 = vunpack.c.l.s4 1983009808
        %v3911 = vunpack.c.0.s8 %v3910
        %v3912 = vlaneseq
        %v3913 = vshrl.u32 %v3912, 7
        %v3914 = vsub.s32 %v3911, %v3913
        %v3915 = vrot.slane %v3901, %v3914
        %v3916 = vcombine.low %v3908, %v3915
        %v3917 = vcombine.low %v1336, %v1339
        %v3919 = vunpack.c.l.s4 1983009808
        %v3920 = vunpack.c.0.s8 %v3919
        %v3921 = vlaneseq
        %v3922 = vshrl.u32 %v3921, 7
        %v3923 = vsub.s32 %v3920, %v3922
        %v3924 = vrot.slane %v3917, %v3923
        %3925 = vrot.lane.b32.xlu0 %v3845, 21
        %v3926 = vpop.permute.xlu0 %3925
        %3927 = vrot.lane.b32.xlu0 %v3846, 21
        %v3928 = vpop.permute.xlu0 %3927
        %3929 = vrot.lane.b32.xlu0 %v3847, 21
        %v3930 = vpop.permute.xlu0 %3929
        %3931 = vrot.lane.b32.xlu0 %v3848, 21
        %v3932 = vpop.permute.xlu0 %3931
        %3933 = vrot.lane.b32.xlu0 %v3849, 21
        %v3934 = vpop.permute.xlu0 %3933
        %3935 = vrot.lane.b32.xlu0 %v3850, 21
        %v3936 = vpop.permute.xlu0 %3935
        %3937 = vrot.lane.b32.xlu0 %v3851, 21
        %v3938 = vpop.permute.xlu0 %3937
        %3939 = vrot.lane.b32.xlu0 %v3852, 21
        %v3940 = vpop.permute.xlu0 %3939
        %3941 = vrot.lane.b32.xlu0 %v3853, 21
        %v3942 = vpop.permute.xlu0 %3941
        %3943 = vrot.lane.b32.xlu0 %v3854, 21
        %v3944 = vpop.permute.xlu0 %3943
        %3945 = vrot.lane.b32.xlu0 %v3855, 21
        %v3946 = vpop.permute.xlu0 %3945
        %3947 = vrot.lane.b32.xlu0 %v3856, 21
        %v3948 = vpop.permute.xlu0 %3947
        %3949 = vrot.lane.b32.xlu0 %v3857, 21
        %v3950 = vpop.permute.xlu0 %3949
        %3951 = vrot.lane.b32.xlu0 %v3858, 21
        %v3952 = vpop.permute.xlu0 %3951
        %3953 = vrot.lane.b32.xlu0 %v3859, 21
        %v3954 = vpop.permute.xlu0 %3953
        %3955 = vrot.lane.b32.xlu0 %v3860, 21
        %v3956 = vpop.permute.xlu0 %3955
        %3957 = vrot.lane.b32.xlu0 %v3861, 21
        %v3958 = vpop.permute.xlu0 %3957
        %3959 = vrot.lane.b32.xlu0 %v3862, 21
        %v3960 = vpop.permute.xlu0 %3959
        %3961 = vrot.lane.b32.xlu0 %v3863, 21
        %v3962 = vpop.permute.xlu0 %3961
        %3963 = vrot.lane.b32.xlu0 %v3864, 21
        %v3964 = vpop.permute.xlu0 %3963
        %3965 = vrot.lane.b32.xlu0 %v3865, 21
        %v3966 = vpop.permute.xlu0 %3965
        %3967 = vrot.lane.b32.xlu0 %v3882, 21
        %v3968 = vpop.permute.xlu0 %3967
        %3969 = vrot.lane.b32.xlu0 %v3899, 21
        %v3970 = vpop.permute.xlu0 %3969
        %3971 = vrot.lane.b32.xlu0 %v3916, 21
        %v3972 = vpop.permute.xlu0 %3971
        %3973 = vrot.lane.b32.xlu0 %v3924, 21
        %v3974 = vpop.permute.xlu0 %3973
        %v4000 = vcombine.low %v2355, %v2365
        %v4001 = vcombine.low %v2389, %v2399
        %v4002 = vcombine.low %v2423, %v2433
        %v4003 = vcombine.low %v2440, %v2450
        %v4004 = vcombine.low %v2474, %v2484
        %v4005 = vcombine.low %v2508, %v2518
        %v4006 = vcombine.low %v2542, %v2552
        %v4007 = vcombine.low %v2559, %v2569
        %v4008 = vcombine.low %v2593, %v2603
        %v4009 = vcombine.low %v2627, %v2637
        %v4010 = vcombine.low %v2661, %v2671
        %v4011 = vcombine.low %v2678, %v2687
        %v4012 = vcombine.low %v1259, %v1299
        %v4014 = vunpack.c.l.s4 1983009808
        %v4015 = vunpack.c.0.s8 %v4014
        %v4016 = vlaneseq
        %v4017 = vshrl.u32 %v4016, 7
        %v4018 = vsub.s32 %v4015, %v4017
        %v4019 = vrot.slane %v4012, %v4018
        %v4020 = vcombine.low %v2922, %v4019
        %v4021 = vcombine.low %v1298, %v1300
        %v4022 = vcombine.low %v1308, %v1316
        %v4024 = vunpack.c.l.s4 1983009808
        %v4025 = vunpack.c.0.s8 %v4024
        %v4026 = vlaneseq
        %v4027 = vshrl.u32 %v4026, 7
        %v4028 = vsub.s32 %v4025, %v4027
        %v4029 = vrot.slane %v4021, %v4028
        %v4031 = vunpack.c.l.s4 1983009808
        %v4032 = vunpack.c.0.s8 %v4031
        %v4033 = vlaneseq
        %v4034 = vshrl.u32 %v4033, 7
        %v4035 = vsub.s32 %v4032, %v4034
        %v4036 = vrot.slane %v4022, %v4035
        %v4037 = vcombine.low %v4029, %v4036
        %v4038 = vcombine.low %v1315, %v1317
        %v4040 = vunpack.c.l.s4 1983009808
        %v4041 = vunpack.c.0.s8 %v4040
        %v4042 = vlaneseq
        %v4043 = vshrl.u32 %v4042, 7
        %v4044 = vsub.s32 %v4041, %v4043
        %v4045 = vrot.slane %v4038, %v4044
        %4046 = vrot.lane.b32.xlu0 %v2781, 24
        %v4047 = vpop.permute.xlu0 %4046
        %4048 = vrot.lane.b32.xlu0 %v4000, 24
        %v4049 = vpop.permute.xlu0 %4048
        %4050 = vrot.lane.b32.xlu0 %v2791, 24
        %v4051 = vpop.permute.xlu0 %4050
        %4052 = vrot.lane.b32.xlu0 %v4001, 24
        %v4053 = vpop.permute.xlu0 %4052
        %4054 = vrot.lane.b32.xlu0 %v2801, 24
        %v4055 = vpop.permute.xlu0 %4054
        %4056 = vrot.lane.b32.xlu0 %v4002, 24
        %v4057 = vpop.permute.xlu0 %4056
        %4058 = vrot.lane.b32.xlu0 %v4003, 24
        %v4059 = vpop.permute.xlu0 %4058
        %4060 = vrot.lane.b32.xlu0 %v2820, 24
        %v4061 = vpop.permute.xlu0 %4060
        %4062 = vrot.lane.b32.xlu0 %v4004, 24
        %v4063 = vpop.permute.xlu0 %4062
        %4064 = vrot.lane.b32.xlu0 %v2830, 24
        %v4065 = vpop.permute.xlu0 %4064
        %4066 = vrot.lane.b32.xlu0 %v4005, 24
        %v4067 = vpop.permute.xlu0 %4066
        %4068 = vrot.lane.b32.xlu0 %v2840, 24
        %v4069 = vpop.permute.xlu0 %4068
        %4070 = vrot.lane.b32.xlu0 %v4006, 24
        %v4071 = vpop.permute.xlu0 %4070
        %4072 = vrot.lane.b32.xlu0 %v4007, 24
        %v4073 = vpop.permute.xlu0 %4072
        %4074 = vrot.lane.b32.xlu0 %v2859, 24
        %v4075 = vpop.permute.xlu0 %4074
        %4076 = vrot.lane.b32.xlu0 %v4008, 24
        %v4077 = vpop.permute.xlu0 %4076
        %4078 = vrot.lane.b32.xlu0 %v2869, 24
        %v4079 = vpop.permute.xlu0 %4078
        %4080 = vrot.lane.b32.xlu0 %v4009, 24
        %v4081 = vpop.permute.xlu0 %4080
        %4082 = vrot.lane.b32.xlu0 %v2879, 24
        %v4083 = vpop.permute.xlu0 %4082
        %4084 = vrot.lane.b32.xlu0 %v4010, 24
        %v4085 = vpop.permute.xlu0 %4084
        %4086 = vrot.lane.b32.xlu0 %v4011, 24
        %v4087 = vpop.permute.xlu0 %4086
        %4088 = vrot.lane.b32.xlu0 %v2914, 24
        %v4089 = vpop.permute.xlu0 %4088
        %4090 = vrot.lane.b32.xlu0 %v4020, 24
        %v4091 = vpop.permute.xlu0 %4090
        %4092 = vrot.lane.b32.xlu0 %v4037, 24
        %v4093 = vpop.permute.xlu0 %4092
        %4094 = vrot.lane.b32.xlu0 %v4045, 24
        %v4095 = vpop.permute.xlu0 %4094
        %vm4121 = vcmask 23552
        %v4122 = vsel %vm4121, %v1356, %v2198
        %v4123 = vsel %vm4121, %v1373, %v2200
        %v4124 = vsel %vm4121, %v1390, %v2202
        %v4125 = vsel %vm4121, %v1407, %v2204
        %v4126 = vsel %vm4121, %v1424, %v2206
        %v4127 = vsel %vm4121, %v1441, %v2208
        %v4128 = vsel %vm4121, %v1458, %v2210
        %v4129 = vsel %vm4121, %v1475, %v2212
        %v4130 = vsel %vm4121, %v1492, %v2214
        %v4131 = vsel %vm4121, %v1509, %v2216
        %v4132 = vsel %vm4121, %v1526, %v2218
        %v4133 = vsel %vm4121, %v1543, %v2220
        %v4134 = vsel %vm4121, %v1560, %v2222
        %v4135 = vsel %vm4121, %v1577, %v2224
        %v4136 = vsel %vm4121, %v1594, %v2226
        %v4137 = vsel %vm4121, %v1611, %v2228
        %v4138 = vsel %vm4121, %v1628, %v2230
        %v4139 = vsel %vm4121, %v1645, %v2232
        %v4140 = vsel %vm4121, %v1662, %v2234
        %v4141 = vsel %vm4121, %v1679, %v2236
        %v4142 = vsel %vm4121, %v1696, %v2238
        %v4143 = vsel %vm4121, %v1713, %v2240
        %v4144 = vsel %vm4121, %v1730, %v2242
        %v4145 = vsel %vm4121, %v1747, %v2244
        %v4146 = vsel %vm4121, %v1755, %v2246
        %vm4147 = vcmask 48128
        %v4148 = vsel %vm4147, %v4122, %v2689
        %v4149 = vsel %vm4147, %v4123, %v2691
        %v4150 = vsel %vm4147, %v4124, %v2693
        %v4151 = vsel %vm4147, %v4125, %v2695
        %v4152 = vsel %vm4147, %v4126, %v2697
        %v4153 = vsel %vm4147, %v4127, %v2699
        %v4154 = vsel %vm4147, %v4128, %v2701
        %v4155 = vsel %vm4147, %v4129, %v2703
        %v4156 = vsel %vm4147, %v4130, %v2705
        %v4157 = vsel %vm4147, %v4131, %v2707
        %v4158 = vsel %vm4147, %v4132, %v2709
        %v4159 = vsel %vm4147, %v4133, %v2711
        %v4160 = vsel %vm4147, %v4134, %v2713
        %v4161 = vsel %vm4147, %v4135, %v2715
        %v4162 = vsel %vm4147, %v4136, %v2717
        %v4163 = vsel %vm4147, %v4137, %v2719
        %v4164 = vsel %vm4147, %v4138, %v2721
        %v4165 = vsel %vm4147, %v4139, %v2723
        %v4166 = vsel %vm4147, %v4140, %v2725
        %v4167 = vsel %vm4147, %v4141, %v2727
        %v4168 = vsel %vm4147, %v4142, %v2729
        %v4169 = vsel %vm4147, %v4143, %v2731
        %v4170 = vsel %vm4147, %v4144, %v2733
        %v4171 = vsel %vm4147, %v4145, %v2735
        %v4172 = vsel %vm4147, %v4146, %v2737
        %vm4173 = vcmask 72704
        %v4174 = vsel %vm4173, %v4148, %v2924
        %v4175 = vsel %vm4173, %v4149, %v2926
        %v4176 = vsel %vm4173, %v4150, %v2928
        %v4177 = vsel %vm4173, %v4151, %v2930
        %v4178 = vsel %vm4173, %v4152, %v2932
        %v4179 = vsel %vm4173, %v4153, %v2934
        %v4180 = vsel %vm4173, %v4154, %v2936
        %v4181 = vsel %vm4173, %v4155, %v2938
        %v4182 = vsel %vm4173, %v4156, %v2940
        %v4183 = vsel %vm4173, %v4157, %v2942
        %v4184 = vsel %vm4173, %v4158, %v2944
        %v4185 = vsel %vm4173, %v4159, %v2946
        %v4186 = vsel %vm4173, %v4160, %v2948
        %v4187 = vsel %vm4173, %v4161, %v2950
        %v4188 = vsel %vm4173, %v4162, %v2952
        %v4189 = vsel %vm4173, %v4163, %v2954
        %v4190 = vsel %vm4173, %v4164, %v2956
        %v4191 = vsel %vm4173, %v4165, %v2958
        %v4192 = vsel %vm4173, %v4166, %v2960
        %v4193 = vsel %vm4173, %v4167, %v2962
        %v4194 = vsel %vm4173, %v4168, %v2964
        %v4195 = vsel %vm4173, %v4169, %v2966
        %v4196 = vsel %vm4173, %v4170, %v2968
        %v4197 = vsel %vm4173, %v4171, %v2970
        %v4198 = vsel %vm4173, %v4172, %v2972
        %vm4199 = vcmask 97280
        %v4200 = vsel %vm4199, %v4174, %v3415
        %v4201 = vsel %vm4199, %v4175, %v3417
        %v4202 = vsel %vm4199, %v4176, %v3419
        %v4203 = vsel %vm4199, %v4177, %v3421
        %v4204 = vsel %vm4199, %v4178, %v3423
        %v4205 = vsel %vm4199, %v4179, %v3425
        %v4206 = vsel %vm4199, %v4180, %v3427
        %v4207 = vsel %vm4199, %v4181, %v3429
        %v4208 = vsel %vm4199, %v4182, %v3431
        %v4209 = vsel %vm4199, %v4183, %v3433
        %v4210 = vsel %vm4199, %v4184, %v3435
        %v4211 = vsel %vm4199, %v4185, %v3437
        %v4212 = vsel %vm4199, %v4186, %v3439
        %v4213 = vsel %vm4199, %v4187, %v3441
        %v4214 = vsel %vm4199, %v4188, %v3443
        %v4215 = vsel %vm4199, %v4189, %v3445
        %v4216 = vsel %vm4199, %v4190, %v3447
        %v4217 = vsel %vm4199, %v4191, %v3449
        %v4218 = vsel %vm4199, %v4192, %v3451
        %v4219 = vsel %vm4199, %v4193, %v3453
        %v4220 = vsel %vm4199, %v4194, %v3455
        %v4221 = vsel %vm4199, %v4195, %v3457
        %v4222 = vsel %vm4199, %v4196, %v3459
        %v4223 = vsel %vm4199, %v4197, %v3461
        %v4224 = vsel %vm4199, %v4198, %v3463
        %vm4225 = vcmask 121856
        %v4226 = vsel %vm4225, %v4200, %v3632
        %v4227 = vsel %vm4225, %v4201, %v3634
        %v4228 = vsel %vm4225, %v4202, %v3636
        %v4229 = vsel %vm4225, %v4203, %v3638
        %v4230 = vsel %vm4225, %v4204, %v3640
        %v4231 = vsel %vm4225, %v4205, %v3642
        %v4232 = vsel %vm4225, %v4206, %v3644
        %v4233 = vsel %vm4225, %v4207, %v3646
        %v4234 = vsel %vm4225, %v4208, %v3648
        %v4235 = vsel %vm4225, %v4209, %v3650
        %v4236 = vsel %vm4225, %v4210, %v3652
        %v4237 = vsel %vm4225, %v4211, %v3654
        %v4238 = vsel %vm4225, %v4212, %v3656
        %v4239 = vsel %vm4225, %v4213, %v3658
        %v4240 = vsel %vm4225, %v4214, %v3660
        %v4241 = vsel %vm4225, %v4215, %v3662
        %v4242 = vsel %vm4225, %v4216, %v3664
        %v4243 = vsel %vm4225, %v4217, %v3666
        %v4244 = vsel %vm4225, %v4218, %v3668
        %v4245 = vsel %vm4225, %v4219, %v3670
        %v4246 = vsel %vm4225, %v4220, %v3672
        %v4247 = vsel %vm4225, %v4221, %v3674
        %v4248 = vsel %vm4225, %v4222, %v3676
        %v4249 = vsel %vm4225, %v4223, %v3678
        %v4250 = vsel %vm4225, %v4224, %v3680
        %vm4251 = vcmask 146432
        %v4252 = vsel %vm4251, %v4226, %v3771
        %v4253 = vsel %vm4251, %v4227, %v3773
        %v4254 = vsel %vm4251, %v4228, %v3775
        %v4255 = vsel %vm4251, %v4229, %v3777
        %v4256 = vsel %vm4251, %v4230, %v3779
        %v4257 = vsel %vm4251, %v4231, %v3781
        %v4258 = vsel %vm4251, %v4232, %v3783
        %v4259 = vsel %vm4251, %v4233, %v3785
        %v4260 = vsel %vm4251, %v4234, %v3787
        %v4261 = vsel %vm4251, %v4235, %v3789
        %v4262 = vsel %vm4251, %v4236, %v3791
        %v4263 = vsel %vm4251, %v4237, %v3793
        %v4264 = vsel %vm4251, %v4238, %v3795
        %v4265 = vsel %vm4251, %v4239, %v3797
        %v4266 = vsel %vm4251, %v4240, %v3799
        %v4267 = vsel %vm4251, %v4241, %v3801
        %v4268 = vsel %vm4251, %v4242, %v3803
        %v4269 = vsel %vm4251, %v4243, %v3805
        %v4270 = vsel %vm4251, %v4244, %v3807
        %v4271 = vsel %vm4251, %v4245, %v3809
        %v4272 = vsel %vm4251, %v4246, %v3811
        %v4273 = vsel %vm4251, %v4247, %v3813
        %v4274 = vsel %vm4251, %v4248, %v3815
        %v4275 = vsel %vm4251, %v4249, %v3817
        %v4276 = vsel %vm4251, %v4250, %v3819
        %vm4277 = vcmask 171008
        %v4278 = vsel %vm4277, %v4252, %v3926
        %v4279 = vsel %vm4277, %v4253, %v3928
        %v4280 = vsel %vm4277, %v4254, %v3930
        %v4281 = vsel %vm4277, %v4255, %v3932
        %v4282 = vsel %vm4277, %v4256, %v3934
        %v4283 = vsel %vm4277, %v4257, %v3936
        %v4284 = vsel %vm4277, %v4258, %v3938
        %v4285 = vsel %vm4277, %v4259, %v3940
        %v4286 = vsel %vm4277, %v4260, %v3942
        %v4287 = vsel %vm4277, %v4261, %v3944
        %v4288 = vsel %vm4277, %v4262, %v3946
        %v4289 = vsel %vm4277, %v4263, %v3948
        %v4290 = vsel %vm4277, %v4264, %v3950
        %v4291 = vsel %vm4277, %v4265, %v3952
        %v4292 = vsel %vm4277, %v4266, %v3954
        %v4293 = vsel %vm4277, %v4267, %v3956
        %v4294 = vsel %vm4277, %v4268, %v3958
        %v4295 = vsel %vm4277, %v4269, %v3960
        %v4296 = vsel %vm4277, %v4270, %v3962
        %v4297 = vsel %vm4277, %v4271, %v3964
        %v4298 = vsel %vm4277, %v4272, %v3966
        %v4299 = vsel %vm4277, %v4273, %v3968
        %v4300 = vsel %vm4277, %v4274, %v3970
        %v4301 = vsel %vm4277, %v4275, %v3972
        %v4302 = vsel %vm4277, %v4276, %v3974
        %vm4303 = vcmask 195584
        %v4304 = vsel %vm4303, %v4278, %v4047
        %v4305 = vsel %vm4303, %v4279, %v4049
        %v4306 = vsel %vm4303, %v4280, %v4051
        %v4307 = vsel %vm4303, %v4281, %v4053
        %v4308 = vsel %vm4303, %v4282, %v4055
        %v4309 = vsel %vm4303, %v4283, %v4057
        %v4310 = vsel %vm4303, %v4284, %v4059
        %v4311 = vsel %vm4303, %v4285, %v4061
        %v4312 = vsel %vm4303, %v4286, %v4063
        %v4313 = vsel %vm4303, %v4287, %v4065
        %v4314 = vsel %vm4303, %v4288, %v4067
        %v4315 = vsel %vm4303, %v4289, %v4069
        %v4316 = vsel %vm4303, %v4290, %v4071
        %v4317 = vsel %vm4303, %v4291, %v4073
        %v4318 = vsel %vm4303, %v4292, %v4075
        %v4319 = vsel %vm4303, %v4293, %v4077
        %v4320 = vsel %vm4303, %v4294, %v4079
        %v4321 = vsel %vm4303, %v4295, %v4081
        %v4322 = vsel %vm4303, %v4296, %v4083
        %v4323 = vsel %vm4303, %v4297, %v4085
        %v4324 = vsel %vm4303, %v4298, %v4087
        %v4325 = vsel %vm4303, %v4299, %v4089
        %v4326 = vsel %vm4303, %v4300, %v4091
        %v4327 = vsel %vm4303, %v4301, %v4093
        %v4328 = vsel %vm4303, %v4302, %v4095
        %v4329 = vld [vmem:[%s2] sm:$0x3]
        %v4330 = vlaneseq
        %v4331 = vshrl.u32 %v4330, 7
        %v4332 = vsub.s32 0, %v4331
        %v4333 = vrot.slane %v4329, %v4332
        %vm4334 = vcmask 220160
        %v4336 = vsel %vm4334, %v4304, 0
        %v4339 = vsel %vm4334, %v4305, 0
        %v4342 = vsel %vm4334, %v4306, 0
        %v4345 = vsel %vm4334, %v4307, 0
        %v4348 = vsel %vm4334, %v4308, 0
        %v4351 = vsel %vm4334, %v4309, 0
        %v4354 = vsel %vm4334, %v4310, 0
        %v4357 = vsel %vm4334, %v4311, 0
        %v4360 = vsel %vm4334, %v4312, 0
        %v4363 = vsel %vm4334, %v4313, 0
        %v4366 = vsel %vm4334, %v4314, 0
        %v4369 = vsel %vm4334, %v4315, 0
        %v4372 = vsel %vm4334, %v4316, 0
        %v4375 = vsel %vm4334, %v4317, 0
        %v4378 = vsel %vm4334, %v4318, 0
        %v4381 = vsel %vm4334, %v4319, 0
        %v4384 = vsel %vm4334, %v4320, 0
        %v4387 = vsel %vm4334, %v4321, 0
        %v4390 = vsel %vm4334, %v4322, 0
        %v4393 = vsel %vm4334, %v4323, 0
        %v4396 = vsel %vm4334, %v4324, 0
        %v4399 = vsel %vm4334, %v4325, 0
        %v4402 = vsel %vm4334, %v4326, 0
        %v4405 = vsel %vm4334, %v4327, 0
        %v4408 = vsel %vm4334, %v4328, 0
        %vm4410 = vcmask 1042432
        %v4412 = vsel %vm4410, %v404, 0
        %4414 = vmatprep.subr.mxu0 0.0
        %4415 = vmatpush1.msra.mxu0 0.0
        %4416 = vmatprep.subr.mxu0 0.0
        %4417 = vmatpush1.msra.mxu0 0.0
        %4418 = vmatprep.subr.mxu0 0.0
        %4419 = vmatpush1.msra.mxu0 0.0
        %4420 = vmatprep.subr.mxu0 0.0
        %4421 = vmatpush1.msra.mxu0 0.0
        %4422 = vmatprep.subr.mxu0 0.0
        %4423 = vmatpush1.msra.mxu0 0.0
        %4424 = vmatprep.subr.mxu0 0.0
        %4425 = vmatpush1.msra.mxu0 0.0
        %4426 = vmatprep.subr.mxu0 0.0
        %4427 = vmatpush1.msra.mxu0 0.0
        %4428 = vmatprep.subr.mxu0 0.0
        %4429 = vmatpush1.msra.mxu0 0.0
        %4430 = vmatprep.subr.mxu0 0.0
        %4431 = vmatpush1.msra.mxu0 0.0
        %4432 = vmatprep.subr.mxu0 0.0
        %4433 = vmatpush1.msra.mxu0 0.0
        %4434 = vmatprep.subr.mxu0 0.0
        %4435 = vmatpush1.msra.mxu0 0.0
        %4436 = vmatprep.subr.mxu0 0.0
        %4437 = vmatpush1.msra.mxu0 0.0
        %4438 = vmatprep.subr.mxu0 0.0
        %4439 = vmatpush1.msra.mxu0 %v4412
        %4440 = vmatprep.subr.mxu0 0.0
        %4441 = vmatpush1.msra.mxu0 %v403
        %4442 = vmatprep.subr.mxu0 0.0
        %4443 = vmatpush1.msra.mxu0 %v402
        %4444 = vmatprep.subr.mxu0 0.0
        %4445 = vmatpush1.msra.mxu0 %v401
        %4446 = vmatprep.subr.mxu0 0.0
        %4447 = vmatpush2.msra.mxu0 0.0
        %4448 = vmatprep.subr.mxu0 0.0
        %4449 = vmatpush2.msra.mxu0 0.0
        %4450 = vmatprep.subr.mxu0 0.0
        %4451 = vmatpush2.msra.mxu0 0.0
        %4452 = vmatprep.subr.mxu0 0.0
        %4453 = vmatpush2.msra.mxu0 0.0
        %4454 = vmatprep.subr.mxu0 0.0
        %4455 = vmatpush2.msra.mxu0 0.0
        %4456 = vmatprep.subr.mxu0 0.0
        %4457 = vmatpush2.msra.mxu0 0.0
        %4458 = vmatprep.subr.mxu0 0.0
        %4459 = vmatpush2.msra.mxu0 0.0
        %4460 = vmatprep.subr.mxu0 0.0
        %4461 = vmatpush2.msra.mxu0 0.0
        %4462 = vmatprep.subr.mxu0 0.0
        %4463 = vmatpush2.msra.mxu0 0.0
        %4464 = vmatprep.subr.mxu0 0.0
        %4465 = vmatpush2.msra.mxu0 0.0
        %4466 = vmatprep.subr.mxu0 0.0
        %4467 = vmatpush2.msra.mxu0 0.0
        %4468 = vmatprep.subr.mxu0 0.0
        %4469 = vmatpush2.msra.mxu0 0.0
        %4470 = vmatprep.subr.mxu0 0.0
        %4471 = vmatpush2.msra.mxu0 0.0
        %4472 = vmatprep.subr.mxu0 0.0
        %4473 = vmatpush2.msra.mxu0 0.0
        %4474 = vmatprep.subr.mxu0 0.0
        %4475 = vmatpush2.msra.mxu0 0.0
        %4476 = vmatprep.subr.mxu0 0.0
        %4477 = vmatpush2.msra.mxu0 0.0
        %4478 = vmatprep.mubr.f32.mxu0 0.0
        %4479 = vmatmul.mubr.f32.gmra.mxu0 %v4336
        %v4480 = vpop.f32.mrf.mxu0
        %v4481 = vadd.f32 %v4333, %v4480
        %v4482 = vpop.f32.mrf.mxu0
        %4483 = vmatprep.mubr.f32.mxu0 0.0
        %4484 = vmatmul.mubr.f32.gmra.mxu0 %v4339
        %v4485 = vpop.f32.mrf.mxu0
        %v4486 = vadd.f32 %v4333, %v4485
        %v4487 = vpop.f32.mrf.mxu0
        %4488 = vmatprep.mubr.f32.mxu0 0.0
        %4489 = vmatmul.mubr.f32.gmra.mxu0 %v4342
        %v4490 = vpop.f32.mrf.mxu0
        %v4491 = vadd.f32 %v4333, %v4490
        %v4492 = vpop.f32.mrf.mxu0
        %4493 = vmatprep.mubr.f32.mxu0 0.0
        %4494 = vmatmul.mubr.f32.gmra.mxu0 %v4345
        %v4495 = vpop.f32.mrf.mxu0
        %v4496 = vadd.f32 %v4333, %v4495
        %v4497 = vpop.f32.mrf.mxu0
        %4498 = vmatprep.mubr.f32.mxu0 0.0
        %4499 = vmatmul.mubr.f32.gmra.mxu0 %v4348
        %v4500 = vpop.f32.mrf.mxu0
        %v4501 = vadd.f32 %v4333, %v4500
        %v4502 = vpop.f32.mrf.mxu0
        %4503 = vmatprep.mubr.f32.mxu0 0.0
        %4504 = vmatmul.mubr.f32.gmra.mxu0 %v4351
        %v4505 = vpop.f32.mrf.mxu0
        %v4506 = vadd.f32 %v4333, %v4505
        %v4507 = vpop.f32.mrf.mxu0
        %4508 = vmatprep.mubr.f32.mxu0 0.0
        %4509 = vmatmul.mubr.f32.gmra.mxu0 %v4354
        %v4510 = vpop.f32.mrf.mxu0
        %v4511 = vadd.f32 %v4333, %v4510
        %v4512 = vpop.f32.mrf.mxu0
        %4513 = vmatprep.mubr.f32.mxu0 0.0
        %4514 = vmatmul.mubr.f32.gmra.mxu0 %v4357
        %v4515 = vpop.f32.mrf.mxu0
        %v4516 = vadd.f32 %v4333, %v4515
        %v4517 = vpop.f32.mrf.mxu0
        %4518 = vmatprep.mubr.f32.mxu0 0.0
        %4519 = vmatmul.mubr.f32.gmra.mxu0 %v4360
        %v4520 = vpop.f32.mrf.mxu0
        %v4521 = vadd.f32 %v4333, %v4520
        %v4522 = vpop.f32.mrf.mxu0
        %4523 = vmatprep.mubr.f32.mxu0 0.0
        %4524 = vmatmul.mubr.f32.gmra.mxu0 %v4363
        %v4525 = vpop.f32.mrf.mxu0
        %v4526 = vadd.f32 %v4333, %v4525
        %v4527 = vpop.f32.mrf.mxu0
        %4528 = vmatprep.mubr.f32.mxu0 0.0
        %4529 = vmatmul.mubr.f32.gmra.mxu0 %v4366
        %v4530 = vpop.f32.mrf.mxu0
        %v4531 = vadd.f32 %v4333, %v4530
        %v4532 = vpop.f32.mrf.mxu0
        %4533 = vmatprep.mubr.f32.mxu0 0.0
        %4534 = vmatmul.mubr.f32.gmra.mxu0 %v4369
        %v4535 = vpop.f32.mrf.mxu0
        %v4536 = vadd.f32 %v4333, %v4535
        %v4537 = vpop.f32.mrf.mxu0
        %4538 = vmatprep.mubr.f32.mxu0 0.0
        %4539 = vmatmul.mubr.f32.gmra.mxu0 %v4372
        %v4540 = vpop.f32.mrf.mxu0
        %v4541 = vadd.f32 %v4333, %v4540
        %v4542 = vpop.f32.mrf.mxu0
        %4543 = vmatprep.mubr.f32.mxu0 0.0
        %4544 = vmatmul.mubr.f32.gmra.mxu0 %v4375
        %v4545 = vpop.f32.mrf.mxu0
        %v4546 = vadd.f32 %v4333, %v4545
        %v4547 = vpop.f32.mrf.mxu0
        %4548 = vmatprep.mubr.f32.mxu0 0.0
        %4549 = vmatmul.mubr.f32.gmra.mxu0 %v4378
        %v4550 = vpop.f32.mrf.mxu0
        %v4551 = vadd.f32 %v4333, %v4550
        %v4552 = vpop.f32.mrf.mxu0
        %4553 = vmatprep.mubr.f32.mxu0 0.0
        %4554 = vmatmul.mubr.f32.gmra.mxu0 %v4381
        %v4555 = vpop.f32.mrf.mxu0
        %v4556 = vadd.f32 %v4333, %v4555
        %v4557 = vpop.f32.mrf.mxu0
        %4558 = vmatprep.mubr.f32.mxu0 0.0
        %4559 = vmatmul.mubr.f32.gmra.mxu0 %v4384
        %v4560 = vpop.f32.mrf.mxu0
        %v4561 = vadd.f32 %v4333, %v4560
        %v4562 = vpop.f32.mrf.mxu0
        %4563 = vmatprep.mubr.f32.mxu0 0.0
        %4564 = vmatmul.mubr.f32.gmra.mxu0 %v4387
        %v4565 = vpop.f32.mrf.mxu0
        %v4566 = vadd.f32 %v4333, %v4565
        %v4567 = vpop.f32.mrf.mxu0
        %4568 = vmatprep.mubr.f32.mxu0 0.0
        %4569 = vmatmul.mubr.f32.gmra.mxu0 %v4390
        %v4570 = vpop.f32.mrf.mxu0
        %v4571 = vadd.f32 %v4333, %v4570
        %v4572 = vpop.f32.mrf.mxu0
        %4573 = vmatprep.mubr.f32.mxu0 0.0
        %4574 = vmatmul.mubr.f32.gmra.mxu0 %v4393
        %v4575 = vpop.f32.mrf.mxu0
        %v4576 = vadd.f32 %v4333, %v4575
        %v4577 = vpop.f32.mrf.mxu0
        %4578 = vmatprep.mubr.f32.mxu0 0.0
        %4579 = vmatmul.mubr.f32.gmra.mxu0 %v4396
        %v4580 = vpop.f32.mrf.mxu0
        %v4581 = vadd.f32 %v4333, %v4580
        %v4582 = vpop.f32.mrf.mxu0
        %4583 = vmatprep.mubr.f32.mxu0 0.0
        %4584 = vmatmul.mubr.f32.gmra.mxu0 %v4399
        %v4585 = vpop.f32.mrf.mxu0
        %v4586 = vadd.f32 %v4333, %v4585
        %v4587 = vpop.f32.mrf.mxu0
        %4588 = vmatprep.mubr.f32.mxu0 0.0
        %4589 = vmatmul.mubr.f32.gmra.mxu0 %v4402
        %v4590 = vpop.f32.mrf.mxu0
        %v4591 = vadd.f32 %v4333, %v4590
        %v4592 = vpop.f32.mrf.mxu0
        %4593 = vmatprep.mubr.f32.mxu0 0.0
        %4594 = vmatmul.mubr.f32.gmra.mxu0 %v4405
        %v4595 = vpop.f32.mrf.mxu0
        %v4596 = vadd.f32 %v4333, %v4595
        %v4597 = vpop.f32.mrf.mxu0
        %4598 = vmatprep.mubr.f32.mxu0 0.0
        %4599 = vmatmul.mubr.f32.gmra.mxu0 %v4408
        %v4600 = vpop.f32.mrf.mxu0
        %v4601 = vadd.f32 %v4333, %v4600
        %v4602 = vpop.f32.mrf.mxu0
        %4603 = vdwg.mxu0
        %vm4604 = vcmp.ge.f32.partialorder %v4481, 0.0
        %vm4605 = vcmp.ge.f32.partialorder %v4486, 0.0
        %vm4606 = vcmp.ge.f32.partialorder %v4491, 0.0
        %vm4607 = vcmp.ge.f32.partialorder %v4496, 0.0
        %vm4608 = vcmp.ge.f32.partialorder %v4501, 0.0
        %vm4609 = vcmp.ge.f32.partialorder %v4506, 0.0
        %vm4610 = vcmp.ge.f32.partialorder %v4511, 0.0
        %vm4611 = vcmp.ge.f32.partialorder %v4516, 0.0
        %vm4612 = vcmp.ge.f32.partialorder %v4521, 0.0
        %vm4613 = vcmp.ge.f32.partialorder %v4526, 0.0
        %vm4614 = vcmp.ge.f32.partialorder %v4531, 0.0
        %vm4615 = vcmp.ge.f32.partialorder %v4536, 0.0
        %vm4616 = vcmp.ge.f32.partialorder %v4541, 0.0
        %vm4617 = vcmp.ge.f32.partialorder %v4546, 0.0
        %vm4618 = vcmp.ge.f32.partialorder %v4551, 0.0
        %vm4619 = vcmp.ge.f32.partialorder %v4556, 0.0
        %vm4620 = vcmp.ge.f32.partialorder %v4561, 0.0
        %vm4621 = vcmp.ge.f32.partialorder %v4566, 0.0
        %vm4622 = vcmp.ge.f32.partialorder %v4571, 0.0
        %vm4623 = vcmp.ge.f32.partialorder %v4576, 0.0
        %vm4624 = vcmp.ge.f32.partialorder %v4581, 0.0
        %vm4625 = vcmp.ge.f32.partialorder %v4586, 0.0
        %vm4626 = vcmp.ge.f32.partialorder %v4591, 0.0
        %vm4627 = vcmp.ge.f32.partialorder %v4596, 0.0
        %vm4628 = vcmp.ge.f32.partialorder %v4601, 0.0
        %v4629 = vlaneseq
        %v4630 = vshrl.u32 %v4629, 7
        %v4631 = vsub.s32 1, %v4630
        %v4632 = vrot.slane %v4329, %v4631
        %v4633 = vmul.f32 %v4481, %v4632
        %v4634 = vmul.f32 %v4486, %v4632
        %v4635 = vmul.f32 %v4491, %v4632
        %v4636 = vmul.f32 %v4496, %v4632
        %v4637 = vmul.f32 %v4501, %v4632
        %v4638 = vmul.f32 %v4506, %v4632
        %v4639 = vmul.f32 %v4511, %v4632
        %v4640 = vmul.f32 %v4516, %v4632
        %v4641 = vmul.f32 %v4521, %v4632
        %v4642 = vmul.f32 %v4526, %v4632
        %v4643 = vmul.f32 %v4531, %v4632
        %v4644 = vmul.f32 %v4536, %v4632
        %v4645 = vmul.f32 %v4541, %v4632
        %v4646 = vmul.f32 %v4546, %v4632
        %v4647 = vmul.f32 %v4551, %v4632
        %v4648 = vmul.f32 %v4556, %v4632
        %v4649 = vmul.f32 %v4561, %v4632
        %v4650 = vmul.f32 %v4566, %v4632
        %v4651 = vmul.f32 %v4571, %v4632
        %v4652 = vmul.f32 %v4576, %v4632
        %v4653 = vmul.f32 %v4581, %v4632
        %v4654 = vmul.f32 %v4586, %v4632
        %v4655 = vmul.f32 %v4591, %v4632
        %v4656 = vmul.f32 %v4596, %v4632
        %v4657 = vmul.f32 %v4601, %v4632
        %v4658 = vsel %vm4604, %v4481, %v4633
        %v4659 = vsel %vm4605, %v4486, %v4634
        %v4660 = vsel %vm4606, %v4491, %v4635
        %v4661 = vsel %vm4607, %v4496, %v4636
        %v4662 = vsel %vm4608, %v4501, %v4637
        %v4663 = vsel %vm4609, %v4506, %v4638
        %v4664 = vsel %vm4610, %v4511, %v4639
        %v4665 = vsel %vm4611, %v4516, %v4640
        %v4666 = vsel %vm4612, %v4521, %v4641
        %v4667 = vsel %vm4613, %v4526, %v4642
        %v4668 = vsel %vm4614, %v4531, %v4643
        %v4669 = vsel %vm4615, %v4536, %v4644
        %v4670 = vsel %vm4616, %v4541, %v4645
        %v4671 = vsel %vm4617, %v4546, %v4646
        %v4672 = vsel %vm4618, %v4551, %v4647
        %v4673 = vsel %vm4619, %v4556, %v4648
        %v4674 = vsel %vm4620, %v4561, %v4649
        %v4675 = vsel %vm4621, %v4566, %v4650
        %v4676 = vsel %vm4622, %v4571, %v4651
        %v4677 = vsel %vm4623, %v4576, %v4652
        %v4678 = vsel %vm4624, %v4581, %v4653
        %v4679 = vsel %vm4625, %v4586, %v4654
        %v4680 = vsel %vm4626, %v4591, %v4655
        %v4681 = vsel %vm4627, %v4596, %v4656
        %v4682 = vsel %vm4628, %v4601, %v4657
        %v4708 = vcombine.high %v4658, %v4658
        %v4710 = vunpack.c.l.s4 1983009808
        %v4711 = vunpack.c.0.s8 %v4710
        %v4712 = vlaneseq
        %v4713 = vshrl.u32 %v4712, 7
        %v4714 = vsub.s32 %v4711, %v4713
        %v4715 = vrot.slane %v4658, %v4714
        %v4717 = vunpack.c.l.s4 1983009808
        %v4718 = vunpack.c.0.s8 %v4717
        %v4719 = vlaneseq
        %v4720 = vshrl.u32 %v4719, 7
        %v4721 = vsub.s32 %v4718, %v4720
        %v4722 = vrot.slane %v4708, %v4721
        %v4723 = vcombine.high %v4715, %v4715
        %v4724 = vcombine.high %v4722, %v4722
        %v4725 = vcombine.high %v4659, %v4659
        %v4727 = vunpack.c.l.s4 1983009808
        %v4728 = vunpack.c.0.s8 %v4727
        %v4729 = vlaneseq
        %v4730 = vshrl.u32 %v4729, 7
        %v4731 = vsub.s32 %v4728, %v4730
        %v4732 = vrot.slane %v4659, %v4731
        %v4734 = vunpack.c.l.s4 1983009808
        %v4735 = vunpack.c.0.s8 %v4734
        %v4736 = vlaneseq
        %v4737 = vshrl.u32 %v4736, 7
        %v4738 = vsub.s32 %v4735, %v4737
        %v4739 = vrot.slane %v4725, %v4738
        %v4740 = vcombine.high %v4732, %v4732
        %v4741 = vcombine.high %v4739, %v4739
        %v4742 = vcombine.high %v4660, %v4660
        %v4744 = vunpack.c.l.s4 1983009808
        %v4745 = vunpack.c.0.s8 %v4744
        %v4746 = vlaneseq
        %v4747 = vshrl.u32 %v4746, 7
        %v4748 = vsub.s32 %v4745, %v4747
        %v4749 = vrot.slane %v4660, %v4748
        %v4751 = vunpack.c.l.s4 1983009808
        %v4752 = vunpack.c.0.s8 %v4751
        %v4753 = vlaneseq
        %v4754 = vshrl.u32 %v4753, 7
        %v4755 = vsub.s32 %v4752, %v4754
        %v4756 = vrot.slane %v4742, %v4755
        %v4757 = vcombine.high %v4749, %v4749
        %v4758 = vcombine.high %v4756, %v4756
        %v4759 = vcombine.high %v4661, %v4661
        %v4761 = vunpack.c.l.s4 1983009808
        %v4762 = vunpack.c.0.s8 %v4761
        %v4763 = vlaneseq
        %v4764 = vshrl.u32 %v4763, 7
        %v4765 = vsub.s32 %v4762, %v4764
        %v4766 = vrot.slane %v4661, %v4765
        %v4768 = vunpack.c.l.s4 1983009808
        %v4769 = vunpack.c.0.s8 %v4768
        %v4770 = vlaneseq
        %v4771 = vshrl.u32 %v4770, 7
        %v4772 = vsub.s32 %v4769, %v4771
        %v4773 = vrot.slane %v4759, %v4772
        %v4774 = vcombine.high %v4766, %v4766
        %v4775 = vcombine.high %v4773, %v4773
        %v4776 = vcombine.high %v4662, %v4662
        %v4778 = vunpack.c.l.s4 1983009808
        %v4779 = vunpack.c.0.s8 %v4778
        %v4780 = vlaneseq
        %v4781 = vshrl.u32 %v4780, 7
        %v4782 = vsub.s32 %v4779, %v4781
        %v4783 = vrot.slane %v4662, %v4782
        %v4785 = vunpack.c.l.s4 1983009808
        %v4786 = vunpack.c.0.s8 %v4785
        %v4787 = vlaneseq
        %v4788 = vshrl.u32 %v4787, 7
        %v4789 = vsub.s32 %v4786, %v4788
        %v4790 = vrot.slane %v4776, %v4789
        %v4791 = vcombine.high %v4783, %v4783
        %v4792 = vcombine.high %v4790, %v4790
        %v4793 = vcombine.high %v4663, %v4663
        %v4795 = vunpack.c.l.s4 1983009808
        %v4796 = vunpack.c.0.s8 %v4795
        %v4797 = vlaneseq
        %v4798 = vshrl.u32 %v4797, 7
        %v4799 = vsub.s32 %v4796, %v4798
        %v4800 = vrot.slane %v4663, %v4799
        %v4802 = vunpack.c.l.s4 1983009808
        %v4803 = vunpack.c.0.s8 %v4802
        %v4804 = vlaneseq
        %v4805 = vshrl.u32 %v4804, 7
        %v4806 = vsub.s32 %v4803, %v4805
        %v4807 = vrot.slane %v4793, %v4806
        %v4808 = vcombine.high %v4800, %v4800
        %v4809 = vcombine.high %v4807, %v4807
        %v4810 = vcombine.high %v4664, %v4664
        %v4812 = vunpack.c.l.s4 1983009808
        %v4813 = vunpack.c.0.s8 %v4812
        %v4814 = vlaneseq
        %v4815 = vshrl.u32 %v4814, 7
        %v4816 = vsub.s32 %v4813, %v4815
        %v4817 = vrot.slane %v4664, %v4816
        %v4819 = vunpack.c.l.s4 1983009808
        %v4820 = vunpack.c.0.s8 %v4819
        %v4821 = vlaneseq
        %v4822 = vshrl.u32 %v4821, 7
        %v4823 = vsub.s32 %v4820, %v4822
        %v4824 = vrot.slane %v4810, %v4823
        %v4825 = vcombine.high %v4817, %v4817
        %v4826 = vcombine.high %v4824, %v4824
        %v4827 = vcombine.high %v4665, %v4665
        %v4829 = vunpack.c.l.s4 1983009808
        %v4830 = vunpack.c.0.s8 %v4829
        %v4831 = vlaneseq
        %v4832 = vshrl.u32 %v4831, 7
        %v4833 = vsub.s32 %v4830, %v4832
        %v4834 = vrot.slane %v4665, %v4833
        %v4836 = vunpack.c.l.s4 1983009808
        %v4837 = vunpack.c.0.s8 %v4836
        %v4838 = vlaneseq
        %v4839 = vshrl.u32 %v4838, 7
        %v4840 = vsub.s32 %v4837, %v4839
        %v4841 = vrot.slane %v4827, %v4840
        %v4842 = vcombine.high %v4834, %v4834
        %v4843 = vcombine.high %v4841, %v4841
        %v4844 = vcombine.high %v4666, %v4666
        %v4846 = vunpack.c.l.s4 1983009808
        %v4847 = vunpack.c.0.s8 %v4846
        %v4848 = vlaneseq
        %v4849 = vshrl.u32 %v4848, 7
        %v4850 = vsub.s32 %v4847, %v4849
        %v4851 = vrot.slane %v4666, %v4850
        %v4853 = vunpack.c.l.s4 1983009808
        %v4854 = vunpack.c.0.s8 %v4853
        %v4855 = vlaneseq
        %v4856 = vshrl.u32 %v4855, 7
        %v4857 = vsub.s32 %v4854, %v4856
        %v4858 = vrot.slane %v4844, %v4857
        %v4859 = vcombine.high %v4851, %v4851
        %v4860 = vcombine.high %v4858, %v4858
        %v4861 = vcombine.high %v4667, %v4667
        %v4863 = vunpack.c.l.s4 1983009808
        %v4864 = vunpack.c.0.s8 %v4863
        %v4865 = vlaneseq
        %v4866 = vshrl.u32 %v4865, 7
        %v4867 = vsub.s32 %v4864, %v4866
        %v4868 = vrot.slane %v4667, %v4867
        %v4870 = vunpack.c.l.s4 1983009808
        %v4871 = vunpack.c.0.s8 %v4870
        %v4872 = vlaneseq
        %v4873 = vshrl.u32 %v4872, 7
        %v4874 = vsub.s32 %v4871, %v4873
        %v4875 = vrot.slane %v4861, %v4874
        %v4876 = vcombine.high %v4868, %v4868
        %v4877 = vcombine.high %v4875, %v4875
        %v4878 = vcombine.high %v4668, %v4668
        %v4880 = vunpack.c.l.s4 1983009808
        %v4881 = vunpack.c.0.s8 %v4880
        %v4882 = vlaneseq
        %v4883 = vshrl.u32 %v4882, 7
        %v4884 = vsub.s32 %v4881, %v4883
        %v4885 = vrot.slane %v4668, %v4884
        %v4887 = vunpack.c.l.s4 1983009808
        %v4888 = vunpack.c.0.s8 %v4887
        %v4889 = vlaneseq
        %v4890 = vshrl.u32 %v4889, 7
        %v4891 = vsub.s32 %v4888, %v4890
        %v4892 = vrot.slane %v4878, %v4891
        %v4893 = vcombine.high %v4885, %v4885
        %v4894 = vcombine.high %v4892, %v4892
        %v4895 = vcombine.high %v4669, %v4669
        %v4897 = vunpack.c.l.s4 1983009808
        %v4898 = vunpack.c.0.s8 %v4897
        %v4899 = vlaneseq
        %v4900 = vshrl.u32 %v4899, 7
        %v4901 = vsub.s32 %v4898, %v4900
        %v4902 = vrot.slane %v4669, %v4901
        %v4904 = vunpack.c.l.s4 1983009808
        %v4905 = vunpack.c.0.s8 %v4904
        %v4906 = vlaneseq
        %v4907 = vshrl.u32 %v4906, 7
        %v4908 = vsub.s32 %v4905, %v4907
        %v4909 = vrot.slane %v4895, %v4908
        %v4910 = vcombine.high %v4902, %v4902
        %v4911 = vcombine.high %v4909, %v4909
        %v4912 = vcombine.high %v4670, %v4670
        %v4914 = vunpack.c.l.s4 1983009808
        %v4915 = vunpack.c.0.s8 %v4914
        %v4916 = vlaneseq
        %v4917 = vshrl.u32 %v4916, 7
        %v4918 = vsub.s32 %v4915, %v4917
        %v4919 = vrot.slane %v4670, %v4918
        %v4921 = vunpack.c.l.s4 1983009808
        %v4922 = vunpack.c.0.s8 %v4921
        %v4923 = vlaneseq
        %v4924 = vshrl.u32 %v4923, 7
        %v4925 = vsub.s32 %v4922, %v4924
        %v4926 = vrot.slane %v4912, %v4925
        %v4927 = vcombine.high %v4919, %v4919
        %v4928 = vcombine.high %v4926, %v4926
        %v4929 = vcombine.high %v4671, %v4671
        %v4931 = vunpack.c.l.s4 1983009808
        %v4932 = vunpack.c.0.s8 %v4931
        %v4933 = vlaneseq
        %v4934 = vshrl.u32 %v4933, 7
        %v4935 = vsub.s32 %v4932, %v4934
        %v4936 = vrot.slane %v4671, %v4935
        %v4938 = vunpack.c.l.s4 1983009808
        %v4939 = vunpack.c.0.s8 %v4938
        %v4940 = vlaneseq
        %v4941 = vshrl.u32 %v4940, 7
        %v4942 = vsub.s32 %v4939, %v4941
        %v4943 = vrot.slane %v4929, %v4942
        %v4944 = vcombine.high %v4936, %v4936
        %v4945 = vcombine.high %v4943, %v4943
        %v4946 = vcombine.high %v4672, %v4672
        %v4948 = vunpack.c.l.s4 1983009808
        %v4949 = vunpack.c.0.s8 %v4948
        %v4950 = vlaneseq
        %v4951 = vshrl.u32 %v4950, 7
        %v4952 = vsub.s32 %v4949, %v4951
        %v4953 = vrot.slane %v4672, %v4952
        %v4955 = vunpack.c.l.s4 1983009808
        %v4956 = vunpack.c.0.s8 %v4955
        %v4957 = vlaneseq
        %v4958 = vshrl.u32 %v4957, 7
        %v4959 = vsub.s32 %v4956, %v4958
        %v4960 = vrot.slane %v4946, %v4959
        %v4961 = vcombine.high %v4953, %v4953
        %v4962 = vcombine.high %v4960, %v4960
        %v4963 = vcombine.high %v4673, %v4673
        %v4965 = vunpack.c.l.s4 1983009808
        %v4966 = vunpack.c.0.s8 %v4965
        %v4967 = vlaneseq
        %v4968 = vshrl.u32 %v4967, 7
        %v4969 = vsub.s32 %v4966, %v4968
        %v4970 = vrot.slane %v4673, %v4969
        %v4972 = vunpack.c.l.s4 1983009808
        %v4973 = vunpack.c.0.s8 %v4972
        %v4974 = vlaneseq
        %v4975 = vshrl.u32 %v4974, 7
        %v4976 = vsub.s32 %v4973, %v4975
        %v4977 = vrot.slane %v4963, %v4976
        %v4978 = vcombine.high %v4970, %v4970
        %v4979 = vcombine.high %v4977, %v4977
        %v4980 = vcombine.high %v4674, %v4674
        %v4982 = vunpack.c.l.s4 1983009808
        %v4983 = vunpack.c.0.s8 %v4982
        %v4984 = vlaneseq
        %v4985 = vshrl.u32 %v4984, 7
        %v4986 = vsub.s32 %v4983, %v4985
        %v4987 = vrot.slane %v4674, %v4986
        %v4989 = vunpack.c.l.s4 1983009808
        %v4990 = vunpack.c.0.s8 %v4989
        %v4991 = vlaneseq
        %v4992 = vshrl.u32 %v4991, 7
        %v4993 = vsub.s32 %v4990, %v4992
        %v4994 = vrot.slane %v4980, %v4993
        %v4995 = vcombine.high %v4987, %v4987
        %v4996 = vcombine.high %v4994, %v4994
        %v4997 = vcombine.high %v4675, %v4675
        %v4999 = vunpack.c.l.s4 1983009808
        %v5000 = vunpack.c.0.s8 %v4999
        %v5001 = vlaneseq
        %v5002 = vshrl.u32 %v5001, 7
        %v5003 = vsub.s32 %v5000, %v5002
        %v5004 = vrot.slane %v4675, %v5003
        %v5006 = vunpack.c.l.s4 1983009808
        %v5007 = vunpack.c.0.s8 %v5006
        %v5008 = vlaneseq
        %v5009 = vshrl.u32 %v5008, 7
        %v5010 = vsub.s32 %v5007, %v5009
        %v5011 = vrot.slane %v4997, %v5010
        %v5012 = vcombine.high %v5004, %v5004
        %v5013 = vcombine.high %v5011, %v5011
        %v5014 = vcombine.high %v4676, %v4676
        %v5016 = vunpack.c.l.s4 1983009808
        %v5017 = vunpack.c.0.s8 %v5016
        %v5018 = vlaneseq
        %v5019 = vshrl.u32 %v5018, 7
        %v5020 = vsub.s32 %v5017, %v5019
        %v5021 = vrot.slane %v4676, %v5020
        %v5023 = vunpack.c.l.s4 1983009808
        %v5024 = vunpack.c.0.s8 %v5023
        %v5025 = vlaneseq
        %v5026 = vshrl.u32 %v5025, 7
        %v5027 = vsub.s32 %v5024, %v5026
        %v5028 = vrot.slane %v5014, %v5027
        %v5029 = vcombine.high %v5021, %v5021
        %v5030 = vcombine.high %v5028, %v5028
        %v5031 = vcombine.high %v4677, %v4677
        %v5033 = vunpack.c.l.s4 1983009808
        %v5034 = vunpack.c.0.s8 %v5033
        %v5035 = vlaneseq
        %v5036 = vshrl.u32 %v5035, 7
        %v5037 = vsub.s32 %v5034, %v5036
        %v5038 = vrot.slane %v4677, %v5037
        %v5040 = vunpack.c.l.s4 1983009808
        %v5041 = vunpack.c.0.s8 %v5040
        %v5042 = vlaneseq
        %v5043 = vshrl.u32 %v5042, 7
        %v5044 = vsub.s32 %v5041, %v5043
        %v5045 = vrot.slane %v5031, %v5044
        %v5046 = vcombine.high %v5038, %v5038
        %v5047 = vcombine.high %v5045, %v5045
        %v5048 = vcombine.high %v4678, %v4678
        %v5050 = vunpack.c.l.s4 1983009808
        %v5051 = vunpack.c.0.s8 %v5050
        %v5052 = vlaneseq
        %v5053 = vshrl.u32 %v5052, 7
        %v5054 = vsub.s32 %v5051, %v5053
        %v5055 = vrot.slane %v4678, %v5054
        %v5057 = vunpack.c.l.s4 1983009808
        %v5058 = vunpack.c.0.s8 %v5057
        %v5059 = vlaneseq
        %v5060 = vshrl.u32 %v5059, 7
        %v5061 = vsub.s32 %v5058, %v5060
        %v5062 = vrot.slane %v5048, %v5061
        %v5063 = vcombine.high %v5055, %v5055
        %v5064 = vcombine.high %v5062, %v5062
        %v5065 = vcombine.high %v4679, %v4679
        %v5067 = vunpack.c.l.s4 1983009808
        %v5068 = vunpack.c.0.s8 %v5067
        %v5069 = vlaneseq
        %v5070 = vshrl.u32 %v5069, 7
        %v5071 = vsub.s32 %v5068, %v5070
        %v5072 = vrot.slane %v4679, %v5071
        %v5074 = vunpack.c.l.s4 1983009808
        %v5075 = vunpack.c.0.s8 %v5074
        %v5076 = vlaneseq
        %v5077 = vshrl.u32 %v5076, 7
        %v5078 = vsub.s32 %v5075, %v5077
        %v5079 = vrot.slane %v5065, %v5078
        %v5080 = vcombine.high %v5072, %v5072
        %v5081 = vcombine.high %v5079, %v5079
        %v5082 = vcombine.high %v4680, %v4680
        %v5084 = vunpack.c.l.s4 1983009808
        %v5085 = vunpack.c.0.s8 %v5084
        %v5086 = vlaneseq
        %v5087 = vshrl.u32 %v5086, 7
        %v5088 = vsub.s32 %v5085, %v5087
        %v5089 = vrot.slane %v4680, %v5088
        %v5091 = vunpack.c.l.s4 1983009808
        %v5092 = vunpack.c.0.s8 %v5091
        %v5093 = vlaneseq
        %v5094 = vshrl.u32 %v5093, 7
        %v5095 = vsub.s32 %v5092, %v5094
        %v5096 = vrot.slane %v5082, %v5095
        %v5097 = vcombine.high %v5089, %v5089
        %v5098 = vcombine.high %v5096, %v5096
        %v5099 = vcombine.high %v4681, %v4681
        %v5101 = vunpack.c.l.s4 1983009808
        %v5102 = vunpack.c.0.s8 %v5101
        %v5103 = vlaneseq
        %v5104 = vshrl.u32 %v5103, 7
        %v5105 = vsub.s32 %v5102, %v5104
        %v5106 = vrot.slane %v4681, %v5105
        %v5108 = vunpack.c.l.s4 1983009808
        %v5109 = vunpack.c.0.s8 %v5108
        %v5110 = vlaneseq
        %v5111 = vshrl.u32 %v5110, 7
        %v5112 = vsub.s32 %v5109, %v5111
        %v5113 = vrot.slane %v5099, %v5112
        %v5114 = vcombine.high %v5106, %v5106
        %v5115 = vcombine.high %v5113, %v5113
        %v5117 = vunpack.c.l.s4 1983009808
        %v5118 = vunpack.c.0.s8 %v5117
        %v5119 = vlaneseq
        %v5120 = vshrl.u32 %v5119, 7
        %v5121 = vsub.s32 %v5118, %v5120
        %v5122 = vrot.slane %v4682, %v5121
        %v5123 = vcombine.high %v5122, %v5122
        %v5222 = vmax.f32 %v4715, %v4741
        %v5223 = vmax.f32 %v4723, %v4749
        %v5224 = vmax.f32 %v4722, %v4757
        %v5225 = vmax.f32 %v4724, %v4756
        %v5226 = vmax.f32 %v4732, %v4758
        %v5227 = vmax.f32 %v4740, %v4766
        %v5228 = vmax.f32 %v4739, %v4774
        %v5229 = vmax.f32 %v4773, %v4808
        %v5230 = vmax.f32 %v4775, %v4807
        %v5231 = vmax.f32 %v4783, %v4809
        %v5232 = vmax.f32 %v4791, %v4817
        %v5233 = vmax.f32 %v4790, %v4825
        %v5234 = vmax.f32 %v4792, %v4824
        %v5235 = vmax.f32 %v4800, %v4826
        %v5236 = vmax.f32 %v4834, %v4860
        %v5237 = vmax.f32 %v4842, %v4868
        %v5238 = vmax.f32 %v4841, %v4876
        %v5239 = vmax.f32 %v4843, %v4875
        %v5240 = vmax.f32 %v4851, %v4877
        %v5241 = vmax.f32 %v4859, %v4885
        %v5242 = vmax.f32 %v4858, %v4893
        %v5243 = vmax.f32 %v4892, %v4927
        %v5244 = vmax.f32 %v4894, %v4926
        %v5245 = vmax.f32 %v4902, %v4928
        %v5246 = vmax.f32 %v4910, %v4936
        %v5247 = vmax.f32 %v4909, %v4944
        %v5248 = vmax.f32 %v4911, %v4943
        %v5249 = vmax.f32 %v4919, %v4945
        %v5250 = vmax.f32 %v4953, %v4979
        %v5251 = vmax.f32 %v4961, %v4987
        %v5252 = vmax.f32 %v4960, %v4995
        %v5253 = vmax.f32 %v4962, %v4994
        %v5254 = vmax.f32 %v4970, %v4996
        %v5255 = vmax.f32 %v4978, %v5004
        %v5256 = vmax.f32 %v4977, %v5012
        %v5257 = vmax.f32 %v5011, %v5046
        %v5258 = vmax.f32 %v5013, %v5045
        %v5259 = vmax.f32 %v5021, %v5047
        %v5260 = vmax.f32 %v5029, %v5055
        %v5261 = vmax.f32 %v5028, %v5063
        %v5262 = vmax.f32 %v5030, %v5062
        %v5263 = vmax.f32 %v5038, %v5064
        %v5264 = vmax.f32 %v5072, %v5098
        %v5265 = vmax.f32 %v5080, %v5106
        %v5266 = vmax.f32 %v5079, %v5114
        %v5267 = vmax.f32 %v5081, %v5113
        %v5268 = vmax.f32 %v5089, %v5115
        %v5269 = vmax.f32 %v5097, %v5122
        %v5270 = vmax.f32 %v5096, %v5123
        %v5320 = vrot.slane %v5222, 7
        %v5321 = vrot.slane %v5320, 2
        %v5322 = vrot.slane %v5223, 7
        %v5323 = vrot.slane %v5322, 2
        %v5324 = vrot.slane %v5224, 7
        %v5325 = vrot.slane %v5324, 2
        %v5326 = vrot.slane %v5225, 7
        %v5327 = vrot.slane %v5326, 2
        %v5328 = vrot.slane %v5226, 7
        %v5329 = vrot.slane %v5328, 2
        %v5330 = vrot.slane %v5227, 7
        %v5331 = vrot.slane %v5330, 2
        %v5332 = vrot.slane %v5228, 7
        %v5333 = vrot.slane %v5332, 2
        %v5334 = vrot.slane %v5229, 7
        %v5335 = vrot.slane %v5334, 2
        %v5336 = vrot.slane %v5230, 7
        %v5337 = vrot.slane %v5336, 2
        %v5338 = vrot.slane %v5231, 7
        %v5339 = vrot.slane %v5338, 2
        %v5340 = vrot.slane %v5232, 7
        %v5341 = vrot.slane %v5340, 2
        %v5342 = vrot.slane %v5233, 7
        %v5343 = vrot.slane %v5342, 2
        %v5344 = vrot.slane %v5234, 7
        %v5345 = vrot.slane %v5344, 2
        %v5346 = vrot.slane %v5235, 7
        %v5347 = vrot.slane %v5346, 2
        %v5348 = vrot.slane %v5236, 7
        %v5349 = vrot.slane %v5348, 2
        %v5350 = vrot.slane %v5237, 7
        %v5351 = vrot.slane %v5350, 2
        %v5352 = vrot.slane %v5238, 7
        %v5353 = vrot.slane %v5352, 2
        %v5354 = vrot.slane %v5239, 7
        %v5355 = vrot.slane %v5354, 2
        %v5356 = vrot.slane %v5240, 7
        %v5357 = vrot.slane %v5356, 2
        %v5358 = vrot.slane %v5241, 7
        %v5359 = vrot.slane %v5358, 2
        %v5360 = vrot.slane %v5242, 7
        %v5361 = vrot.slane %v5360, 2
        %v5362 = vrot.slane %v5243, 7
        %v5363 = vrot.slane %v5362, 2
        %v5364 = vrot.slane %v5244, 7
        %v5365 = vrot.slane %v5364, 2
        %v5366 = vrot.slane %v5245, 7
        %v5367 = vrot.slane %v5366, 2
        %v5368 = vrot.slane %v5246, 7
        %v5369 = vrot.slane %v5368, 2
        %v5370 = vrot.slane %v5247, 7
        %v5371 = vrot.slane %v5370, 2
        %v5372 = vrot.slane %v5248, 7
        %v5373 = vrot.slane %v5372, 2
        %v5374 = vrot.slane %v5249, 7
        %v5375 = vrot.slane %v5374, 2
        %v5376 = vrot.slane %v5250, 7
        %v5377 = vrot.slane %v5376, 2
        %v5378 = vrot.slane %v5251, 7
        %v5379 = vrot.slane %v5378, 2
        %v5380 = vrot.slane %v5252, 7
        %v5381 = vrot.slane %v5380, 2
        %v5382 = vrot.slane %v5253, 7
        %v5383 = vrot.slane %v5382, 2
        %v5384 = vrot.slane %v5254, 7
        %v5385 = vrot.slane %v5384, 2
        %v5386 = vrot.slane %v5255, 7
        %v5387 = vrot.slane %v5386, 2
        %v5388 = vrot.slane %v5256, 7
        %v5389 = vrot.slane %v5388, 2
        %v5390 = vrot.slane %v5257, 7
        %v5391 = vrot.slane %v5390, 2
        %v5392 = vrot.slane %v5258, 7
        %v5393 = vrot.slane %v5392, 2
        %v5394 = vrot.slane %v5259, 7
        %v5395 = vrot.slane %v5394, 2
        %v5396 = vrot.slane %v5260, 7
        %v5397 = vrot.slane %v5396, 2
        %v5398 = vrot.slane %v5261, 7
        %v5399 = vrot.slane %v5398, 2
        %v5400 = vrot.slane %v5262, 7
        %v5401 = vrot.slane %v5400, 2
        %v5402 = vrot.slane %v5263, 7
        %v5403 = vrot.slane %v5402, 2
        %v5404 = vrot.slane %v5264, 7
        %v5405 = vrot.slane %v5404, 2
        %v5406 = vrot.slane %v5265, 7
        %v5407 = vrot.slane %v5406, 2
        %v5408 = vrot.slane %v5266, 7
        %v5409 = vrot.slane %v5408, 2
        %v5410 = vrot.slane %v5267, 7
        %v5411 = vrot.slane %v5410, 2
        %v5412 = vrot.slane %v5268, 7
        %v5413 = vrot.slane %v5412, 2
        %v5414 = vrot.slane %v5269, 7
        %v5415 = vrot.slane %v5414, 2
        %v5416 = vrot.slane %v5270, 7
        %v5417 = vrot.slane %v5416, 2
        %v5467 = vmax.f32 %v5222, %v5321
        %v5468 = vmax.f32 %v5223, %v5323
        %v5469 = vmax.f32 %v5224, %v5325
        %v5470 = vmax.f32 %v5225, %v5327
        %v5471 = vmax.f32 %v5226, %v5329
        %v5472 = vmax.f32 %v5227, %v5331
        %v5473 = vmax.f32 %v5228, %v5333
        %v5474 = vmax.f32 %v5229, %v5335
        %v5475 = vmax.f32 %v5230, %v5337
        %v5476 = vmax.f32 %v5231, %v5339
        %v5477 = vmax.f32 %v5232, %v5341
        %v5478 = vmax.f32 %v5233, %v5343
        %v5479 = vmax.f32 %v5234, %v5345
        %v5480 = vmax.f32 %v5235, %v5347
        %v5481 = vmax.f32 %v5236, %v5349
        %v5482 = vmax.f32 %v5237, %v5351
        %v5483 = vmax.f32 %v5238, %v5353
        %v5484 = vmax.f32 %v5239, %v5355
        %v5485 = vmax.f32 %v5240, %v5357
        %v5486 = vmax.f32 %v5241, %v5359
        %v5487 = vmax.f32 %v5242, %v5361
        %v5488 = vmax.f32 %v5243, %v5363
        %v5489 = vmax.f32 %v5244, %v5365
        %v5490 = vmax.f32 %v5245, %v5367
        %v5491 = vmax.f32 %v5246, %v5369
        %v5492 = vmax.f32 %v5247, %v5371
        %v5493 = vmax.f32 %v5248, %v5373
        %v5494 = vmax.f32 %v5249, %v5375
        %v5495 = vmax.f32 %v5250, %v5377
        %v5496 = vmax.f32 %v5251, %v5379
        %v5497 = vmax.f32 %v5252, %v5381
        %v5498 = vmax.f32 %v5253, %v5383
        %v5499 = vmax.f32 %v5254, %v5385
        %v5500 = vmax.f32 %v5255, %v5387
        %v5501 = vmax.f32 %v5256, %v5389
        %v5502 = vmax.f32 %v5257, %v5391
        %v5503 = vmax.f32 %v5258, %v5393
        %v5504 = vmax.f32 %v5259, %v5395
        %v5505 = vmax.f32 %v5260, %v5397
        %v5506 = vmax.f32 %v5261, %v5399
        %v5507 = vmax.f32 %v5262, %v5401
        %v5508 = vmax.f32 %v5263, %v5403
        %v5509 = vmax.f32 %v5264, %v5405
        %v5510 = vmax.f32 %v5265, %v5407
        %v5511 = vmax.f32 %v5266, %v5409
        %v5512 = vmax.f32 %v5267, %v5411
        %v5513 = vmax.f32 %v5268, %v5413
        %v5514 = vmax.f32 %v5269, %v5415
        %v5515 = vmax.f32 %v5270, %v5417
        %v5516 = vld [vmem:[%s3] sm:$0xff]
        %v5517 = vld [vmem:[%s3 + $0x8] sm:$0xff]
        %v5518 = vld [vmem:[%s3 + $0x10] sm:$0xff]
        %v5519 = vld [vmem:[%s3 + $0x18] sm:$0xff]
        %v5520 = vld [vmem:[%s3 + $0x20] sm:$0xff]
        %v5521 = vld [vmem:[%s3 + $0x28] sm:$0xff]
        %v5522 = vld [vmem:[%s3 + $0x30] sm:$0xff]
        %v5523 = vld [vmem:[%s3 + $0x38] sm:$0xff]
        %v5524 = vld [vmem:[%s3 + $0x40] sm:$0xff]
        %v5525 = vld [vmem:[%s3 + $0x48] sm:$0xff]
        %v5526 = vld [vmem:[%s3 + $0x50] sm:$0xff]
        %v5527 = vld [vmem:[%s3 + $0x58] sm:$0x3]
        %v5553 = vlaneseq
        %v5554 = vshrl.u32 %v5553, 7
        %v5555 = vsub.s32 0, %v5554
        %v5556 = vrot.slane %v5467, %v5555
        %v5557 = vlaneseq
        %v5558 = vshrl.u32 %v5557, 7
        %v5559 = vsub.s32 0, %v5558
        %v5560 = vrot.slane %v5468, %v5559
        %v5561 = vlaneseq
        %v5562 = vshrl.u32 %v5561, 7
        %v5563 = vsub.s32 0, %v5562
        %v5564 = vrot.slane %v5469, %v5563
        %v5565 = vlaneseq
        %v5566 = vshrl.u32 %v5565, 7
        %v5567 = vsub.s32 0, %v5566
        %v5568 = vrot.slane %v5470, %v5567
        %v5569 = vlaneseq
        %v5570 = vshrl.u32 %v5569, 7
        %v5571 = vsub.s32 0, %v5570
        %v5572 = vrot.slane %v5471, %v5571
        %v5573 = vlaneseq
        %v5574 = vshrl.u32 %v5573, 7
        %v5575 = vsub.s32 0, %v5574
        %v5576 = vrot.slane %v5474, %v5575
        %v5577 = vlaneseq
        %v5578 = vshrl.u32 %v5577, 7
        %v5579 = vsub.s32 0, %v5578
        %v5580 = vrot.slane %v5475, %v5579
        %v5581 = vlaneseq
        %v5582 = vshrl.u32 %v5581, 7
        %v5583 = vsub.s32 0, %v5582
        %v5584 = vrot.slane %v5476, %v5583
        %v5585 = vlaneseq
        %v5586 = vshrl.u32 %v5585, 7
        %v5587 = vsub.s32 0, %v5586
        %v5588 = vrot.slane %v5477, %v5587
        %v5589 = vlaneseq
        %v5590 = vshrl.u32 %v5589, 7
        %v5591 = vsub.s32 0, %v5590
        %v5592 = vrot.slane %v5478, %v5591
        %v5593 = vlaneseq
        %v5594 = vshrl.u32 %v5593, 7
        %v5595 = vsub.s32 0, %v5594
        %v5596 = vrot.slane %v5481, %v5595
        %v5597 = vlaneseq
        %v5598 = vshrl.u32 %v5597, 7
        %v5599 = vsub.s32 0, %v5598
        %v5600 = vrot.slane %v5482, %v5599
        %v5601 = vlaneseq
        %v5602 = vshrl.u32 %v5601, 7
        %v5603 = vsub.s32 0, %v5602
        %v5604 = vrot.slane %v5483, %v5603
        %v5605 = vlaneseq
        %v5606 = vshrl.u32 %v5605, 7
        %v5607 = vsub.s32 0, %v5606
        %v5608 = vrot.slane %v5484, %v5607
        %v5609 = vlaneseq
        %v5610 = vshrl.u32 %v5609, 7
        %v5611 = vsub.s32 0, %v5610
        %v5612 = vrot.slane %v5485, %v5611
        %v5613 = vlaneseq
        %v5614 = vshrl.u32 %v5613, 7
        %v5615 = vsub.s32 0, %v5614
        %v5616 = vrot.slane %v5488, %v5615
        %v5617 = vlaneseq
        %v5618 = vshrl.u32 %v5617, 7
        %v5619 = vsub.s32 0, %v5618
        %v5620 = vrot.slane %v5489, %v5619
        %v5621 = vlaneseq
        %v5622 = vshrl.u32 %v5621, 7
        %v5623 = vsub.s32 0, %v5622
        %v5624 = vrot.slane %v5490, %v5623
        %v5625 = vlaneseq
        %v5626 = vshrl.u32 %v5625, 7
        %v5627 = vsub.s32 0, %v5626
        %v5628 = vrot.slane %v5491, %v5627
        %v5629 = vlaneseq
        %v5630 = vshrl.u32 %v5629, 7
        %v5631 = vsub.s32 0, %v5630
        %v5632 = vrot.slane %v5492, %v5631
        %v5633 = vlaneseq
        %v5634 = vshrl.u32 %v5633, 7
        %v5635 = vsub.s32 0, %v5634
        %v5636 = vrot.slane %v5495, %v5635
        %v5637 = vlaneseq
        %v5638 = vshrl.u32 %v5637, 7
        %v5639 = vsub.s32 0, %v5638
        %v5640 = vrot.slane %v5496, %v5639
        %v5641 = vlaneseq
        %v5642 = vshrl.u32 %v5641, 7
        %v5643 = vsub.s32 0, %v5642
        %v5644 = vrot.slane %v5497, %v5643
        %v5645 = vlaneseq
        %v5646 = vshrl.u32 %v5645, 7
        %v5647 = vsub.s32 0, %v5646
        %v5648 = vrot.slane %v5498, %v5647
        %v5649 = vlaneseq
        %v5650 = vshrl.u32 %v5649, 7
        %v5651 = vsub.s32 0, %v5650
        %v5652 = vrot.slane %v5499, %v5651
        %vm5653 = vcmask 1041409
        %v5654 = vsel %vm5653, %v5560, %v5556
        %v5655 = vsel %vm910, %v5564, %v5654
        %vm5656 = vcmask 1043459
        %v5657 = vsel %vm5656, %v5568, %v5655
        %v5658 = vsel %vm912, %v5572, %v5657
        %vm5659 = vcmask 1045509
        %v5660 = vsel %vm5659, %v5576, %v5658
        %v5661 = vsel %vm914, %v5580, %v5660
        %vm5662 = vcmask 1047559
        %v5663 = vsel %vm5662, %v5584, %v5661
        %v5664 = vsel %vm5653, %v5592, %v5588
        %v5665 = vsel %vm910, %v5596, %v5664
        %v5666 = vsel %vm5656, %v5600, %v5665
        %v5667 = vsel %vm912, %v5604, %v5666
        %v5668 = vsel %vm5659, %v5608, %v5667
        %v5669 = vsel %vm914, %v5612, %v5668
        %v5670 = vsel %vm5662, %v5616, %v5669
        %v5671 = vsel %vm5653, %v5624, %v5620
        %v5672 = vsel %vm910, %v5628, %v5671
        %v5673 = vsel %vm5656, %v5632, %v5672
        %v5674 = vsel %vm912, %v5636, %v5673
        %v5675 = vsel %vm5659, %v5640, %v5674
        %v5676 = vsel %vm914, %v5644, %v5675
        %v5677 = vsel %vm5662, %v5648, %v5676
        %v5687 = vlaneseq
        %v5688 = vshrl.u32 %v5687, 7
        %v5689 = vsub.s32 0, %v5688
        %v5690 = vrot.slane %v5472, %v5689
        %v5691 = vlaneseq
        %v5692 = vshrl.u32 %v5691, 7
        %v5693 = vsub.s32 0, %v5692
        %v5694 = vrot.slane %v5479, %v5693
        %v5695 = vlaneseq
        %v5696 = vshrl.u32 %v5695, 7
        %v5697 = vsub.s32 0, %v5696
        %v5698 = vrot.slane %v5486, %v5697
        %v5699 = vlaneseq
        %v5700 = vshrl.u32 %v5699, 7
        %v5701 = vsub.s32 0, %v5700
        %v5702 = vrot.slane %v5493, %v5701
        %v5703 = vlaneseq
        %v5704 = vshrl.u32 %v5703, 7
        %v5705 = vsub.s32 0, %v5704
        %v5706 = vrot.slane %v5500, %v5705
        %v5707 = vsel %vm5653, %v5564, %v5560
        %v5708 = vsel %vm910, %v5568, %v5707
        %v5709 = vsel %vm5656, %v5572, %v5708
        %v5710 = vsel %vm912, %v5690, %v5709
        %v5711 = vsel %vm5659, %v5580, %v5710
        %v5712 = vsel %vm914, %v5584, %v5711
        %v5713 = vsel %vm5662, %v5588, %v5712
        %v5714 = vsel %vm5653, %v5694, %v5592
        %v5715 = vsel %vm910, %v5600, %v5714
        %v5716 = vsel %vm5656, %v5604, %v5715
        %v5717 = vsel %vm912, %v5608, %v5716
        %v5718 = vsel %vm5659, %v5612, %v5717
        %v5719 = vsel %vm914, %v5698, %v5718
        %v5720 = vsel %vm5662, %v5620, %v5719
        %v5721 = vsel %vm5653, %v5628, %v5624
        %v5722 = vsel %vm910, %v5632, %v5721
        %v5723 = vsel %vm5656, %v5702, %v5722
        %v5724 = vsel %vm912, %v5640, %v5723
        %v5725 = vsel %vm5659, %v5644, %v5724
        %v5726 = vsel %vm914, %v5648, %v5725
        %v5727 = vsel %vm5662, %v5652, %v5726
        %5728 = vrot.lane.b32.xlu0 %v5713, 10
        %v5729 = vpop.permute.xlu0 %5728
        %5730 = vrot.lane.b32.xlu0 %v5720, 10
        %v5731 = vpop.permute.xlu0 %5730
        %5732 = vrot.lane.b32.xlu0 %v5727, 10
        %v5733 = vpop.permute.xlu0 %5732
        %5734 = vrot.lane.b32.xlu0 %v5706, 10
        %v5735 = vpop.permute.xlu0 %5734
        %v5745 = vlaneseq
        %v5746 = vshrl.u32 %v5745, 7
        %v5747 = vsub.s32 0, %v5746
        %v5748 = vrot.slane %v5473, %v5747
        %v5749 = vlaneseq
        %v5750 = vshrl.u32 %v5749, 7
        %v5751 = vsub.s32 0, %v5750
        %v5752 = vrot.slane %v5480, %v5751
        %v5753 = vlaneseq
        %v5754 = vshrl.u32 %v5753, 7
        %v5755 = vsub.s32 0, %v5754
        %v5756 = vrot.slane %v5487, %v5755
        %v5757 = vlaneseq
        %v5758 = vshrl.u32 %v5757, 7
        %v5759 = vsub.s32 0, %v5758
        %v5760 = vrot.slane %v5494, %v5759
        %v5761 = vlaneseq
        %v5762 = vshrl.u32 %v5761, 7
        %v5763 = vsub.s32 0, %v5762
        %v5764 = vrot.slane %v5501, %v5763
        %v5765 = vsel %vm5653, %v5568, %v5564
        %v5766 = vsel %vm910, %v5572, %v5765
        %v5767 = vsel %vm5656, %v5690, %v5766
        %v5768 = vsel %vm912, %v5748, %v5767
        %v5769 = vsel %vm5659, %v5584, %v5768
        %v5770 = vsel %vm914, %v5588, %v5769
        %v5771 = vsel %vm5662, %v5592, %v5770
        %v5772 = vsel %vm5653, %v5752, %v5694
        %v5773 = vsel %vm910, %v5604, %v5772
        %v5774 = vsel %vm5656, %v5608, %v5773
        %v5775 = vsel %vm912, %v5612, %v5774
        %v5776 = vsel %vm5659, %v5698, %v5775
        %v5777 = vsel %vm914, %v5756, %v5776
        %v5778 = vsel %vm5662, %v5624, %v5777
        %v5779 = vsel %vm5653, %v5632, %v5628
        %v5780 = vsel %vm910, %v5702, %v5779
        %v5781 = vsel %vm5656, %v5760, %v5780
        %v5782 = vsel %vm912, %v5644, %v5781
        %v5783 = vsel %vm5659, %v5648, %v5782
        %v5784 = vsel %vm914, %v5652, %v5783
        %v5785 = vsel %vm5662, %v5706, %v5784
        %5786 = vrot.lane.b32.xlu0 %v5771, 20
        %v5787 = vpop.permute.xlu0 %5786
        %5788 = vrot.lane.b32.xlu0 %v5778, 20
        %v5789 = vpop.permute.xlu0 %5788
        %5790 = vrot.lane.b32.xlu0 %v5785, 20
        %v5791 = vpop.permute.xlu0 %5790
        %5792 = vrot.lane.b32.xlu0 %v5764, 20
        %v5793 = vpop.permute.xlu0 %5792
        %v5803 = vlaneseq
        %v5804 = vshrl.u32 %v5803, 7
        %v5805 = vsub.s32 0, %v5804
        %v5806 = vrot.slane %v5502, %v5805
        %v5807 = vlaneseq
        %v5808 = vshrl.u32 %v5807, 7
        %v5809 = vsub.s32 0, %v5808
        %v5810 = vrot.slane %v5503, %v5809
        %v5811 = vlaneseq
        %v5812 = vshrl.u32 %v5811, 7
        %v5813 = vsub.s32 0, %v5812
        %v5814 = vrot.slane %v5504, %v5813
        %v5815 = vlaneseq
        %v5816 = vshrl.u32 %v5815, 7
        %v5817 = vsub.s32 0, %v5816
        %v5818 = vrot.slane %v5505, %v5817
        %v5819 = vlaneseq
        %v5820 = vshrl.u32 %v5819, 7
        %v5821 = vsub.s32 0, %v5820
        %v5822 = vrot.slane %v5506, %v5821
        %v5823 = vsel %vm5653, %v5580, %v5576
        %v5824 = vsel %vm910, %v5584, %v5823
        %v5825 = vsel %vm5656, %v5588, %v5824
        %v5826 = vsel %vm912, %v5592, %v5825
        %v5827 = vsel %vm5659, %v5596, %v5826
        %v5828 = vsel %vm914, %v5600, %v5827
        %v5829 = vsel %vm5662, %v5604, %v5828
        %v5830 = vsel %vm5653, %v5612, %v5608
        %v5831 = vsel %vm910, %v5616, %v5830
        %v5832 = vsel %vm5656, %v5620, %v5831
        %v5833 = vsel %vm912, %v5624, %v5832
        %v5834 = vsel %vm5659, %v5628, %v5833
        %v5835 = vsel %vm914, %v5632, %v5834
        %v5836 = vsel %vm5662, %v5636, %v5835
        %v5837 = vsel %vm5653, %v5644, %v5640
        %v5838 = vsel %vm910, %v5648, %v5837
        %v5839 = vsel %vm5656, %v5652, %v5838
        %v5840 = vsel %vm912, %v5806, %v5839
        %v5841 = vsel %vm5659, %v5810, %v5840
        %v5842 = vsel %vm914, %v5814, %v5841
        %v5843 = vsel %vm5662, %v5818, %v5842
        %5844 = vrot.lane.b32.xlu0 %v5829, 30
        %v5845 = vpop.permute.xlu0 %5844
        %5846 = vrot.lane.b32.xlu0 %v5836, 30
        %v5847 = vpop.permute.xlu0 %5846
        %5848 = vrot.lane.b32.xlu0 %v5843, 30
        %v5849 = vpop.permute.xlu0 %5848
        %5850 = vrot.lane.b32.xlu0 %v5822, 30
        %v5851 = vpop.permute.xlu0 %5850
        %v5857 = vlaneseq
        %v5858 = vshrl.u32 %v5857, 7
        %v5859 = vsub.s32 0, %v5858
        %v5860 = vrot.slane %v5507, %v5859
        %v5861 = vsel %vm5653, %v5584, %v5580
        %v5862 = vsel %vm910, %v5588, %v5861
        %v5863 = vsel %vm5656, %v5592, %v5862
        %v5864 = vsel %vm912, %v5694, %v5863
        %v5865 = vsel %vm5659, %v5600, %v5864
        %v5866 = vsel %vm914, %v5604, %v5865
        %v5867 = vsel %vm5662, %v5608, %v5866
        %v5868 = vsel %vm5653, %v5698, %v5612
        %v5869 = vsel %vm910, %v5620, %v5868
        %v5870 = vsel %vm5656, %v5624, %v5869
        %v5871 = vsel %vm912, %v5628, %v5870
        %v5872 = vsel %vm5659, %v5632, %v5871
        %v5873 = vsel %vm914, %v5702, %v5872
        %v5874 = vsel %vm5662, %v5640, %v5873
        %v5875 = vsel %vm5653, %v5648, %v5644
        %v5876 = vsel %vm910, %v5652, %v5875
        %v5877 = vsel %vm5656, %v5706, %v5876
        %v5878 = vsel %vm912, %v5810, %v5877
        %v5879 = vsel %vm5659, %v5814, %v5878
        %v5880 = vsel %vm914, %v5818, %v5879
        %v5881 = vsel %vm5662, %v5822, %v5880
        %5882 = vrot.lane.b32.xlu0 %v5867, 40
        %v5883 = vpop.permute.xlu0 %5882
        %5884 = vrot.lane.b32.xlu0 %v5874, 40
        %v5885 = vpop.permute.xlu0 %5884
        %5886 = vrot.lane.b32.xlu0 %v5881, 40
        %v5887 = vpop.permute.xlu0 %5886
        %5888 = vrot.lane.b32.xlu0 %v5860, 40
        %v5889 = vpop.permute.xlu0 %5888
        %v5895 = vlaneseq
        %v5896 = vshrl.u32 %v5895, 7
        %v5897 = vsub.s32 0, %v5896
        %v5898 = vrot.slane %v5508, %v5897
        %v5899 = vsel %vm5653, %v5588, %v5584
        %v5900 = vsel %vm910, %v5592, %v5899
        %v5901 = vsel %vm5656, %v5694, %v5900
        %v5902 = vsel %vm912, %v5752, %v5901
        %v5903 = vsel %vm5659, %v5604, %v5902
        %v5904 = vsel %vm914, %v5608, %v5903
        %v5905 = vsel %vm5662, %v5612, %v5904
        %v5906 = vsel %vm5653, %v5756, %v5698
        %v5907 = vsel %vm910, %v5624, %v5906
        %v5908 = vsel %vm5656, %v5628, %v5907
        %v5909 = vsel %vm912, %v5632, %v5908
        %v5910 = vsel %vm5659, %v5702, %v5909
        %v5911 = vsel %vm914, %v5760, %v5910
        %v5912 = vsel %vm5662, %v5644, %v5911
        %v5913 = vsel %vm5653, %v5652, %v5648
        %v5914 = vsel %vm910, %v5706, %v5913
        %v5915 = vsel %vm5656, %v5764, %v5914
        %v5916 = vsel %vm912, %v5814, %v5915
        %v5917 = vsel %vm5659, %v5818, %v5916
        %v5918 = vsel %vm914, %v5822, %v5917
        %v5919 = vsel %vm5662, %v5860, %v5918
        %5920 = vrot.lane.b32.xlu0 %v5905, 50
        %v5921 = vpop.permute.xlu0 %5920
        %5922 = vrot.lane.b32.xlu0 %v5912, 50
        %v5923 = vpop.permute.xlu0 %5922
        %5924 = vrot.lane.b32.xlu0 %v5919, 50
        %v5925 = vpop.permute.xlu0 %5924
        %5926 = vrot.lane.b32.xlu0 %v5898, 50
        %v5927 = vpop.permute.xlu0 %5926
        %v5937 = vlaneseq
        %v5938 = vshrl.u32 %v5937, 7
        %v5939 = vsub.s32 0, %v5938
        %v5940 = vrot.slane %v5509, %v5939
        %v5941 = vlaneseq
        %v5942 = vshrl.u32 %v5941, 7
        %v5943 = vsub.s32 0, %v5942
        %v5944 = vrot.slane %v5510, %v5943
        %v5945 = vlaneseq
        %v5946 = vshrl.u32 %v5945, 7
        %v5947 = vsub.s32 0, %v5946
        %v5948 = vrot.slane %v5511, %v5947
        %v5949 = vlaneseq
        %v5950 = vshrl.u32 %v5949, 7
        %v5951 = vsub.s32 0, %v5950
        %v5952 = vrot.slane %v5512, %v5951
        %v5953 = vlaneseq
        %v5954 = vshrl.u32 %v5953, 7
        %v5955 = vsub.s32 0, %v5954
        %v5956 = vrot.slane %v5513, %v5955
        %v5957 = vsel %vm5653, %v5600, %v5596
        %v5958 = vsel %vm910, %v5604, %v5957
        %v5959 = vsel %vm5656, %v5608, %v5958
        %v5960 = vsel %vm912, %v5612, %v5959
        %v5961 = vsel %vm5659, %v5616, %v5960
        %v5962 = vsel %vm914, %v5620, %v5961
        %v5963 = vsel %vm5662, %v5624, %v5962
        %v5964 = vsel %vm910, %v5636, %v5779
        %v5965 = vsel %vm5656, %v5640, %v5964
        %v5966 = vsel %vm912, %v5644, %v5965
        %v5967 = vsel %vm5659, %v5648, %v5966
        %v5968 = vsel %vm914, %v5652, %v5967
        %v5969 = vsel %vm5662, %v5806, %v5968
        %v5970 = vsel %vm5653, %v5814, %v5810
        %v5971 = vsel %vm910, %v5818, %v5970
        %v5972 = vsel %vm5656, %v5822, %v5971
        %v5973 = vsel %vm912, %v5940, %v5972
        %v5974 = vsel %vm5659, %v5944, %v5973
        %v5975 = vsel %vm914, %v5948, %v5974
        %v5976 = vsel %vm5662, %v5952, %v5975
        %5977 = vrot.lane.b32.xlu0 %v5963, 60
        %v5978 = vpop.permute.xlu0 %5977
        %5979 = vrot.lane.b32.xlu0 %v5969, 60
        %v5980 = vpop.permute.xlu0 %5979
        %5981 = vrot.lane.b32.xlu0 %v5976, 60
        %v5982 = vpop.permute.xlu0 %5981
        %5983 = vrot.lane.b32.xlu0 %v5956, 60
        %v5984 = vpop.permute.xlu0 %5983
        %v5990 = vlaneseq
        %v5991 = vshrl.u32 %v5990, 7
        %v5992 = vsub.s32 0, %v5991
        %v5993 = vrot.slane %v5514, %v5992
        %v5994 = vsel %vm5653, %v5604, %v5600
        %v5995 = vsel %vm910, %v5608, %v5994
        %v5996 = vsel %vm5656, %v5612, %v5995
        %v5997 = vsel %vm912, %v5698, %v5996
        %v5998 = vsel %vm5659, %v5620, %v5997
        %v5999 = vsel %vm914, %v5624, %v5998
        %v6000 = vsel %vm5662, %v5628, %v5999
        %v6001 = vsel %vm5653, %v5702, %v5632
        %v6002 = vsel %vm910, %v5640, %v6001
        %v6003 = vsel %vm5656, %v5644, %v6002
        %v6004 = vsel %vm912, %v5648, %v6003
        %v6005 = vsel %vm5659, %v5652, %v6004
        %v6006 = vsel %vm914, %v5706, %v6005
        %v6007 = vsel %vm5662, %v5810, %v6006
        %v6008 = vsel %vm5653, %v5818, %v5814
        %v6009 = vsel %vm910, %v5822, %v6008
        %v6010 = vsel %vm5656, %v5860, %v6009
        %v6011 = vsel %vm912, %v5944, %v6010
        %v6012 = vsel %vm5659, %v5948, %v6011
        %v6013 = vsel %vm914, %v5952, %v6012
        %v6014 = vsel %vm5662, %v5956, %v6013
        %6015 = vrot.lane.b32.xlu0 %v6000, 70
        %v6016 = vpop.permute.xlu0 %6015
        %6017 = vrot.lane.b32.xlu0 %v6007, 70
        %v6018 = vpop.permute.xlu0 %6017
        %6019 = vrot.lane.b32.xlu0 %v6014, 70
        %v6020 = vpop.permute.xlu0 %6019
        %6021 = vrot.lane.b32.xlu0 %v5993, 70
        %v6022 = vpop.permute.xlu0 %6021
        %v6028 = vlaneseq
        %v6029 = vshrl.u32 %v6028, 7
        %v6030 = vsub.s32 0, %v6029
        %v6031 = vrot.slane %v5515, %v6030
        %v6032 = vsel %vm5653, %v5608, %v5604
        %v6033 = vsel %vm910, %v5612, %v6032
        %v6034 = vsel %vm5656, %v5698, %v6033
        %v6035 = vsel %vm912, %v5756, %v6034
        %v6036 = vsel %vm5659, %v5624, %v6035
        %v6037 = vsel %vm914, %v5628, %v6036
        %v6038 = vsel %vm5662, %v5632, %v6037
        %v6039 = vsel %vm5653, %v5760, %v5702
        %v6040 = vsel %vm910, %v5644, %v6039
        %v6041 = vsel %vm5656, %v5648, %v6040
        %v6042 = vsel %vm912, %v5652, %v6041
        %v6043 = vsel %vm5659, %v5706, %v6042
        %v6044 = vsel %vm914, %v5764, %v6043
        %v6045 = vsel %vm5662, %v5814, %v6044
        %v6046 = vsel %vm5653, %v5822, %v5818
        %v6047 = vsel %vm910, %v5860, %v6046
        %v6048 = vsel %vm5656, %v5898, %v6047
        %v6049 = vsel %vm912, %v5948, %v6048
        %v6050 = vsel %vm5659, %v5952, %v6049
        %v6051 = vsel %vm914, %v5956, %v6050
        %v6052 = vsel %vm5662, %v5993, %v6051
        %6053 = vrot.lane.b32.xlu0 %v6038, 80
        %v6054 = vpop.permute.xlu0 %6053
        %6055 = vrot.lane.b32.xlu0 %v6045, 80
        %v6056 = vpop.permute.xlu0 %6055
        %6057 = vrot.lane.b32.xlu0 %v6052, 80
        %v6058 = vpop.permute.xlu0 %6057
        %6059 = vrot.lane.b32.xlu0 %v6031, 80
        %v6060 = vpop.permute.xlu0 %6059
        %vm6065 = vcmask 80896
        %v6066 = vsel %vm6065, %v5663, %v5729
        %v6067 = vsel %vm6065, %v5670, %v5731
        %v6068 = vsel %vm6065, %v5677, %v5733
        %v6069 = vsel %vm6065, %v5652, %v5735
        %vm6070 = vcmask 162816
        %v6071 = vsel %vm6070, %v6066, %v5787
        %v6072 = vsel %vm6070, %v6067, %v5789
        %v6073 = vsel %vm6070, %v6068, %v5791
        %v6074 = vsel %vm6070, %v6069, %v5793
        %vm6075 = vcmask 244736
        %v6076 = vsel %vm6075, %v6071, %v5845
        %v6077 = vsel %vm6075, %v6072, %v5847
        %v6078 = vsel %vm6075, %v6073, %v5849
        %v6079 = vsel %vm6075, %v6074, %v5851
        %vm6080 = vcmask 326656
        %v6081 = vsel %vm6080, %v6076, %v5883
        %v6082 = vsel %vm6080, %v6077, %v5885
        %v6083 = vsel %vm6080, %v6078, %v5887
        %v6084 = vsel %vm6080, %v6079, %v5889
        %vm6085 = vcmask 408576
        %v6086 = vsel %vm6085, %v6081, %v5921
        %v6087 = vsel %vm6085, %v6082, %v5923
        %v6088 = vsel %vm6085, %v6083, %v5925
        %v6089 = vsel %vm6085, %v6084, %v5927
        %vm6090 = vcmask 490496
        %v6091 = vsel %vm6090, %v6086, %v5978
        %v6092 = vsel %vm6090, %v6087, %v5980
        %v6093 = vsel %vm6090, %v6088, %v5982
        %v6094 = vsel %vm6090, %v6089, %v5984
        %vm6095 = vcmask 572416
        %v6096 = vsel %vm6095, %v6091, %v6016
        %v6097 = vsel %vm6095, %v6092, %v6018
        %v6098 = vsel %vm6095, %v6093, %v6020
        %v6099 = vsel %vm6095, %v6094, %v6022
        %vm6100 = vcmask 654336
        %v6101 = vsel %vm6100, %v6096, %v6054
        %v6102 = vsel %vm6100, %v6097, %v6056
        %v6103 = vsel %vm6100, %v6098, %v6058
        %v6104 = vsel %vm6100, %v6099, %v6060
        %v6105 = vld [vmem:[%s4] sm:$0x3]
        %v6106 = vlaneseq
        %v6107 = vshrl.u32 %v6106, 7
        %v6108 = vsub.s32 0, %v6107
        %v6109 = vrot.slane %v6105, %v6108
        %vm6110 = vcmask 736256
        %v6112 = vsel %vm6110, %v6101, 0
        %v6115 = vsel %vm6110, %v6102, 0
        %v6118 = vsel %vm6110, %v6103, 0
        %v6121 = vsel %vm6110, %v6104, 0
        %vm6123 = vcmask 1041408
        %v6125 = vsel %vm6123, %v5527, 0
        %6127 = vmatprep.subr.mxu0 0.0
        %6128 = vmatpush1.msra.mxu0 0.0
        %6129 = vmatprep.subr.mxu0 0.0
        %6130 = vmatpush1.msra.mxu0 0.0
        %6131 = vmatprep.subr.mxu0 0.0
        %6132 = vmatpush1.msra.mxu0 0.0
        %6133 = vmatprep.subr.mxu0 0.0
        %6134 = vmatpush1.msra.mxu0 0.0
        %6135 = vmatprep.subr.mxu0 0.0
        %6136 = vmatpush1.msra.mxu0 %v6125
        %6137 = vmatprep.subr.mxu0 0.0
        %6138 = vmatpush1.msra.mxu0 %v5526
        %6139 = vmatprep.subr.mxu0 0.0
        %6140 = vmatpush1.msra.mxu0 %v5525
        %6141 = vmatprep.subr.mxu0 0.0
        %6142 = vmatpush1.msra.mxu0 %v5524
        %6143 = vmatprep.subr.mxu0 0.0
        %6144 = vmatpush1.msra.mxu0 %v5523
        %6145 = vmatprep.subr.mxu0 0.0
        %6146 = vmatpush1.msra.mxu0 %v5522
        %6147 = vmatprep.subr.mxu0 0.0
        %6148 = vmatpush1.msra.mxu0 %v5521
        %6149 = vmatprep.subr.mxu0 0.0
        %6150 = vmatpush1.msra.mxu0 %v5520
        %6151 = vmatprep.subr.mxu0 0.0
        %6152 = vmatpush1.msra.mxu0 %v5519
        %6153 = vmatprep.subr.mxu0 0.0
        %6154 = vmatpush1.msra.mxu0 %v5518
        %6155 = vmatprep.subr.mxu0 0.0
        %6156 = vmatpush1.msra.mxu0 %v5517
        %6157 = vmatprep.subr.mxu0 0.0
        %6158 = vmatpush1.msra.mxu0 %v5516
        %6159 = vmatprep.subr.mxu0 0.0
        %6160 = vmatpush2.msra.mxu0 0.0
        %6161 = vmatprep.subr.mxu0 0.0
        %6162 = vmatpush2.msra.mxu0 0.0
        %6163 = vmatprep.subr.mxu0 0.0
        %6164 = vmatpush2.msra.mxu0 0.0
        %6165 = vmatprep.subr.mxu0 0.0
        %6166 = vmatpush2.msra.mxu0 0.0
        %6167 = vmatprep.subr.mxu0 0.0
        %6168 = vmatpush2.msra.mxu0 0.0
        %6169 = vmatprep.subr.mxu0 0.0
        %6170 = vmatpush2.msra.mxu0 0.0
        %6171 = vmatprep.subr.mxu0 0.0
        %6172 = vmatpush2.msra.mxu0 0.0
        %6173 = vmatprep.subr.mxu0 0.0
        %6174 = vmatpush2.msra.mxu0 0.0
        %6175 = vmatprep.subr.mxu0 0.0
        %6176 = vmatpush2.msra.mxu0 0.0
        %6177 = vmatprep.subr.mxu0 0.0
        %6178 = vmatpush2.msra.mxu0 0.0
        %6179 = vmatprep.subr.mxu0 0.0
        %6180 = vmatpush2.msra.mxu0 0.0
        %6181 = vmatprep.subr.mxu0 0.0
        %6182 = vmatpush2.msra.mxu0 0.0
        %6183 = vmatprep.subr.mxu0 0.0
        %6184 = vmatpush2.msra.mxu0 0.0
        %6185 = vmatprep.subr.mxu0 0.0
        %6186 = vmatpush2.msra.mxu0 0.0
        %6187 = vmatprep.subr.mxu0 0.0
        %6188 = vmatpush2.msra.mxu0 0.0
        %6189 = vmatprep.subr.mxu0 0.0
        %6190 = vmatpush2.msra.mxu0 0.0
        %6191 = vmatprep.mubr.f32.mxu0 0.0
        %6192 = vmatmul.mubr.f32.gmra.mxu0 %v6112
        %v6193 = vpop.f32.mrf.mxu0
        %v6194 = vadd.f32 %v6109, %v6193
        %v6195 = vpop.f32.mrf.mxu0
        %6196 = vmatprep.mubr.f32.mxu0 0.0
        %6197 = vmatmul.mubr.f32.gmra.mxu0 %v6115
        %v6198 = vpop.f32.mrf.mxu0
        %v6199 = vadd.f32 %v6109, %v6198
        %v6200 = vpop.f32.mrf.mxu0
        %6201 = vmatprep.mubr.f32.mxu0 0.0
        %6202 = vmatmul.mubr.f32.gmra.mxu0 %v6118
        %v6203 = vpop.f32.mrf.mxu0
        %v6204 = vadd.f32 %v6109, %v6203
        %v6205 = vpop.f32.mrf.mxu0
        %6206 = vmatprep.mubr.f32.mxu0 0.0
        %6207 = vmatmul.mubr.f32.gmra.mxu0 %v6121
        %v6208 = vpop.f32.mrf.mxu0
        %v6209 = vadd.f32 %v6109, %v6208
        %v6210 = vpop.f32.mrf.mxu0
        %6211 = vdwg.mxu0
        %vm6212 = vcmp.ge.f32.partialorder %v6194, 0.0
        %vm6213 = vcmp.ge.f32.partialorder %v6199, 0.0
        %vm6214 = vcmp.ge.f32.partialorder %v6204, 0.0
        %vm6215 = vcmp.ge.f32.partialorder %v6209, 0.0
        %v6216 = vlaneseq
        %v6217 = vshrl.u32 %v6216, 7
        %v6218 = vsub.s32 1, %v6217
        %v6219 = vrot.slane %v6105, %v6218
        %v6220 = vmul.f32 %v6194, %v6219
        %v6221 = vmul.f32 %v6199, %v6219
        %v6222 = vmul.f32 %v6204, %v6219
        %v6223 = vmul.f32 %v6209, %v6219
        %v6224 = vsel %vm6212, %v6194, %v6220
        %v6225 = vsel %vm6213, %v6199, %v6221
        %v6226 = vsel %vm6214, %v6204, %v6222
        %v6227 = vsel %vm6215, %v6209, %v6223
        %v6232 = vcombine.high %v6224, %v6224
        %v6234 = vunpack.c.l.s4 1966171168
        %v6235 = vunpack.c.0.s8 %v6234
        %v6236 = vlaneseq
        %v6237 = vshrl.u32 %v6236, 7
        %v6238 = vsub.s32 %v6235, %v6237
        %v6239 = vrot.slane %v6224, %v6238
        %v6241 = vunpack.c.l.s4 1966171168
        %v6242 = vunpack.c.0.s8 %v6241
        %v6243 = vlaneseq
        %v6244 = vshrl.u32 %v6243, 7
        %v6245 = vsub.s32 %v6242, %v6244
        %v6246 = vrot.slane %v6232, %v6245
        %v6247 = vcombine.high %v6239, %v6239
        %v6248 = vcombine.high %v6246, %v6246
        %v6250 = vunpack.c.l.s4 1966171168
        %v6251 = vunpack.c.0.s8 %v6250
        %v6252 = vlaneseq
        %v6253 = vshrl.u32 %v6252, 7
        %v6254 = vsub.s32 %v6251, %v6253
        %v6255 = vrot.slane %v6239, %v6254
        %v6257 = vunpack.c.l.s4 1966171168
        %v6258 = vunpack.c.0.s8 %v6257
        %v6259 = vlaneseq
        %v6260 = vshrl.u32 %v6259, 7
        %v6261 = vsub.s32 %v6258, %v6260
        %v6262 = vrot.slane %v6246, %v6261
        %v6264 = vunpack.c.l.s4 1966171168
        %v6265 = vunpack.c.0.s8 %v6264
        %v6266 = vlaneseq
        %v6267 = vshrl.u32 %v6266, 7
        %v6268 = vsub.s32 %v6265, %v6267
        %v6269 = vrot.slane %v6247, %v6268
        %v6271 = vunpack.c.l.s4 1966171168
        %v6272 = vunpack.c.0.s8 %v6271
        %v6273 = vlaneseq
        %v6274 = vshrl.u32 %v6273, 7
        %v6275 = vsub.s32 %v6272, %v6274
        %v6276 = vrot.slane %v6248, %v6275
        %v6277 = vcombine.high %v6255, %v6255
        %v6278 = vcombine.high %v6262, %v6262
        %v6279 = vcombine.high %v6269, %v6269
        %v6280 = vcombine.high %v6276, %v6276
        %v6281 = vcombine.high %v6225, %v6225
        %v6283 = vunpack.c.l.s4 1966171168
        %v6284 = vunpack.c.0.s8 %v6283
        %v6285 = vlaneseq
        %v6286 = vshrl.u32 %v6285, 7
        %v6287 = vsub.s32 %v6284, %v6286
        %v6288 = vrot.slane %v6225, %v6287
        %v6290 = vunpack.c.l.s4 1966171168
        %v6291 = vunpack.c.0.s8 %v6290
        %v6292 = vlaneseq
        %v6293 = vshrl.u32 %v6292, 7
        %v6294 = vsub.s32 %v6291, %v6293
        %v6295 = vrot.slane %v6281, %v6294
        %v6296 = vcombine.high %v6288, %v6288
        %v6297 = vcombine.high %v6295, %v6295
        %v6299 = vunpack.c.l.s4 1966171168
        %v6300 = vunpack.c.0.s8 %v6299
        %v6301 = vlaneseq
        %v6302 = vshrl.u32 %v6301, 7
        %v6303 = vsub.s32 %v6300, %v6302
        %v6304 = vrot.slane %v6288, %v6303
        %v6306 = vunpack.c.l.s4 1966171168
        %v6307 = vunpack.c.0.s8 %v6306
        %v6308 = vlaneseq
        %v6309 = vshrl.u32 %v6308, 7
        %v6310 = vsub.s32 %v6307, %v6309
        %v6311 = vrot.slane %v6295, %v6310
        %v6313 = vunpack.c.l.s4 1966171168
        %v6314 = vunpack.c.0.s8 %v6313
        %v6315 = vlaneseq
        %v6316 = vshrl.u32 %v6315, 7
        %v6317 = vsub.s32 %v6314, %v6316
        %v6318 = vrot.slane %v6296, %v6317
        %v6320 = vunpack.c.l.s4 1966171168
        %v6321 = vunpack.c.0.s8 %v6320
        %v6322 = vlaneseq
        %v6323 = vshrl.u32 %v6322, 7
        %v6324 = vsub.s32 %v6321, %v6323
        %v6325 = vrot.slane %v6297, %v6324
        %v6326 = vcombine.high %v6304, %v6304
        %v6327 = vcombine.high %v6311, %v6311
        %v6328 = vcombine.high %v6318, %v6318
        %v6329 = vcombine.high %v6325, %v6325
        %v6330 = vcombine.high %v6226, %v6226
        %v6332 = vunpack.c.l.s4 1966171168
        %v6333 = vunpack.c.0.s8 %v6332
        %v6334 = vlaneseq
        %v6335 = vshrl.u32 %v6334, 7
        %v6336 = vsub.s32 %v6333, %v6335
        %v6337 = vrot.slane %v6226, %v6336
        %v6339 = vunpack.c.l.s4 1966171168
        %v6340 = vunpack.c.0.s8 %v6339
        %v6341 = vlaneseq
        %v6342 = vshrl.u32 %v6341, 7
        %v6343 = vsub.s32 %v6340, %v6342
        %v6344 = vrot.slane %v6330, %v6343
        %v6345 = vcombine.high %v6337, %v6337
        %v6346 = vcombine.high %v6344, %v6344
        %v6348 = vunpack.c.l.s4 1966171168
        %v6349 = vunpack.c.0.s8 %v6348
        %v6350 = vlaneseq
        %v6351 = vshrl.u32 %v6350, 7
        %v6352 = vsub.s32 %v6349, %v6351
        %v6353 = vrot.slane %v6337, %v6352
        %v6355 = vunpack.c.l.s4 1966171168
        %v6356 = vunpack.c.0.s8 %v6355
        %v6357 = vlaneseq
        %v6358 = vshrl.u32 %v6357, 7
        %v6359 = vsub.s32 %v6356, %v6358
        %v6360 = vrot.slane %v6344, %v6359
        %v6362 = vunpack.c.l.s4 1966171168
        %v6363 = vunpack.c.0.s8 %v6362
        %v6364 = vlaneseq
        %v6365 = vshrl.u32 %v6364, 7
        %v6366 = vsub.s32 %v6363, %v6365
        %v6367 = vrot.slane %v6345, %v6366
        %v6369 = vunpack.c.l.s4 1966171168
        %v6370 = vunpack.c.0.s8 %v6369
        %v6371 = vlaneseq
        %v6372 = vshrl.u32 %v6371, 7
        %v6373 = vsub.s32 %v6370, %v6372
        %v6374 = vrot.slane %v6346, %v6373
        %v6375 = vcombine.high %v6353, %v6353
        %v6376 = vcombine.high %v6360, %v6360
        %v6377 = vcombine.high %v6367, %v6367
        %v6378 = vcombine.high %v6374, %v6374
        %v6380 = vunpack.c.l.s4 1966171168
        %v6381 = vunpack.c.0.s8 %v6380
        %v6382 = vlaneseq
        %v6383 = vshrl.u32 %v6382, 7
        %v6384 = vsub.s32 %v6381, %v6383
        %v6385 = vrot.slane %v6227, %v6384
        %v6387 = vunpack.c.l.s4 1966171168
        %v6388 = vunpack.c.0.s8 %v6387
        %v6389 = vlaneseq
        %v6390 = vshrl.u32 %v6389, 7
        %v6391 = vsub.s32 %v6388, %v6390
        %v6392 = vrot.slane %v6385, %v6391
        %v6393 = vld [vmem:[%s5] sm:$0xff]
        %v6394 = vld [vmem:[%s5 + $0x8] sm:$0xff]
        %v6395 = vld [vmem:[%s5 + $0x10] sm:$0xff]
        %v6396 = vld [vmem:[%s5 + $0x18] sm:$0xff]
        %v6397 = vld [vmem:[%s5 + $0x20] sm:$0xff]
        %v6398 = vld [vmem:[%s5 + $0x28] sm:$0xff]
        %v6399 = vld [vmem:[%s5 + $0x30] sm:$0xff]
        %v6400 = vld [vmem:[%s5 + $0x38] sm:$0xff]
        %v6401 = vld [vmem:[%s5 + $0x40] sm:$0xff]
        %v6402 = vld [vmem:[%s5 + $0x48] sm:$0xff]
        %v6403 = vld [vmem:[%s5 + $0x50] sm:$0xff]
        %v6404 = vld [vmem:[%s5 + $0x58] sm:$0xff]
        %v6405 = vld [vmem:[%s5 + $0x60] sm:$0xff]
        %v6406 = vld [vmem:[%s5 + $0x68] sm:$0xff]
        %v6407 = vld [vmem:[%s5 + $0x70] sm:$0xff]
        %v6408 = vld [vmem:[%s5 + $0x78] sm:$0xff]
        %v6409 = vld [vmem:[%s5 + $0x80] sm:$0xff]
        %v6410 = vld [vmem:[%s5 + $0x88] sm:$0xff]
        %v6411 = vcombine.low %v6255, %v6269
        %v6412 = vcombine.low %v6277, %v6276
        %v6413 = vcombine.low %v6278, %v6280
        %v6414 = vcombine.low %v6326, %v6328
        %v6416 = vunpack.c.l.s4 1966171168
        %v6417 = vunpack.c.0.s8 %v6416
        %v6418 = vlaneseq
        %v6419 = vshrl.u32 %v6418, 7
        %v6420 = vsub.s32 %v6417, %v6419
        %v6421 = vrot.slane %v6411, %v6420
        %v6423 = vunpack.c.l.s4 1966171168
        %v6424 = vunpack.c.0.s8 %v6423
        %v6425 = vlaneseq
        %v6426 = vshrl.u32 %v6425, 7
        %v6427 = vsub.s32 %v6424, %v6426
        %v6428 = vrot.slane %v6412, %v6427
        %v6430 = vunpack.c.l.s4 1966171168
        %v6431 = vunpack.c.0.s8 %v6430
        %v6432 = vlaneseq
        %v6433 = vshrl.u32 %v6432, 7
        %v6434 = vsub.s32 %v6431, %v6433
        %v6435 = vrot.slane %v6413, %v6434
        %v6437 = vunpack.c.l.s4 1966171168
        %v6438 = vunpack.c.0.s8 %v6437
        %v6439 = vlaneseq
        %v6440 = vshrl.u32 %v6439, 7
        %v6441 = vsub.s32 %v6438, %v6440
        %v6442 = vrot.slane %v6414, %v6441
        %v6443 = vcombine.low %v6421, %v6428
        %v6444 = vcombine.low %v6435, %v6442
        %v6446 = vunpack.c.l.s4 1966171168
        %v6447 = vunpack.c.0.s8 %v6446
        %v6448 = vlaneseq
        %v6449 = vshrl.u32 %v6448, 7
        %v6450 = vsub.s32 %v6447, %v6449
        %v6451 = vrot.slane %v6443, %v6450
        %v6453 = vunpack.c.l.s4 1966171168
        %v6454 = vunpack.c.0.s8 %v6453
        %v6455 = vlaneseq
        %v6456 = vshrl.u32 %v6455, 7
        %v6457 = vsub.s32 %v6454, %v6456
        %v6458 = vrot.slane %v6444, %v6457
        %v6459 = vcombine.low %v6451, %v6458
        %v6461 = vunpack.c.l.s4 1966171168
        %v6462 = vunpack.c.0.s8 %v6461
        %v6463 = vlaneseq
        %v6464 = vshrl.u32 %v6463, 7
        %v6465 = vsub.s32 %v6462, %v6464
        %v6466 = vrot.slane %v6311, %v6465
        %v6468 = vunpack.c.l.s4 1966171168
        %v6469 = vunpack.c.0.s8 %v6468
        %v6470 = vlaneseq
        %v6471 = vshrl.u32 %v6470, 7
        %v6472 = vsub.s32 %v6469, %v6471
        %v6473 = vrot.slane %v6466, %v6472
        %v6476 = vcombine.low %v6269, %v6277
        %v6477 = vcombine.low %v6279, %v6278
        %v6478 = vcombine.low %v6280, %v6304
        %v6479 = vcombine.low %v6328, %v6311
        %v6481 = vunpack.c.l.s4 1966171168
        %v6482 = vunpack.c.0.s8 %v6481
        %v6483 = vlaneseq
        %v6484 = vshrl.u32 %v6483, 7
        %v6485 = vsub.s32 %v6482, %v6484
        %v6486 = vrot.slane %v6476, %v6485
        %v6488 = vunpack.c.l.s4 1966171168
        %v6489 = vunpack.c.0.s8 %v6488
        %v6490 = vlaneseq
        %v6491 = vshrl.u32 %v6490, 7
        %v6492 = vsub.s32 %v6489, %v6491
        %v6493 = vrot.slane %v6477, %v6492
        %v6495 = vunpack.c.l.s4 1966171168
        %v6496 = vunpack.c.0.s8 %v6495
        %v6497 = vlaneseq
        %v6498 = vshrl.u32 %v6497, 7
        %v6499 = vsub.s32 %v6496, %v6498
        %v6500 = vrot.slane %v6478, %v6499
        %v6502 = vunpack.c.l.s4 1966171168
        %v6503 = vunpack.c.0.s8 %v6502
        %v6504 = vlaneseq
        %v6505 = vshrl.u32 %v6504, 7
        %v6506 = vsub.s32 %v6503, %v6505
        %v6507 = vrot.slane %v6479, %v6506
        %v6508 = vcombine.low %v6486, %v6493
        %v6509 = vcombine.low %v6500, %v6507
        %v6511 = vunpack.c.l.s4 1966171168
        %v6512 = vunpack.c.0.s8 %v6511
        %v6513 = vlaneseq
        %v6514 = vshrl.u32 %v6513, 7
        %v6515 = vsub.s32 %v6512, %v6514
        %v6516 = vrot.slane %v6508, %v6515
        %v6518 = vunpack.c.l.s4 1966171168
        %v6519 = vunpack.c.0.s8 %v6518
        %v6520 = vlaneseq
        %v6521 = vshrl.u32 %v6520, 7
        %v6522 = vsub.s32 %v6519, %v6521
        %v6523 = vrot.slane %v6509, %v6522
        %v6524 = vcombine.low %v6516, %v6523
        %v6526 = vunpack.c.l.s4 1966171168
        %v6527 = vunpack.c.0.s8 %v6526
        %v6528 = vlaneseq
        %v6529 = vshrl.u32 %v6528, 7
        %v6530 = vsub.s32 %v6527, %v6529
        %v6531 = vrot.slane %v6325, %v6530
        %v6533 = vunpack.c.l.s4 1966171168
        %v6534 = vunpack.c.0.s8 %v6533
        %v6535 = vlaneseq
        %v6536 = vshrl.u32 %v6535, 7
        %v6537 = vsub.s32 %v6534, %v6536
        %v6538 = vrot.slane %v6531, %v6537
        %6539 = vrot.lane.b32.xlu0 %v6524, 16
        %v6540 = vpop.permute.xlu0 %6539
        %6541 = vrot.lane.b32.xlu0 %v6538, 16
        %v6542 = vpop.permute.xlu0 %6541
        %v6545 = vcombine.low %v6277, %v6279
        %v6546 = vcombine.low %v6262, %v6280
        %v6547 = vcombine.low %v6304, %v6318
        %v6548 = vcombine.low %v6311, %v6325
        %v6550 = vunpack.c.l.s4 1966171168
        %v6551 = vunpack.c.0.s8 %v6550
        %v6552 = vlaneseq
        %v6553 = vshrl.u32 %v6552, 7
        %v6554 = vsub.s32 %v6551, %v6553
        %v6555 = vrot.slane %v6545, %v6554
        %v6557 = vunpack.c.l.s4 1966171168
        %v6558 = vunpack.c.0.s8 %v6557
        %v6559 = vlaneseq
        %v6560 = vshrl.u32 %v6559, 7
        %v6561 = vsub.s32 %v6558, %v6560
        %v6562 = vrot.slane %v6546, %v6561
        %v6564 = vunpack.c.l.s4 1966171168
        %v6565 = vunpack.c.0.s8 %v6564
        %v6566 = vlaneseq
        %v6567 = vshrl.u32 %v6566, 7
        %v6568 = vsub.s32 %v6565, %v6567
        %v6569 = vrot.slane %v6547, %v6568
        %v6571 = vunpack.c.l.s4 1966171168
        %v6572 = vunpack.c.0.s8 %v6571
        %v6573 = vlaneseq
        %v6574 = vshrl.u32 %v6573, 7
        %v6575 = vsub.s32 %v6572, %v6574
        %v6576 = vrot.slane %v6548, %v6575
        %v6577 = vcombine.low %v6555, %v6562
        %v6578 = vcombine.low %v6569, %v6576
        %v6580 = vunpack.c.l.s4 1966171168
        %v6581 = vunpack.c.0.s8 %v6580
        %v6582 = vlaneseq
        %v6583 = vshrl.u32 %v6582, 7
        %v6584 = vsub.s32 %v6581, %v6583
        %v6585 = vrot.slane %v6577, %v6584
        %v6587 = vunpack.c.l.s4 1966171168
        %v6588 = vunpack.c.0.s8 %v6587
        %v6589 = vlaneseq
        %v6590 = vshrl.u32 %v6589, 7
        %v6591 = vsub.s32 %v6588, %v6590
        %v6592 = vrot.slane %v6578, %v6591
        %v6593 = vcombine.low %v6585, %v6592
        %v6595 = vunpack.c.l.s4 1966171168
        %v6596 = vunpack.c.0.s8 %v6595
        %v6597 = vlaneseq
        %v6598 = vshrl.u32 %v6597, 7
        %v6599 = vsub.s32 %v6596, %v6598
        %v6600 = vrot.slane %v6327, %v6599
        %v6602 = vunpack.c.l.s4 1966171168
        %v6603 = vunpack.c.0.s8 %v6602
        %v6604 = vlaneseq
        %v6605 = vshrl.u32 %v6604, 7
        %v6606 = vsub.s32 %v6603, %v6605
        %v6607 = vrot.slane %v6600, %v6606
        %6608 = vrot.lane.b32.xlu0 %v6593, 32
        %v6609 = vpop.permute.xlu0 %6608
        %6610 = vrot.lane.b32.xlu0 %v6607, 32
        %v6611 = vpop.permute.xlu0 %6610
        %v6614 = vcombine.low %v6276, %v6278
        %v6615 = vcombine.low %v6280, %v6326
        %v6616 = vcombine.low %v6329, %v6353
        %v6618 = vunpack.c.l.s4 1966171168
        %v6619 = vunpack.c.0.s8 %v6618
        %v6620 = vlaneseq
        %v6621 = vshrl.u32 %v6620, 7
        %v6622 = vsub.s32 %v6619, %v6621
        %v6623 = vrot.slane %v6614, %v6622
        %v6625 = vunpack.c.l.s4 1966171168
        %v6626 = vunpack.c.0.s8 %v6625
        %v6627 = vlaneseq
        %v6628 = vshrl.u32 %v6627, 7
        %v6629 = vsub.s32 %v6626, %v6628
        %v6630 = vrot.slane %v6615, %v6629
        %v6632 = vunpack.c.l.s4 1966171168
        %v6633 = vunpack.c.0.s8 %v6632
        %v6634 = vlaneseq
        %v6635 = vshrl.u32 %v6634, 7
        %v6636 = vsub.s32 %v6633, %v6635
        %v6637 = vrot.slane %v6616, %v6636
        %v6638 = vcombine.low %v6623, %v6630
        %v6639 = vcombine.low %v6507, %v6637
        %v6641 = vunpack.c.l.s4 1966171168
        %v6642 = vunpack.c.0.s8 %v6641
        %v6643 = vlaneseq
        %v6644 = vshrl.u32 %v6643, 7
        %v6645 = vsub.s32 %v6642, %v6644
        %v6646 = vrot.slane %v6638, %v6645
        %v6648 = vunpack.c.l.s4 1966171168
        %v6649 = vunpack.c.0.s8 %v6648
        %v6650 = vlaneseq
        %v6651 = vshrl.u32 %v6650, 7
        %v6652 = vsub.s32 %v6649, %v6651
        %v6653 = vrot.slane %v6639, %v6652
        %v6654 = vcombine.low %v6646, %v6653
        %v6656 = vunpack.c.l.s4 1966171168
        %v6657 = vunpack.c.0.s8 %v6656
        %v6658 = vlaneseq
        %v6659 = vshrl.u32 %v6658, 7
        %v6660 = vsub.s32 %v6657, %v6659
        %v6661 = vrot.slane %v6367, %v6660
        %v6663 = vunpack.c.l.s4 1966171168
        %v6664 = vunpack.c.0.s8 %v6663
        %v6665 = vlaneseq
        %v6666 = vshrl.u32 %v6665, 7
        %v6667 = vsub.s32 %v6664, %v6666
        %v6668 = vrot.slane %v6661, %v6667
        %6669 = vrot.lane.b32.xlu0 %v6654, 48
        %v6670 = vpop.permute.xlu0 %6669
        %6671 = vrot.lane.b32.xlu0 %v6668, 48
        %v6672 = vpop.permute.xlu0 %6671
        %v6675 = vcombine.low %v6304, %v6328
        %v6676 = vcombine.low %v6353, %v6367
        %v6678 = vunpack.c.l.s4 1966171168
        %v6679 = vunpack.c.0.s8 %v6678
        %v6680 = vlaneseq
        %v6681 = vshrl.u32 %v6680, 7
        %v6682 = vsub.s32 %v6679, %v6681
        %v6683 = vrot.slane %v6675, %v6682
        %v6685 = vunpack.c.l.s4 1966171168
        %v6686 = vunpack.c.0.s8 %v6685
        %v6687 = vlaneseq
        %v6688 = vshrl.u32 %v6687, 7
        %v6689 = vsub.s32 %v6686, %v6688
        %v6690 = vrot.slane %v6676, %v6689
        %v6691 = vcombine.low %v6435, %v6683
        %v6692 = vcombine.low %v6576, %v6690
        %v6694 = vunpack.c.l.s4 1966171168
        %v6695 = vunpack.c.0.s8 %v6694
        %v6696 = vlaneseq
        %v6697 = vshrl.u32 %v6696, 7
        %v6698 = vsub.s32 %v6695, %v6697
        %v6699 = vrot.slane %v6691, %v6698
        %v6701 = vunpack.c.l.s4 1966171168
        %v6702 = vunpack.c.0.s8 %v6701
        %v6703 = vlaneseq
        %v6704 = vshrl.u32 %v6703, 7
        %v6705 = vsub.s32 %v6702, %v6704
        %v6706 = vrot.slane %v6692, %v6705
        %v6707 = vcombine.low %v6699, %v6706
        %v6709 = vunpack.c.l.s4 1966171168
        %v6710 = vunpack.c.0.s8 %v6709
        %v6711 = vlaneseq
        %v6712 = vshrl.u32 %v6711, 7
        %v6713 = vsub.s32 %v6710, %v6712
        %v6714 = vrot.slane %v6375, %v6713
        %v6716 = vunpack.c.l.s4 1966171168
        %v6717 = vunpack.c.0.s8 %v6716
        %v6718 = vlaneseq
        %v6719 = vshrl.u32 %v6718, 7
        %v6720 = vsub.s32 %v6717, %v6719
        %v6721 = vrot.slane %v6714, %v6720
        %6722 = vrot.lane.b32.xlu0 %v6707, 64
        %v6723 = vpop.permute.xlu0 %6722
        %6724 = vrot.lane.b32.xlu0 %v6721, 64
        %v6725 = vpop.permute.xlu0 %6724
        %v6728 = vcombine.low %v6318, %v6311
        %v6729 = vcombine.low %v6325, %v6327
        %v6730 = vcombine.low %v6367, %v6375
        %v6732 = vunpack.c.l.s4 1966171168
        %v6733 = vunpack.c.0.s8 %v6732
        %v6734 = vlaneseq
        %v6735 = vshrl.u32 %v6734, 7
        %v6736 = vsub.s32 %v6733, %v6735
        %v6737 = vrot.slane %v6728, %v6736
        %v6739 = vunpack.c.l.s4 1966171168
        %v6740 = vunpack.c.0.s8 %v6739
        %v6741 = vlaneseq
        %v6742 = vshrl.u32 %v6741, 7
        %v6743 = vsub.s32 %v6740, %v6742
        %v6744 = vrot.slane %v6729, %v6743
        %v6746 = vunpack.c.l.s4 1966171168
        %v6747 = vunpack.c.0.s8 %v6746
        %v6748 = vlaneseq
        %v6749 = vshrl.u32 %v6748, 7
        %v6750 = vsub.s32 %v6747, %v6749
        %v6751 = vrot.slane %v6730, %v6750
        %v6752 = vcombine.low %v6500, %v6737
        %v6753 = vcombine.low %v6744, %v6751
        %v6755 = vunpack.c.l.s4 1966171168
        %v6756 = vunpack.c.0.s8 %v6755
        %v6757 = vlaneseq
        %v6758 = vshrl.u32 %v6757, 7
        %v6759 = vsub.s32 %v6756, %v6758
        %v6760 = vrot.slane %v6752, %v6759
        %v6762 = vunpack.c.l.s4 1966171168
        %v6763 = vunpack.c.0.s8 %v6762
        %v6764 = vlaneseq
        %v6765 = vshrl.u32 %v6764, 7
        %v6766 = vsub.s32 %v6763, %v6765
        %v6767 = vrot.slane %v6753, %v6766
        %v6768 = vcombine.low %v6760, %v6767
        %v6770 = vunpack.c.l.s4 1966171168
        %v6771 = vunpack.c.0.s8 %v6770
        %v6772 = vlaneseq
        %v6773 = vshrl.u32 %v6772, 7
        %v6774 = vsub.s32 %v6771, %v6773
        %v6775 = vrot.slane %v6377, %v6774
        %v6777 = vunpack.c.l.s4 1966171168
        %v6778 = vunpack.c.0.s8 %v6777
        %v6779 = vlaneseq
        %v6780 = vshrl.u32 %v6779, 7
        %v6781 = vsub.s32 %v6778, %v6780
        %v6782 = vrot.slane %v6775, %v6781
        %6783 = vrot.lane.b32.xlu0 %v6768, 80
        %v6784 = vpop.permute.xlu0 %6783
        %6785 = vrot.lane.b32.xlu0 %v6782, 80
        %v6786 = vpop.permute.xlu0 %6785
        %v6789 = vcombine.low %v6311, %v6329
        %v6790 = vcombine.low %v6360, %v6374
        %v6792 = vunpack.c.l.s4 1966171168
        %v6793 = vunpack.c.0.s8 %v6792
        %v6794 = vlaneseq
        %v6795 = vshrl.u32 %v6794, 7
        %v6796 = vsub.s32 %v6793, %v6795
        %v6797 = vrot.slane %v6789, %v6796
        %v6799 = vunpack.c.l.s4 1966171168
        %v6800 = vunpack.c.0.s8 %v6799
        %v6801 = vlaneseq
        %v6802 = vshrl.u32 %v6801, 7
        %v6803 = vsub.s32 %v6800, %v6802
        %v6804 = vrot.slane %v6790, %v6803
        %v6805 = vcombine.low %v6442, %v6797
        %v6806 = vcombine.low %v6690, %v6804
        %v6808 = vunpack.c.l.s4 1966171168
        %v6809 = vunpack.c.0.s8 %v6808
        %v6810 = vlaneseq
        %v6811 = vshrl.u32 %v6810, 7
        %v6812 = vsub.s32 %v6809, %v6811
        %v6813 = vrot.slane %v6805, %v6812
        %v6815 = vunpack.c.l.s4 1966171168
        %v6816 = vunpack.c.0.s8 %v6815
        %v6817 = vlaneseq
        %v6818 = vshrl.u32 %v6817, 7
        %v6819 = vsub.s32 %v6816, %v6818
        %v6820 = vrot.slane %v6806, %v6819
        %v6821 = vcombine.low %v6813, %v6820
        %v6823 = vunpack.c.l.s4 1966171168
        %v6824 = vunpack.c.0.s8 %v6823
        %v6825 = vlaneseq
        %v6826 = vshrl.u32 %v6825, 7
        %v6827 = vsub.s32 %v6824, %v6826
        %v6828 = vrot.slane %v6376, %v6827
        %v6830 = vunpack.c.l.s4 1966171168
        %v6831 = vunpack.c.0.s8 %v6830
        %v6832 = vlaneseq
        %v6833 = vshrl.u32 %v6832, 7
        %v6834 = vsub.s32 %v6831, %v6833
        %v6835 = vrot.slane %v6828, %v6834
        %6836 = vrot.lane.b32.xlu0 %v6821, 96
        %v6837 = vpop.permute.xlu0 %6836
        %6838 = vrot.lane.b32.xlu0 %v6835, 96
        %v6839 = vpop.permute.xlu0 %6838
        %v6842 = vcombine.low %v6325, %v6353
        %v6843 = vcombine.low %v6374, %v6376
        %v6845 = vunpack.c.l.s4 1966171168
        %v6846 = vunpack.c.0.s8 %v6845
        %v6847 = vlaneseq
        %v6848 = vshrl.u32 %v6847, 7
        %v6849 = vsub.s32 %v6846, %v6848
        %v6850 = vrot.slane %v6842, %v6849
        %v6852 = vunpack.c.l.s4 1966171168
        %v6853 = vunpack.c.0.s8 %v6852
        %v6854 = vlaneseq
        %v6855 = vshrl.u32 %v6854, 7
        %v6856 = vsub.s32 %v6853, %v6855
        %v6857 = vrot.slane %v6843, %v6856
        %v6858 = vcombine.low %v6507, %v6850
        %v6859 = vcombine.low %v6751, %v6857
        %v6861 = vunpack.c.l.s4 1966171168
        %v6862 = vunpack.c.0.s8 %v6861
        %v6863 = vlaneseq
        %v6864 = vshrl.u32 %v6863, 7
        %v6865 = vsub.s32 %v6862, %v6864
        %v6866 = vrot.slane %v6858, %v6865
        %v6868 = vunpack.c.l.s4 1966171168
        %v6869 = vunpack.c.0.s8 %v6868
        %v6870 = vlaneseq
        %v6871 = vshrl.u32 %v6870, 7
        %v6872 = vsub.s32 %v6869, %v6871
        %v6873 = vrot.slane %v6859, %v6872
        %v6874 = vcombine.low %v6866, %v6873
        %v6876 = vunpack.c.l.s4 1966171168
        %v6877 = vunpack.c.0.s8 %v6876
        %v6878 = vlaneseq
        %v6879 = vshrl.u32 %v6878, 7
        %v6880 = vsub.s32 %v6877, %v6879
        %v6881 = vrot.slane %v6378, %v6880
        %v6883 = vunpack.c.l.s4 1966171168
        %v6884 = vunpack.c.0.s8 %v6883
        %v6885 = vlaneseq
        %v6886 = vshrl.u32 %v6885, 7
        %v6887 = vsub.s32 %v6884, %v6886
        %v6888 = vrot.slane %v6881, %v6887
        %6889 = vrot.lane.b32.xlu0 %v6874, 112
        %v6890 = vpop.permute.xlu0 %6889
        %6891 = vrot.lane.b32.xlu0 %v6888, 112
        %v6892 = vpop.permute.xlu0 %6891
        %v6895 = vcombine.low %v6327, %v6367
        %v6896 = vcombine.low %v6375, %v6377
        %v6897 = vcombine.low %v6376, %v6378
        %v6899 = vunpack.c.l.s4 1966171168
        %v6900 = vunpack.c.0.s8 %v6899
        %v6901 = vlaneseq
        %v6902 = vshrl.u32 %v6901, 7
        %v6903 = vsub.s32 %v6900, %v6902
        %v6904 = vrot.slane %v6895, %v6903
        %v6906 = vunpack.c.l.s4 1966171168
        %v6907 = vunpack.c.0.s8 %v6906
        %v6908 = vlaneseq
        %v6909 = vshrl.u32 %v6908, 7
        %v6910 = vsub.s32 %v6907, %v6909
        %v6911 = vrot.slane %v6896, %v6910
        %v6913 = vunpack.c.l.s4 1966171168
        %v6914 = vunpack.c.0.s8 %v6913
        %v6915 = vlaneseq
        %v6916 = vshrl.u32 %v6915, 7
        %v6917 = vsub.s32 %v6914, %v6916
        %v6918 = vrot.slane %v6897, %v6917
        %v6919 = vcombine.low %v6576, %v6904
        %v6920 = vcombine.low %v6911, %v6918
        %v6922 = vunpack.c.l.s4 1966171168
        %v6923 = vunpack.c.0.s8 %v6922
        %v6924 = vlaneseq
        %v6925 = vshrl.u32 %v6924, 7
        %v6926 = vsub.s32 %v6923, %v6925
        %v6927 = vrot.slane %v6919, %v6926
        %v6929 = vunpack.c.l.s4 1966171168
        %v6930 = vunpack.c.0.s8 %v6929
        %v6931 = vlaneseq
        %v6932 = vshrl.u32 %v6931, 7
        %v6933 = vsub.s32 %v6930, %v6932
        %v6934 = vrot.slane %v6920, %v6933
        %v6935 = vcombine.low %v6927, %v6934
        %v6937 = vunpack.c.l.s4 1966171168
        %v6938 = vunpack.c.0.s8 %v6937
        %v6939 = vlaneseq
        %v6940 = vshrl.u32 %v6939, 7
        %v6941 = vsub.s32 %v6938, %v6940
        %v6942 = vrot.slane %v6392, %v6941
        %v6944 = vunpack.c.l.s4 1966171168
        %v6945 = vunpack.c.0.s8 %v6944
        %v6946 = vlaneseq
        %v6947 = vshrl.u32 %v6946, 7
        %v6948 = vsub.s32 %v6945, %v6947
        %v6949 = vrot.slane %v6942, %v6948
        %vm6950 = vcmask 130048
        %v6951 = vsel %vm6950, %v6459, %v6540
        %v6952 = vsel %vm6950, %v6473, %v6542
        %vm6953 = vcmask 261120
        %v6954 = vsel %vm6953, %v6951, %v6609
        %v6955 = vsel %vm6953, %v6952, %v6611
        %vm6956 = vcmask 392192
        %v6957 = vsel %vm6956, %v6954, %v6670
        %v6958 = vsel %vm6956, %v6955, %v6672
        %vm6959 = vcmask 523264
        %v6960 = vsel %vm6959, %v6957, %v6723
        %v6961 = vsel %vm6959, %v6958, %v6725
        %v6962 = vsel %vm6100, %v6960, %v6784
        %v6963 = vsel %vm6100, %v6961, %v6786
        %vm6964 = vcmask 785408
        %v6965 = vsel %vm6964, %v6962, %v6837
        %v6966 = vsel %vm6964, %v6963, %v6839
        %vm6967 = vcmask 916480
        %v6968 = vsel %vm6967, %v6965, %v6890
        %v6969 = vsel %vm6967, %v6966, %v6892
        %v6970 = vld [vmem:[%s6] sm:$0x3]
        %v6971 = vlaneseq
        %v6972 = vshrl.u32 %v6971, 7
        %v6973 = vsub.s32 0, %v6972
        %v6974 = vrot.slane %v6970, %v6973
        %v6975 = vsel %vm6950, %v6935, 0
        %v6977 = vsel %vm6950, %v6949, 0
        %6979 = vmatprep.subr.mxu0 0.0
        %6980 = vmatpush1.msra.mxu0 %v6408
        %6981 = vmatprep.subr.mxu0 0.0
        %6982 = vmatpush1.msra.mxu0 %v6407
        %6983 = vmatprep.subr.mxu0 0.0
        %6984 = vmatpush1.msra.mxu0 %v6406
        %6985 = vmatprep.subr.mxu0 0.0
        %6986 = vmatpush1.msra.mxu0 %v6405
        %6987 = vmatprep.subr.mxu0 0.0
        %6988 = vmatpush1.msra.mxu0 %v6404
        %6989 = vmatprep.subr.mxu0 0.0
        %6990 = vmatpush1.msra.mxu0 %v6403
        %6991 = vmatprep.subr.mxu0 0.0
        %6992 = vmatpush1.msra.mxu0 %v6402
        %6993 = vmatprep.subr.mxu0 0.0
        %6994 = vmatpush1.msra.mxu0 %v6401
        %6995 = vmatprep.subr.mxu0 0.0
        %6996 = vmatpush1.msra.mxu0 %v6400
        %6997 = vmatprep.subr.mxu0 0.0
        %6998 = vmatpush1.msra.mxu0 %v6399
        %6999 = vmatprep.subr.mxu0 0.0
        %7000 = vmatpush1.msra.mxu0 %v6398
        %7001 = vmatprep.subr.mxu0 0.0
        %7002 = vmatpush1.msra.mxu0 %v6397
        %7003 = vmatprep.subr.mxu0 0.0
        %7004 = vmatpush1.msra.mxu0 %v6396
        %7005 = vmatprep.subr.mxu0 0.0
        %7006 = vmatpush1.msra.mxu0 %v6395
        %7007 = vmatprep.subr.mxu0 0.0
        %7008 = vmatpush1.msra.mxu0 %v6394
        %7009 = vmatprep.subr.mxu0 0.0
        %7010 = vmatpush1.msra.mxu0 %v6393
        %7011 = vmatprep.subr.mxu0 0.0
        %7012 = vmatpush2.msra.mxu0 0.0
        %7013 = vmatprep.subr.mxu0 0.0
        %7014 = vmatpush2.msra.mxu0 0.0
        %7015 = vmatprep.subr.mxu0 0.0
        %7016 = vmatpush2.msra.mxu0 0.0
        %7017 = vmatprep.subr.mxu0 0.0
        %7018 = vmatpush2.msra.mxu0 0.0
        %7019 = vmatprep.subr.mxu0 0.0
        %7020 = vmatpush2.msra.mxu0 0.0
        %7021 = vmatprep.subr.mxu0 0.0
        %7022 = vmatpush2.msra.mxu0 0.0
        %7023 = vmatprep.subr.mxu0 0.0
        %7024 = vmatpush2.msra.mxu0 0.0
        %7025 = vmatprep.subr.mxu0 0.0
        %7026 = vmatpush2.msra.mxu0 0.0
        %7027 = vmatprep.subr.mxu0 0.0
        %7028 = vmatpush2.msra.mxu0 0.0
        %7029 = vmatprep.subr.mxu0 0.0
        %7030 = vmatpush2.msra.mxu0 0.0
        %7031 = vmatprep.subr.mxu0 0.0
        %7032 = vmatpush2.msra.mxu0 0.0
        %7033 = vmatprep.subr.mxu0 0.0
        %7034 = vmatpush2.msra.mxu0 0.0
        %7035 = vmatprep.subr.mxu0 0.0
        %7036 = vmatpush2.msra.mxu0 0.0
        %7037 = vmatprep.subr.mxu0 0.0
        %7038 = vmatpush2.msra.mxu0 0.0
        %7039 = vmatprep.subr.mxu0 0.0
        %7040 = vmatpush2.msra.mxu0 %v6410
        %7041 = vmatprep.subr.mxu0 0.0
        %7042 = vmatpush2.msra.mxu0 %v6409
        %7043 = vmatprep.mubr.f32.mxu0 %v6975
        %7044 = vmatmul.mubr.f32.gmra.mxu0 %v6968
        %v7045 = vpop.f32.mrf.mxu0
        %v7046 = vadd.f32 %v6974, %v7045
        %v7047 = vpop.f32.mrf.mxu0
        %7048 = vmatprep.mubr.f32.mxu0 %v6977
        %7049 = vmatmul.mubr.f32.gmra.mxu0 %v6969
        %v7050 = vpop.f32.mrf.mxu0
        %v7051 = vadd.f32 %v6974, %v7050
        %v7052 = vpop.f32.mrf.mxu0
        %7053 = vdwg.mxu0
        %vm7054 = vcmp.ge.f32.partialorder %v7046, 0.0
        %vm7055 = vcmp.ge.f32.partialorder %v7051, 0.0
        %v7056 = vlaneseq
        %v7057 = vshrl.u32 %v7056, 7
        %v7058 = vsub.s32 1, %v7057
        %v7059 = vrot.slane %v6970, %v7058
        %v7060 = vmul.f32 %v7046, %v7059
        %v7061 = vmul.f32 %v7051, %v7059
        %v7062 = vsel %vm7054, %v7046, %v7060
        %v7063 = vsel %vm7055, %v7051, %v7061
        %v7064 = vld [vmem:[%s7] sm:$0xff]
        %v7065 = vld [vmem:[%s7 + $0x8] sm:$0xff]
        %v7066 = vld [vmem:[%s7 + $0x10] sm:$0xff]
        %v7067 = vld [vmem:[%s7 + $0x18] sm:$0xff]
        %v7068 = vld [vmem:[%s8] sm:$0x1]
        %v7070 = vlaneseq
        %v7071 = vshrl.u32 %v7070, 7
        %v7072 = vsub.s32 0, %v7071
        %v7073 = vrot.slane %v7068, %v7072
        %v7076 = vsel %vm6953, %v7062, 0
        %v7079 = vsel %vm6953, %v7063, 0
        %7081 = vmatprep.subr.mxu0 0.0
        %7082 = vmatpush1.msra.mxu0 0.0
        %7083 = vmatprep.subr.mxu0 0.0
        %7084 = vmatpush1.msra.mxu0 0.0
        %7085 = vmatprep.subr.mxu0 0.0
        %7086 = vmatpush1.msra.mxu0 0.0
        %7087 = vmatprep.subr.mxu0 0.0
        %7088 = vmatpush1.msra.mxu0 0.0
        %7089 = vmatprep.subr.mxu0 0.0
        %7090 = vmatpush1.msra.mxu0 0.0
        %7091 = vmatprep.subr.mxu0 0.0
        %7092 = vmatpush1.msra.mxu0 0.0
        %7093 = vmatprep.subr.mxu0 0.0
        %7094 = vmatpush1.msra.mxu0 0.0
        %7095 = vmatprep.subr.mxu0 0.0
        %7096 = vmatpush1.msra.mxu0 0.0
        %7097 = vmatprep.subr.mxu0 0.0
        %7098 = vmatpush1.msra.mxu0 0.0
        %7099 = vmatprep.subr.mxu0 0.0
        %7100 = vmatpush1.msra.mxu0 0.0
        %7101 = vmatprep.subr.mxu0 0.0
        %7102 = vmatpush1.msra.mxu0 0.0
        %7103 = vmatprep.subr.mxu0 0.0
        %7104 = vmatpush1.msra.mxu0 0.0
        %7105 = vmatprep.subr.mxu0 0.0
        %7106 = vmatpush1.msra.mxu0 %v7067
        %7107 = vmatprep.subr.mxu0 0.0
        %7108 = vmatpush1.msra.mxu0 %v7066
        %7109 = vmatprep.subr.mxu0 0.0
        %7110 = vmatpush1.msra.mxu0 %v7065
        %7111 = vmatprep.subr.mxu0 0.0
        %7112 = vmatpush1.msra.mxu0 %v7064
        %7113 = vmatprep.subr.mxu0 0.0
        %7114 = vmatpush2.msra.mxu0 0.0
        %7115 = vmatprep.subr.mxu0 0.0
        %7116 = vmatpush2.msra.mxu0 0.0
        %7117 = vmatprep.subr.mxu0 0.0
        %7118 = vmatpush2.msra.mxu0 0.0
        %7119 = vmatprep.subr.mxu0 0.0
        %7120 = vmatpush2.msra.mxu0 0.0
        %7121 = vmatprep.subr.mxu0 0.0
        %7122 = vmatpush2.msra.mxu0 0.0
        %7123 = vmatprep.subr.mxu0 0.0
        %7124 = vmatpush2.msra.mxu0 0.0
        %7125 = vmatprep.subr.mxu0 0.0
        %7126 = vmatpush2.msra.mxu0 0.0
        %7127 = vmatprep.subr.mxu0 0.0
        %7128 = vmatpush2.msra.mxu0 0.0
        %7129 = vmatprep.subr.mxu0 0.0
        %7130 = vmatpush2.msra.mxu0 0.0
        %7131 = vmatprep.subr.mxu0 0.0
        %7132 = vmatpush2.msra.mxu0 0.0
        %7133 = vmatprep.subr.mxu0 0.0
        %7134 = vmatpush2.msra.mxu0 0.0
        %7135 = vmatprep.subr.mxu0 0.0
        %7136 = vmatpush2.msra.mxu0 0.0
        %7137 = vmatprep.subr.mxu0 0.0
        %7138 = vmatpush2.msra.mxu0 0.0
        %7139 = vmatprep.subr.mxu0 0.0
        %7140 = vmatpush2.msra.mxu0 0.0
        %7141 = vmatprep.subr.mxu0 0.0
        %7142 = vmatpush2.msra.mxu0 0.0
        %7143 = vmatprep.subr.mxu0 0.0
        %7144 = vmatpush2.msra.mxu0 0.0
        %7145 = vmatprep.mubr.f32.mxu0 0.0
        %7146 = vmatmul.mubr.f32.gmra.mxu0 %v7076
        %v7147 = vpop.f32.mrf.mxu0
        %v7148 = vadd.f32 %v7073, %v7147
        %v7149 = vpop.f32.mrf.mxu0
        %7150 = vmatprep.mubr.f32.mxu0 0.0
        %7151 = vmatmul.mubr.f32.gmra.mxu0 %v7079
        %v7152 = vpop.f32.mrf.mxu0
        %v7153 = vadd.f32 %v7073, %v7152
        %v7154 = vpop.f32.mrf.mxu0
        %7155 = vdwg.mxu0
        %7156 = vxpose.xlu0.b32.start [1/16] %v7148, 128
        %7157 = vxpose.xlu0.b32.cont [2/16] %v7153, 128
        %7158 = vxpose.xlu0.b32.cont [3/16] 0.0, 128
        %7159 = vxpose.xlu0.b32.cont [4/16] 0.0, 128
        %7160 = vxpose.xlu0.b32.cont [5/16] 0.0, 128
        %7161 = vxpose.xlu0.b32.cont [6/16] 0.0, 128
        %7162 = vxpose.xlu0.b32.cont [7/16] 0.0, 128
        %7163 = vxpose.xlu0.b32.cont [8/16] 0.0, 128
        %7164 = vxpose.xlu0.b32.cont [9/16] 0.0, 128
        %7165 = vxpose.xlu0.b32.cont [10/16] 0.0, 128
        %7166 = vxpose.xlu0.b32.cont [11/16] 0.0, 128
        %7167 = vxpose.xlu0.b32.cont [12/16] 0.0, 128
        %7168 = vxpose.xlu0.b32.cont [13/16] 0.0, 128
        %7169 = vxpose.xlu0.b32.cont [14/16] 0.0, 128
        %7170 = vxpose.xlu0.b32.cont [15/16] 0.0, 128
        %7171 = vxpose.xlu0.b32.end [16/16] 0.0, 128
        %v7172 = vpop.trf.xlu0
        %v7173 = vpop.trf.xlu0
        %v7174 = vpop.trf.xlu0
        %v7175 = vpop.trf.xlu0
        %v7176 = vpop.trf.xlu0
        %v7177 = vpop.trf.xlu0
        %v7178 = vpop.trf.xlu0
        %v7179 = vpop.trf.xlu0
        %v7180 = vpop.trf.xlu0
        %v7181 = vpop.trf.xlu0
        %v7182 = vpop.trf.xlu0
        %v7183 = vpop.trf.xlu0
        %v7184 = vpop.trf.xlu0
        %v7185 = vpop.trf.xlu0
        %v7186 = vpop.trf.xlu0
        %v7187 = vpop.trf.xlu0
        %v7189 = vrot.slane %v7172, 1
        %v7191 = vsub.f32 %v7172, %v7189
        %v7192 = vmul.f32 %v7191, 1.442695
        %v7193 = vpow.pop %v7192
        %v7194 = vadd.f32 %v7193, 1.0
        %v7195 = vrcp.pop %v7194
        %v7196 = vmul.f32 1.0, %v7195
        %v7197 = vsub.f32 1.0, %v7196
        %v7199 = vrot.slane %v7196, 7
        %v7201 = vsel %vm909, %v7197, %v7199
        %vm7202 = vcmask 66560
        %7203 = vst.msk [vmem:[%s363] sm:$0x3] %vm7202, %v7201
        %vm7204 = vcmask 70658
        %7205 = vst.msk [vmem:[%s356 - $0x2] sm:$0x3c] %vm7204, %v7172
        %s7206 = sand.u32 %s230, 1
        %s7207 = scalar_lea.sflag [#allocation3], %s7206
        %s7208 = sand.u32 %s230, 1
        %s7209 = smul.addr %s7208, 4
        %s7210 = scalar_lea.vmem [#allocation2], %s7209
        %s7211 = sand.u32 %s256, 1
        %s7212 = scalar_lea.sflag [#allocation5], %s7211
        %s7213 = sand.u32 %s256, 1
        %s7214 = smul.addr %s7213, 2
        %s7215 = scalar_lea.vmem [#allocation4], %s7214
        // Predicated region
        $region57: #{tpu_custom_call.1} parent=55 // pred_check
          %p7216 = pneg %p240
        $region58: #{tpu_custom_call.1} parent=55 // pred_check_branch
          %7218 = sbr.rel (%p7216) target = $region60
        $region59: #{tpu_custom_call.1} parent=55 // pred_region
          %s7220 = ssub.s32 64, 64
          %7221 = vsyncadd %s7207, %s7220
          %s7222 = smul.addr %s28, 64
          %s7223 = scalar_lea.hbm %s9, %s7222
          %s7225 = sshll.u32 %s7210, 4
          %s7226 = int_to_ptr.vmem [resolvable:$true] %s7225
          %7228 = dma.vmem_to_hbm [thread:$0]  %s7226, 64, %s7223, %s7207
        $region60: #{tpu_custom_call.1} parent=55 // pred_fallthru
          _
        // Predicated region
        $region61: #{tpu_custom_call.1} parent=55 // pred_check
          %p7229 = pneg %p266
        $region62: #{tpu_custom_call.1} parent=55 // pred_check_branch
          %7231 = sbr.rel (%p7229) target = $region64
        $region63: #{tpu_custom_call.1} parent=55 // pred_region
          %s7233 = ssub.s32 32, 32
          %7234 = vsyncadd %s7212, %s7233
          %s7235 = smul.addr %s28, 32
          %s7236 = scalar_lea.hbm %s10, %s7235
          %s7238 = sshll.u32 %s7215, 4
          %s7239 = int_to_ptr.vmem [resolvable:$true] %s7238
          %7241 = dma.vmem_to_hbm [thread:$0]  %s7239, 32, %s7236, %s7212
        $region64: #{tpu_custom_call.1} parent=55 // pred_fallthru
          _
      $region56: #{tpu_custom_call.1} parent=5 // pred_fallthru
        _
      %p7242 = scmp.le.s32.totalorder 2, %s23
      // Predicated region
      $region65: #{tpu_custom_call.1} parent=5 // pred_check
        %p7243 = pneg %p7242
      $region66: #{tpu_custom_call.1} parent=5 // pred_check_branch
        %7245 = sbr.rel (%p7243) target = $region68
      $region67: #{tpu_custom_call.1} parent=5 // pred_region
        %s7246 = ssub.s32 %s23, 2
        // Predicated region
        $region69: #{tpu_custom_call.1} parent=67 // pred_check
          %p7247 = pneg %p246
        $region70: #{tpu_custom_call.1} parent=67 // pred_check_branch
          %7249 = sbr.rel (%p7247) target = $region72
        $region71: #{tpu_custom_call.1} parent=67 // pred_region
          %s7250 = sand.u32 %s231, 1
          %s7251 = scalar_lea.sflag [#allocation3], %s7250
          %s7252 = sand.u32 %s231, 1
          %s7253 = smul.addr %s7252, 4
          %s7254 = scalar_lea.vmem [#allocation2], %s7253
          %7255 = dma.done %s7251, 64
        $region72: #{tpu_custom_call.1} parent=67 // pred_fallthru
          _
        // Predicated region
        $region73: #{tpu_custom_call.1} parent=67 // pred_check
          %p7256 = pneg %p272
        $region74: #{tpu_custom_call.1} parent=67 // pred_check_branch
          %7258 = sbr.rel (%p7256) target = $region76
        $region75: #{tpu_custom_call.1} parent=67 // pred_region
          %s7259 = sand.u32 %s257, 1
          %s7260 = scalar_lea.sflag [#allocation5], %s7259
          %s7261 = sand.u32 %s257, 1
          %s7262 = smul.addr %s7261, 2
          %s7263 = scalar_lea.vmem [#allocation4], %s7262
          %7264 = dma.done %s7260, 32
        $region76: #{tpu_custom_call.1} parent=67 // pred_fallthru
          _
      $region68: #{tpu_custom_call.1} parent=5 // pred_fallthru
        _
    $region6: #{tpu_custom_call.1} parent=1 // loop_footer
      %s27 = sadd.s32 1, %s23
    $region7: #{tpu_custom_call.1} parent=1 // loop_footer_branch
      %22 = sbr.rel target = $region3
    $region8: #{tpu_custom_call.1} parent=1 // loop_exit
      _
    %7265 = vsyncpa [#allocation3], 1
    %s7266 = scalar_lea.sflag [#allocation3], 1
    %7267 = vsyncpa %s7266, 1
    %7268 = vsyncpa [#allocation5], 1
    %s7269 = scalar_lea.sflag [#allocation5], 1
    %7270 = vsyncpa %s7269, 1

</llo_original>
